<compile_context>
chip_gen: v7x
topology: tpu7x:2x2x1
jax: 0.10.0
libtpu: 0.0.40
codegen_flags: <defaults>
</compile_context>

<pallas_src>
import functools
import math

import numpy as np
import jax
import jax.numpy as jnp
from jax.experimental import pallas as pl
from jax.experimental.pallas import tpu as pltpu

NEG_BIG = -1000000000.0


# --------------------------- in-kernel helpers ---------------------------

def _split_heads(x, num_heads):
    """(S, D) -> (H, S, dh) via static lane slices + leading-dim stack."""
    S, D = x.shape
    dh = D // num_heads
    return jnp.stack([x[:, h * dh:(h + 1) * dh] for h in range(num_heads)], axis=0)


def _attention_core(qp, kh, vh, neg_mask, num_heads):
    """Head-batched attention.

    qp       : (TQ, D) f32, already scaled by 1/sqrt(dh) (folded into Wq/bq)
    kh, vh   : (H, S, dh) bf16
    neg_mask : (TQ, S) f32 additive mask term, or None
    returns  : (TQ, D) f32 merged head outputs
    """
    TQ, D = qp.shape
    dh = D // num_heads

    qh = _split_heads(qp, num_heads).astype(jnp.bfloat16)            # (H, TQ, dh)
    # scores: contraction over dh, leading head batch -- no materialized K^T
    s = jnp.einsum("hqd,hkd->hqk", qh, kh,
                   preferred_element_type=jnp.float32)                # (H, TQ, S)
    if neg_mask is not None:
        s = s + neg_mask[None, :, :]
    s = s - jnp.max(s, axis=-1, keepdims=True)
    e = jnp.exp(s)                                                    # f32 EUP
    p = e * pl.reciprocal(jnp.sum(e, axis=-1, keepdims=True), approx=True)
    o = jnp.einsum("hqk,hkd->hqd", p.astype(jnp.bfloat16), vh,
                   preferred_element_type=jnp.float32)                # (H, TQ, dh)
    # single lane-concat merges heads back to (TQ, D)
    return jnp.concatenate([o[h] for h in range(num_heads)], axis=-1)


# --------------------------- kernels ---------------------------

def _mha_kernel(q_ref, k_ref, v_ref, *rest, num_heads, has_mask):
    """General (cross-attention capable) path. One (batch, query-tile) grid step."""
    if has_mask:
        (mask_ref, wq_ref, bq_ref, wk_ref, bk_ref, wv_ref, bv_ref,
         wo_ref, bo_ref, o_ref, kh_s, vh_s) = rest
    else:
        mask_ref = None
        (wq_ref, bq_ref, wk_ref, bk_ref, wv_ref, bv_ref,
         wo_ref, bo_ref, o_ref, kh_s, vh_s) = rest

    bf16 = jnp.bfloat16

    # K/V projections only once per batch element (query-tile axis is the inner,
    # "arbitrary" grid axis); staged head-major in bf16 VMEM scratch and reused.
    @pl.when(pl.program_id(1) == 0)
    def _():
        kp = jnp.dot(k_ref[...].astype(bf16), wk_ref[...],
                     preferred_element_type=jnp.float32) + bk_ref[...]
        vp = jnp.dot(v_ref[...].astype(bf16), wv_ref[...],
                     preferred_element_type=jnp.float32) + bv_ref[...]
        kh_s[...] = _split_heads(kp, num_heads).astype(bf16)
        vh_s[...] = _split_heads(vp, num_heads).astype(bf16)

    # Q projection for this query tile (1/sqrt(dh) pre-folded into wq/bq).
    qp = jnp.dot(q_ref[...].astype(bf16), wq_ref[...],
                 preferred_element_type=jnp.float32) + bq_ref[...]

    neg_mask = mask_ref[...] * NEG_BIG if has_mask else None
    attn = _attention_core(qp, kh_s[...], vh_s[...], neg_mask, num_heads)

    # fused output (dense) projection
    o_ref[...] = jnp.dot(attn.astype(bf16), wo_ref[...],
                         preferred_element_type=jnp.float32) + bo_ref[...]


def _mha_self_kernel(x_ref, *rest, num_heads, has_mask):
    """Self-attention fast path: fused (D, 3D) QKV projection, one batch per grid step."""
    if has_mask:
        mask_ref, wqkv_ref, bqkv_ref, wo_ref, bo_ref, o_ref = rest
    else:
        mask_ref = None
        wqkv_ref, bqkv_ref, wo_ref, bo_ref, o_ref = rest

    bf16 = jnp.bfloat16
    S, D = x_ref.shape

    qkv = jnp.dot(x_ref[...].astype(bf16), wqkv_ref[...],
                  preferred_element_type=jnp.float32) + bqkv_ref[...]   # (S, 3D)
    qp = qkv[:, :D]                                   # 128-lane aligned slices
    kh = _split_heads(qkv[:, D:2 * D], num_heads).astype(bf16)
    vh = _split_heads(qkv[:, 2 * D:], num_heads).astype(bf16)

    neg_mask = mask_ref[...] * NEG_BIG if has_mask else None
    attn = _attention_core(qp, kh, vh, neg_mask, num_heads)

    o_ref[...] = jnp.dot(attn.astype(bf16), wo_ref[...],
                         preferred_element_type=jnp.float32) + bo_ref[...]


# --------------------------- wrappers ---------------------------

def _prep_params(params, d_model, num_heads):
    """PyTorch nn.Linear stores (out, in); kernel consumes (in, out) bf16 weights,
    f32 biases, with the 1/sqrt(dh) attention scale folded into Wq/bq."""
    dh = d_model // num_heads
    scale = 1.0 / math.sqrt(dh)
    f32, bf16 = jnp.float32, jnp.bfloat16
    wq_t = (params["wq"].astype(f32).T * scale).astype(bf16)
    wk_t = params["wk"].astype(f32).T.astype(bf16)
    wv_t = params["wv"].astype(f32).T.astype(bf16)
    wo_t = params["wo"].astype(f32).T.astype(bf16)
    bq = (params["bq"].astype(f32) * scale).reshape(1, d_model)
    bk = params["bk"].astype(f32).reshape(1, d_model)
    bv = params["bv"].astype(f32).reshape(1, d_model)
    bo = params["bo"].astype(f32).reshape(1, d_model)
    return wq_t, bq, wk_t, bk, wv_t, bv, wo_t, bo


def multi_head_self_attention(x, mask, params, num_heads):
    """Self-attention (q == k == v == x) with the fused (D, 3D) QKV projection."""
    B, S, D = x.shape
    wq_t, bq, wk_t, bk, wv_t, bv, wo_t, bo = _prep_params(params, D, num_heads)
    wqkv = jnp.concatenate([wq_t, wk_t, wv_t], axis=1)     # (D, 3D) bf16
    bqkv = jnp.concatenate([bq, bk, bv], axis=1)           # (1, 3D) f32
    has_mask = mask is not None

    x_spec = pl.BlockSpec((None, S, D), lambda b: (b, 0, 0))
    in_specs = [x_spec]
    args = [x]
    if has_mask:
        in_specs.append(pl.BlockSpec((None, S, S), lambda b: (b, 0, 0)))
        args.append(mask.astype(jnp.float32))
    in_specs += [pl.BlockSpec((D, 3 * D), lambda b: (0, 0)),
                 pl.BlockSpec((1, 3 * D), lambda b: (0, 0)),
                 pl.BlockSpec((D, D), lambda b: (0, 0)),
                 pl.BlockSpec((1, D), lambda b: (0, 0))]
    args += [wqkv, bqkv, wo_t, bo]

    kern = functools.partial(_mha_self_kernel, num_heads=num_heads, has_mask=has_mask)
    return pl.pallas_call(
        kern,
        out_shape=jax.ShapeDtypeStruct((B, S, D), jnp.float32),
        grid=(B,),
        in_specs=in_specs,
        out_specs=x_spec,
        compiler_params=pltpu.CompilerParams(dimension_semantics=("parallel",)),
    )(*args)


def multi_head_attention(v, k, q, mask, params, num_heads, q_tile=128):
    """Pallas equivalent of MultiHeadAttention.forward(v, k, q, mask)."""
    if (q is k) and (k is v):       # self-attention fast path (eager callers)
        return multi_head_self_attention(q, mask, params, num_heads)

    B, Sq, D = q.shape
    Sk = k.shape[1]
    dh = D // num_heads
    wq_t, bq, wk_t, bk, wv_t, bv, wo_t, bo = _prep_params(params, D, num_heads)

    TQ = min(q_tile, Sq)
    if Sq % TQ != 0:
        TQ = Sq
    nq = Sq // TQ
    has_mask = mask is not None

    q_spec = pl.BlockSpec((None, TQ, D), lambda b, i: (b, i, 0))
    kv_spec = pl.BlockSpec((None, Sk, D), lambda b, i: (b, 0, 0))
    w_spec = pl.BlockSpec((D, D), lambda b, i: (0, 0))
    b_spec = pl.BlockSpec((1, D), lambda b, i: (0, 0))
    out_spec = pl.BlockSpec((None, TQ, D), lambda b, i: (b, i, 0))

    in_specs = [q_spec, kv_spec, kv_spec]
    args = [q, k, v]
    if has_mask:
        in_specs.append(pl.BlockSpec((None, TQ, Sk), lambda b, i: (b, i, 0)))
        args.append(mask.astype(jnp.float32))
    in_specs += [w_spec, b_spec, w_spec, b_spec, w_spec, b_spec, w_spec, b_spec]
    args += [wq_t, bq, wk_t, bk, wv_t, bv, wo_t, bo]

    kern = functools.partial(_mha_kernel, num_heads=num_heads, has_mask=has_mask)
    return pl.pallas_call(
        kern,
        out_shape=jax.ShapeDtypeStruct((B, Sq, D), jnp.float32),
        grid=(B, nq),
        in_specs=in_specs,
        out_specs=out_spec,
        scratch_shapes=[pltpu.VMEM((num_heads, Sk, dh), jnp.bfloat16),   # K heads
                        pltpu.VMEM((num_heads, Sk, dh), jnp.bfloat16)],  # V heads
        compiler_params=pltpu.CompilerParams(
            dimension_semantics=("parallel", "arbitrary")),
    )(*args)


# --------------------- pure-JAX reference (verification) ---------------------

def mha_reference(v, k, q, mask, params, num_heads):
    B, S, D = q.shape
    dh = D // num_heads
    hp = jax.lax.Precision.HIGHEST

    def lin(x, w, b):
        return jnp.einsum("bsi,oi->bso", x, w, precision=hp) + b

    def split(x):
        return x.reshape(B, -1, num_heads, dh).transpose(0, 2, 1, 3)

    qh = split(lin(q, params["wq"], params["bq"]))
    kh = split(lin(k, params["wk"], params["bk"]))
    vh = split(lin(v, params["wv"], params["bv"]))
    logits = jnp.einsum("bhqd,bhkd->bhqk", qh, kh, precision=hp) / math.sqrt(dh)
    if mask is not None:
        logits = logits + mask[:, None, :, :].astype(jnp.float32) * NEG_BIG
    w = jax.nn.softmax(logits, axis=-1)
    o = jnp.einsum("bhqk,bhkd->bhqd", w, vh,
                   precision=hp).transpose(0, 2, 1, 3).reshape(B, S, D)
    return lin(o, params["wo"], params["bo"])


# --------------------------- main ---------------------------

if __name__ == "__main__":
    D_MODEL, NUM_HEADS, SEQ, BATCH = 128, 4, 128, 2

    key = jax.random.PRNGKey(0)
    kparam, kq, kk, kv = jax.random.split(key, 4)

    def linear_init(kk_, fan_in, fan_out):
        kw, kb = jax.random.split(kk_)
        lim = 1.0 / math.sqrt(fan_in)
        w = jax.random.uniform(kw, (fan_out, fan_in), jnp.float32, -lim, lim)
        b = jax.random.uniform(kb, (fan_out,), jnp.float32, -lim, lim)
        return w, b

    pk = jax.random.split(kparam, 4)
    params = {}
    params["wq"], params["bq"] = linear_init(pk[0], D_MODEL, D_MODEL)
    params["wk"], params["bk"] = linear_init(pk[1], D_MODEL, D_MODEL)
    params["wv"], params["bv"] = linear_init(pk[2], D_MODEL, D_MODEL)
    params["wo"], params["bo"] = linear_init(pk[3], D_MODEL, D_MODEL)

    q = jax.random.normal(kq, (BATCH, SEQ, D_MODEL), jnp.float32)
    k = jax.random.normal(kk, (BATCH, SEQ, D_MODEL), jnp.float32)
    v = jax.random.normal(kv, (BATCH, SEQ, D_MODEL), jnp.float32)

    # mask: 1.0 = masked-out. causal mask + 9 padded trailing keys in batch 1.
    causal = jnp.triu(jnp.ones((SEQ, SEQ), jnp.float32), k=1)
    pad = (jnp.arange(SEQ)[None, :]
           >= jnp.array([SEQ, SEQ - 9])[:, None]).astype(jnp.float32)
    mask = jnp.clip(causal[None, :, :] + pad[:, None, :], 0.0, 1.0)   # (B, S, S)

    # 1) general (cross-attention capable) path, with mask
    fwd = jax.jit(functools.partial(multi_head_attention, num_heads=NUM_HEADS))
    out = jax.block_until_ready(fwd(v, k, q, mask, params))
    assert out.shape == (BATCH, SEQ, D_MODEL), out.shape
    assert bool(jnp.all(jnp.isfinite(out)))
    ref = mha_reference(v, k, q, mask, params, NUM_HEADS)
    np.testing.assert_allclose(np.asarray(out), np.asarray(ref), rtol=1e-2, atol=1e-2)

    # 2) mask=None variant (no mask DMA, no mask add)
    out_nm = jax.block_until_ready(fwd(v, k, q, None, params))
    ref_nm = mha_reference(v, k, q, None, params, NUM_HEADS)
    np.testing.assert_allclose(np.asarray(out_nm), np.asarray(ref_nm),
                               rtol=1e-2, atol=1e-2)

    # 3) self-attention fast path with fused (D, 3D) QKV projection
    self_fwd = jax.jit(functools.partial(multi_head_self_attention,
                                         num_heads=NUM_HEADS))
    out_sa = jax.block_until_ready(self_fwd(q, mask, params))
    ref_sa = mha_reference(q, q, q, mask, params, NUM_HEADS)
    np.testing.assert_allclose(np.asarray(out_sa), np.asarray(ref_sa),
                               rtol=1e-2, atol=1e-2)

    print("KERNEL_OK")
</pallas_src>

<mosaic_0001>
module attributes {stable_mosaic.version = 11 : i64} {
  func.func @_mha_kernel(%arg0: i32, %arg1: i32, %arg2: memref<1x128x128xf32, #tpu.memory_space<vmem>>, %arg3: memref<1x128x128xf32, #tpu.memory_space<vmem>>, %arg4: memref<1x128x128xf32, #tpu.memory_space<vmem>>, %arg5: memref<1x128x128xf32, #tpu.memory_space<vmem>>, %arg6: memref<128x128xbf16, #tpu.memory_space<vmem>>, %arg7: memref<1x128xf32, #tpu.memory_space<vmem>>, %arg8: memref<128x128xbf16, #tpu.memory_space<vmem>>, %arg9: memref<1x128xf32, #tpu.memory_space<vmem>>, %arg10: memref<128x128xbf16, #tpu.memory_space<vmem>>, %arg11: memref<1x128xf32, #tpu.memory_space<vmem>>, %arg12: memref<128x128xbf16, #tpu.memory_space<vmem>>, %arg13: memref<1x128xf32, #tpu.memory_space<vmem>>, %arg14: memref<1x128x128xf32, #tpu.memory_space<vmem>>, %arg15: memref<4x128x32xbf16, #tpu.memory_space<vmem>>, %arg16: memref<4x128x32xbf16, #tpu.memory_space<vmem>>) attributes {dimension_semantics = [#tpu.dimension_semantics<parallel>, #tpu.dimension_semantics<arbitrary>], iteration_bounds = array<i64: 2, 1>, scalar_prefetch = 0 : i64, scratch_operands = 2 : i64, tpu.core_type = #tpu.core_type<tc>, window_params = [{transform_indices = @transform_0, window_bounds = array<i64: 1, 128, 128>}, {transform_indices = @transform_1, window_bounds = array<i64: 1, 128, 128>}, {transform_indices = @transform_2, window_bounds = array<i64: 1, 128, 128>}, {transform_indices = @transform_3, window_bounds = array<i64: 1, 128, 128>}, {pipeline_mode = #tpu.pipeline_mode<synchronous>, transform_indices = @transform_4, window_bounds = array<i64: 128, 128>}, {pipeline_mode = #tpu.pipeline_mode<synchronous>, transform_indices = @transform_5, window_bounds = array<i64: 1, 128>}, {pipeline_mode = #tpu.pipeline_mode<synchronous>, transform_indices = @transform_6, window_bounds = array<i64: 128, 128>}, {pipeline_mode = #tpu.pipeline_mode<synchronous>, transform_indices = @transform_7, window_bounds = array<i64: 1, 128>}, {pipeline_mode = #tpu.pipeline_mode<synchronous>, transform_indices = @transform_8, window_bounds = array<i64: 128, 128>}, {pipeline_mode = #tpu.pipeline_mode<synchronous>, transform_indices = @transform_9, window_bounds = array<i64: 1, 128>}, {pipeline_mode = #tpu.pipeline_mode<synchronous>, transform_indices = @transform_10, window_bounds = array<i64: 128, 128>}, {pipeline_mode = #tpu.pipeline_mode<synchronous>, transform_indices = @transform_11, window_bounds = array<i64: 1, 128>}, {transform_indices = @transform_12, window_bounds = array<i64: 1, 128, 128>}]} {
    %c0_i32 = arith.constant 0 : i32
    %0 = arith.cmpi eq, %arg1, %c0_i32 : i32
    %1 = arith.extui %0 : i1 to i32
    %c0_i32_0 = arith.constant 0 : i32
    %2 = arith.cmpi ne, %1, %c0_i32_0 : i32
    scf.if %2 {
      %c0_29 = arith.constant 0 : index
      %c0_30 = arith.constant 0 : index
      %c0_31 = arith.constant 0 : index
      %61 = vector.load %arg3[%c0_29, %c0_30, %c0_31] : memref<1x128x128xf32, #tpu.memory_space<vmem>>, vector<1x128x128xf32>
      %62 = vector.shape_cast %61 : vector<1x128x128xf32> to vector<128x128xf32>
      %63 = arith.truncf %62 : vector<128x128xf32> to vector<128x128xbf16>
      %c0_32 = arith.constant 0 : index
      %c0_33 = arith.constant 0 : index
      %64 = vector.load %arg8[%c0_32, %c0_33] : memref<128x128xbf16, #tpu.memory_space<vmem>>, vector<128x128xbf16>
      %cst_34 = arith.constant dense<0.000000e+00> : vector<128x128xf32>
      %65 = tpu.matmul %63, %64, %cst_34 {dimension_numbers = #tpu.dot_dimension_numbers<[1], [0], [0], [1], [0, 0, 1, 1], [], []>} : vector<128x128xbf16>, vector<128x128xbf16>, vector<128x128xf32> -> vector<128x128xf32>
      %c0_35 = arith.constant 0 : index
      %c0_36 = arith.constant 0 : index
      %66 = vector.load %arg9[%c0_35, %c0_36] : memref<1x128xf32, #tpu.memory_space<vmem>>, vector<1x128xf32>
      %67 = vector.broadcast %66 : vector<1x128xf32> to vector<128x128xf32>
      %68 = arith.addf %65, %67 : vector<128x128xf32>
      %c0_37 = arith.constant 0 : index
      %c0_38 = arith.constant 0 : index
      %c0_39 = arith.constant 0 : index
      %69 = vector.load %arg4[%c0_37, %c0_38, %c0_39] : memref<1x128x128xf32, #tpu.memory_space<vmem>>, vector<1x128x128xf32>
      %70 = vector.shape_cast %69 : vector<1x128x128xf32> to vector<128x128xf32>
      %71 = arith.truncf %70 : vector<128x128xf32> to vector<128x128xbf16>
      %c0_40 = arith.constant 0 : index
      %c0_41 = arith.constant 0 : index
      %72 = vector.load %arg10[%c0_40, %c0_41] : memref<128x128xbf16, #tpu.memory_space<vmem>>, vector<128x128xbf16>
      %cst_42 = arith.constant dense<0.000000e+00> : vector<128x128xf32>
      %73 = tpu.matmul %71, %72, %cst_42 {dimension_numbers = #tpu.dot_dimension_numbers<[1], [0], [0], [1], [0, 0, 1, 1], [], []>} : vector<128x128xbf16>, vector<128x128xbf16>, vector<128x128xf32> -> vector<128x128xf32>
      %c0_43 = arith.constant 0 : index
      %c0_44 = arith.constant 0 : index
      %74 = vector.load %arg11[%c0_43, %c0_44] : memref<1x128xf32, #tpu.memory_space<vmem>>, vector<1x128xf32>
      %75 = vector.broadcast %74 : vector<1x128xf32> to vector<128x128xf32>
      %76 = arith.addf %73, %75 : vector<128x128xf32>
      %77 = vector.extract_strided_slice %68 {offsets = [0, 0], sizes = [128, 32], strides = [1, 1]} : vector<128x128xf32> to vector<128x32xf32>
      %78 = vector.extract_strided_slice %68 {offsets = [0, 32], sizes = [128, 32], strides = [1, 1]} : vector<128x128xf32> to vector<128x32xf32>
      %79 = vector.extract_strided_slice %68 {offsets = [0, 64], sizes = [128, 32], strides = [1, 1]} : vector<128x128xf32> to vector<128x32xf32>
      %80 = vector.extract_strided_slice %68 {offsets = [0, 96], sizes = [128, 32], strides = [1, 1]} : vector<128x128xf32> to vector<128x32xf32>
      %81 = vector.shape_cast %77 : vector<128x32xf32> to vector<1x128x32xf32>
      %82 = vector.shape_cast %78 : vector<128x32xf32> to vector<1x128x32xf32>
      %83 = vector.shape_cast %79 : vector<128x32xf32> to vector<1x128x32xf32>
      %84 = vector.shape_cast %80 : vector<128x32xf32> to vector<1x128x32xf32>
      %85 = tpu.concatenate %81, %82, %83, %84 in 0 : vector<1x128x32xf32>, vector<1x128x32xf32>, vector<1x128x32xf32>, vector<1x128x32xf32> -> vector<4x128x32xf32>
      %86 = arith.truncf %85 : vector<4x128x32xf32> to vector<4x128x32xbf16>
      %c0_45 = arith.constant 0 : index
      %c0_46 = arith.constant 0 : index
      %c0_47 = arith.constant 0 : index
      %87 = vector.load %arg15[%c0_45, %c0_46, %c0_47] : memref<4x128x32xbf16, #tpu.memory_space<vmem>>, vector<4x128x32xbf16>
      tpu.vector_store %arg15[%c0_45, %c0_46, %c0_47], %86 {strides = array<i32>} : memref<4x128x32xbf16, #tpu.memory_space<vmem>>, vector<4x128x32xbf16>,
      %88 = vector.extract_strided_slice %76 {offsets = [0, 0], sizes = [128, 32], strides = [1, 1]} : vector<128x128xf32> to vector<128x32xf32>
      %89 = vector.extract_strided_slice %76 {offsets = [0, 32], sizes = [128, 32], strides = [1, 1]} : vector<128x128xf32> to vector<128x32xf32>
      %90 = vector.extract_strided_slice %76 {offsets = [0, 64], sizes = [128, 32], strides = [1, 1]} : vector<128x128xf32> to vector<128x32xf32>
      %91 = vector.extract_strided_slice %76 {offsets = [0, 96], sizes = [128, 32], strides = [1, 1]} : vector<128x128xf32> to vector<128x32xf32>
      %92 = vector.shape_cast %88 : vector<128x32xf32> to vector<1x128x32xf32>
      %93 = vector.shape_cast %89 : vector<128x32xf32> to vector<1x128x32xf32>
      %94 = vector.shape_cast %90 : vector<128x32xf32> to vector<1x128x32xf32>
      %95 = vector.shape_cast %91 : vector<128x32xf32> to vector<1x128x32xf32>
      %96 = tpu.concatenate %92, %93, %94, %95 in 0 : vector<1x128x32xf32>, vector<1x128x32xf32>, vector<1x128x32xf32>, vector<1x128x32xf32> -> vector<4x128x32xf32>
      %97 = arith.truncf %96 : vector<4x128x32xf32> to vector<4x128x32xbf16>
      %c0_48 = arith.constant 0 : index
      %c0_49 = arith.constant 0 : index
      %c0_50 = arith.constant 0 : index
      %98 = vector.load %arg16[%c0_48, %c0_49, %c0_50] : memref<4x128x32xbf16, #tpu.memory_space<vmem>>, vector<4x128x32xbf16>
      tpu.vector_store %arg16[%c0_48, %c0_49, %c0_50], %97 {strides = array<i32>} : memref<4x128x32xbf16, #tpu.memory_space<vmem>>, vector<4x128x32xbf16>,
    } else {
    }
    %c0 = arith.constant 0 : index
    %c0_1 = arith.constant 0 : index
    %c0_2 = arith.constant 0 : index
    %3 = vector.load %arg2[%c0, %c0_1, %c0_2] : memref<1x128x128xf32, #tpu.memory_space<vmem>>, vector<1x128x128xf32>
    %4 = vector.shape_cast %3 : vector<1x128x128xf32> to vector<128x128xf32>
    %5 = arith.truncf %4 : vector<128x128xf32> to vector<128x128xbf16>
    %c0_3 = arith.constant 0 : index
    %c0_4 = arith.constant 0 : index
    %6 = vector.load %arg6[%c0_3, %c0_4] : memref<128x128xbf16, #tpu.memory_space<vmem>>, vector<128x128xbf16>
    %cst = arith.constant dense<0.000000e+00> : vector<128x128xf32>
    %7 = tpu.matmul %5, %6, %cst {dimension_numbers = #tpu.dot_dimension_numbers<[1], [0], [0], [1], [0, 0, 1, 1], [], []>} : vector<128x128xbf16>, vector<128x128xbf16>, vector<128x128xf32> -> vector<128x128xf32>
    %c0_5 = arith.constant 0 : index
    %c0_6 = arith.constant 0 : index
    %8 = vector.load %arg7[%c0_5, %c0_6] : memref<1x128xf32, #tpu.memory_space<vmem>>, vector<1x128xf32>
    %9 = vector.broadcast %8 : vector<1x128xf32> to vector<128x128xf32>
    %10 = arith.addf %7, %9 : vector<128x128xf32>
    %c0_7 = arith.constant 0 : index
    %c0_8 = arith.constant 0 : index
    %c0_9 = arith.constant 0 : index
    %11 = vector.load %arg5[%c0_7, %c0_8, %c0_9] : memref<1x128x128xf32, #tpu.memory_space<vmem>>, vector<1x128x128xf32>
    %12 = vector.shape_cast %11 : vector<1x128x128xf32> to vector<128x128xf32>
    %cst_10 = arith.constant -1.000000e+09 : f32
    %13 = vector.broadcast %cst_10 : f32 to vector<128x128xf32>
    %14 = arith.mulf %12, %13 : vector<128x128xf32>
    %c0_11 = arith.constant 0 : index
    %c0_12 = arith.constant 0 : index
    %c0_13 = arith.constant 0 : index
    %15 = vector.load %arg15[%c0_11, %c0_12, %c0_13] : memref<4x128x32xbf16, #tpu.memory_space<vmem>>, vector<4x128x32xbf16>
    %c0_14 = arith.constant 0 : index
    %c0_15 = arith.constant 0 : index
    %c0_16 = arith.constant 0 : index
    %16 = vector.load %arg16[%c0_14, %c0_15, %c0_16] : memref<4x128x32xbf16, #tpu.memory_space<vmem>>, vector<4x128x32xbf16>
    %17 = vector.extract_strided_slice %10 {offsets = [0, 0], sizes = [128, 32], strides = [1, 1]} : vector<128x128xf32> to vector<128x32xf32>
    %18 = vector.extract_strided_slice %10 {offsets = [0, 32], sizes = [128, 32], strides = [1, 1]} : vector<128x128xf32> to vector<128x32xf32>
    %19 = vector.extract_strided_slice %10 {offsets = [0, 64], sizes = [128, 32], strides = [1, 1]} : vector<128x128xf32> to vector<128x32xf32>
    %20 = vector.extract_strided_slice %10 {offsets = [0, 96], sizes = [128, 32], strides = [1, 1]} : vector<128x128xf32> to vector<128x32xf32>
    %21 = vector.shape_cast %17 : vector<128x32xf32> to vector<1x128x32xf32>
    %22 = vector.shape_cast %18 : vector<128x32xf32> to vector<1x128x32xf32>
    %23 = vector.shape_cast %19 : vector<128x32xf32> to vector<1x128x32xf32>
    %24 = vector.shape_cast %20 : vector<128x32xf32> to vector<1x128x32xf32>
    %25 = tpu.concatenate %21, %22, %23, %24 in 0 : vector<1x128x32xf32>, vector<1x128x32xf32>, vector<1x128x32xf32>, vector<1x128x32xf32> -> vector<4x128x32xf32>
    %26 = arith.truncf %25 : vector<4x128x32xf32> to vector<4x128x32xbf16>
    "tpu.trace_start"() <{level = 10 : i32, message = "hqd,hkd->hqk"}> : () -> ()
    %cst_17 = arith.constant dense<0.000000e+00> : vector<4x128x128xf32>
    %27 = tpu.matmul %26, %15, %cst_17 {dimension_numbers = #tpu.dot_dimension_numbers<[2], [2], [1], [1], [0, 0, 0, 1, 1, 1], [0], [0]>} : vector<4x128x32xbf16>, vector<4x128x32xbf16>, vector<4x128x128xf32> -> vector<4x128x128xf32>
    "tpu.trace_stop"() : () -> ()
    %28 = vector.shape_cast %14 : vector<128x128xf32> to vector<1x128x128xf32>
    %29 = vector.broadcast %28 : vector<1x128x128xf32> to vector<4x128x128xf32>
    %30 = arith.addf %27, %29 : vector<4x128x128xf32>
    %cst_18 = arith.constant dense<0xFF800000> : vector<4x128xf32>
    %31 = vector.multi_reduction <maximumf>, %30, %cst_18 [2] : vector<4x128x128xf32> to vector<4x128xf32>
    %32 = vector.shape_cast %31 : vector<4x128xf32> to vector<4x128x1xf32>
    %33 = vector.broadcast %32 : vector<4x128x1xf32> to vector<4x128x128xf32>
    %34 = arith.subf %30, %33 : vector<4x128x128xf32>
    %35 = math.exp %34 : vector<4x128x128xf32>
    %cst_19 = arith.constant dense<0.000000e+00> : vector<4x128xf32>
    %36 = vector.multi_reduction <add>, %35, %cst_19 [2] : vector<4x128x128xf32> to vector<4x128xf32>
    %37 = vector.shape_cast %36 : vector<4x128xf32> to vector<4x128x1xf32>
    %38 = tpu.reciprocal %37 {approx = true} : vector<4x128x1xf32> -> vector<4x128x1xf32>
    %39 = vector.broadcast %38 : vector<4x128x1xf32> to vector<4x128x128xf32>
    %40 = arith.mulf %35, %39 : vector<4x128x128xf32>
    %41 = arith.truncf %40 : vector<4x128x128xf32> to vector<4x128x128xbf16>
    "tpu.trace_start"() <{level = 10 : i32, message = "hqk,hkd->hqd"}> : () -> ()
    %cst_20 = arith.constant dense<0.000000e+00> : vector<4x128x32xf32>
    %42 = tpu.matmul %41, %16, %cst_20 {dimension_numbers = #tpu.dot_dimension_numbers<[2], [1], [1], [2], [0, 0, 0, 1, 1, 2], [0], [0]>} : vector<4x128x128xbf16>, vector<4x128x32xbf16>, vector<4x128x32xf32> -> vector<4x128x32xf32>
    "tpu.trace_stop"() : () -> ()
    %43 = vector.extract_strided_slice %42 {offsets = [0, 0, 0], sizes = [1, 128, 32], strides = [1, 1, 1]} : vector<4x128x32xf32> to vector<1x128x32xf32>
    %44 = vector.shape_cast %43 : vector<1x128x32xf32> to vector<128x32xf32>
    %45 = vector.extract_strided_slice %42 {offsets = [1, 0, 0], sizes = [1, 128, 32], strides = [1, 1, 1]} : vector<4x128x32xf32> to vector<1x128x32xf32>
    %46 = vector.shape_cast %45 : vector<1x128x32xf32> to vector<128x32xf32>
    %47 = vector.extract_strided_slice %42 {offsets = [2, 0, 0], sizes = [1, 128, 32], strides = [1, 1, 1]} : vector<4x128x32xf32> to vector<1x128x32xf32>
    %48 = vector.shape_cast %47 : vector<1x128x32xf32> to vector<128x32xf32>
    %49 = vector.extract_strided_slice %42 {offsets = [3, 0, 0], sizes = [1, 128, 32], strides = [1, 1, 1]} : vector<4x128x32xf32> to vector<1x128x32xf32>
    %50 = vector.shape_cast %49 : vector<1x128x32xf32> to vector<128x32xf32>
    %51 = tpu.concatenate %44, %46, %48, %50 in 1 : vector<128x32xf32>, vector<128x32xf32>, vector<128x32xf32>, vector<128x32xf32> -> vector<128x128xf32>
    %52 = arith.truncf %51 : vector<128x128xf32> to vector<128x128xbf16>
    %c0_21 = arith.constant 0 : index
    %c0_22 = arith.constant 0 : index
    %53 = vector.load %arg12[%c0_21, %c0_22] : memref<128x128xbf16, #tpu.memory_space<vmem>>, vector<128x128xbf16>
    %cst_23 = arith.constant dense<0.000000e+00> : vector<128x128xf32>
    %54 = tpu.matmul %52, %53, %cst_23 {dimension_numbers = #tpu.dot_dimension_numbers<[1], [0], [0], [1], [0, 0, 1, 1], [], []>} : vector<128x128xbf16>, vector<128x128xbf16>, vector<128x128xf32> -> vector<128x128xf32>
    %c0_24 = arith.constant 0 : index
    %c0_25 = arith.constant 0 : index
    %55 = vector.load %arg13[%c0_24, %c0_25] : memref<1x128xf32, #tpu.memory_space<vmem>>, vector<1x128xf32>
    %56 = vector.broadcast %55 : vector<1x128xf32> to vector<128x128xf32>
    %57 = arith.addf %54, %56 : vector<128x128xf32>
    %c0_26 = arith.constant 0 : index
    %c0_27 = arith.constant 0 : index
    %c0_28 = arith.constant 0 : index
    %58 = vector.load %arg14[%c0_26, %c0_27, %c0_28] : memref<1x128x128xf32, #tpu.memory_space<vmem>>, vector<1x128x128xf32>
    %59 = vector.shape_cast %58 : vector<1x128x128xf32> to vector<128x128xf32>
    %60 = vector.shape_cast %57 : vector<128x128xf32> to vector<1x128x128xf32>
    tpu.vector_store %arg14[%c0_26, %c0_27, %c0_28], %60 {strides = array<i32>} : memref<1x128x128xf32, #tpu.memory_space<vmem>>, vector<1x128x128xf32>,
    return
  }
  func.func @transform_0(%arg0: i32, %arg1: i32) -> (i32, i32, i32) {
    %c0_i32 = arith.constant 0 : i32
    %c0_i32_0 = arith.constant 0 : i32
    return %arg0, %arg1, %c0_i32 : i32, i32, i32
  }
  func.func @transform_1(%arg0: i32, %arg1: i32) -> (i32, i32, i32) {
    %c0_i32 = arith.constant 0 : i32
    %c0_i32_0 = arith.constant 0 : i32
    %c0_i32_1 = arith.constant 0 : i32
    return %arg0, %c0_i32, %c0_i32_0 : i32, i32, i32
  }
  func.func @transform_2(%arg0: i32, %arg1: i32) -> (i32, i32, i32) {
    %c0_i32 = arith.constant 0 : i32
    %c0_i32_0 = arith.constant 0 : i32
    %c0_i32_1 = arith.constant 0 : i32
    return %arg0, %c0_i32, %c0_i32_0 : i32, i32, i32
  }
  func.func @transform_3(%arg0: i32, %arg1: i32) -> (i32, i32, i32) {
    %c0_i32 = arith.constant 0 : i32
    %c0_i32_0 = arith.constant 0 : i32
    return %arg0, %arg1, %c0_i32 : i32, i32, i32
  }
  func.func @transform_4(%arg0: i32, %arg1: i32) -> (i32, i32) {
    %c0_i32 = arith.constant 0 : i32
    %c0_i32_0 = arith.constant 0 : i32
    %c0_i32_1 = arith.constant 0 : i32
    return %c0_i32, %c0_i32_0 : i32, i32
  }
  func.func @transform_5(%arg0: i32, %arg1: i32) -> (i32, i32) {
    %c0_i32 = arith.constant 0 : i32
    %c0_i32_0 = arith.constant 0 : i32
    %c0_i32_1 = arith.constant 0 : i32
    return %c0_i32, %c0_i32_0 : i32, i32
  }
  func.func @transform_6(%arg0: i32, %arg1: i32) -> (i32, i32) {
    %c0_i32 = arith.constant 0 : i32
    %c0_i32_0 = arith.constant 0 : i32
    %c0_i32_1 = arith.constant 0 : i32
    return %c0_i32, %c0_i32_0 : i32, i32
  }
  func.func @transform_7(%arg0: i32, %arg1: i32) -> (i32, i32) {
    %c0_i32 = arith.constant 0 : i32
    %c0_i32_0 = arith.constant 0 : i32
    %c0_i32_1 = arith.constant 0 : i32
    return %c0_i32, %c0_i32_0 : i32, i32
  }
  func.func @transform_8(%arg0: i32, %arg1: i32) -> (i32, i32) {
    %c0_i32 = arith.constant 0 : i32
    %c0_i32_0 = arith.constant 0 : i32
    %c0_i32_1 = arith.constant 0 : i32
    return %c0_i32, %c0_i32_0 : i32, i32
  }
  func.func @transform_9(%arg0: i32, %arg1: i32) -> (i32, i32) {
    %c0_i32 = arith.constant 0 : i32
    %c0_i32_0 = arith.constant 0 : i32
    %c0_i32_1 = arith.constant 0 : i32
    return %c0_i32, %c0_i32_0 : i32, i32
  }
  func.func @transform_10(%arg0: i32, %arg1: i32) -> (i32, i32) {
    %c0_i32 = arith.constant 0 : i32
    %c0_i32_0 = arith.constant 0 : i32
    %c0_i32_1 = arith.constant 0 : i32
    return %c0_i32, %c0_i32_0 : i32, i32
  }
  func.func @transform_11(%arg0: i32, %arg1: i32) -> (i32, i32) {
    %c0_i32 = arith.constant 0 : i32
    %c0_i32_0 = arith.constant 0 : i32
    %c0_i32_1 = arith.constant 0 : i32
    return %c0_i32, %c0_i32_0 : i32, i32
  }
  func.func @transform_12(%arg0: i32, %arg1: i32) -> (i32, i32, i32) {
    %c0_i32 = arith.constant 0 : i32
    %c0_i32_0 = arith.constant 0 : i32
    return %arg0, %arg1, %c0_i32 : i32, i32, i32
  }
}

</mosaic_0001>

<llo_original>
// kernel: multi_head_attention.1
$region0: #{multi_head_attention.1}
  #allocation0 [shape = 'u32[]', space=smem, size = 0x4, offset = 0x4, fixed_abs, tag = 'smem constant byte address 0x4 - core index']
  #allocation1 [shape = 'u32[144,128]{1,0:T(1,128)}', space=vmem, size = 0x12000, scoped, tag = 'internal scratch']
  #allocation2 [shape = 'bf16[4,128,32]{2,1,0:T(16,128)(2,1)}', space=vmem, size = 0x20000, scoped, tag = 'scratch operand']
  #allocation3 [shape = 'bf16[4,128,32]{2,1,0:T(16,128)(2,1)}', space=vmem, size = 0x20000, scoped, tag = 'scratch operand']
  %s0 = inlined_call_operand.vmem [shape: f32[2,128,128], index: 0, kind: input, shape index: {}]
  %s1 = inlined_call_operand.vmem [shape: f32[2,128,128], index: 1, kind: input, shape index: {}]
  %s2 = inlined_call_operand.vmem [shape: f32[2,128,128], index: 2, kind: input, shape index: {}]
  %s3 = inlined_call_operand.vmem [shape: f32[2,128,128], index: 3, kind: input, shape index: {}]
  %s4 = inlined_call_operand.vmem [shape: bf16[128,128], index: 4, kind: input, shape index: {}]
  %s5 = inlined_call_operand.vmem [shape: f32[1,128], index: 5, kind: input, shape index: {}]
  %s6 = inlined_call_operand.vmem [shape: bf16[128,128], index: 6, kind: input, shape index: {}]
  %s7 = inlined_call_operand.vmem [shape: f32[1,128], index: 7, kind: input, shape index: {}]
  %s8 = inlined_call_operand.vmem [shape: bf16[128,128], index: 8, kind: input, shape index: {}]
  %s9 = inlined_call_operand.vmem [shape: f32[1,128], index: 9, kind: input, shape index: {}]
  %s10 = inlined_call_operand.vmem [shape: bf16[128,128], index: 10, kind: input, shape index: {}]
  %s11 = inlined_call_operand.vmem [shape: f32[1,128], index: 11, kind: input, shape index: {}]
  %s12 = inlined_call_operand.hbm [shape: f32[2,128,128], index: 12, kind: output, shape index: {}]
  %s13 = sld [smem:[#allocation0]]
  $region85: #{multi_head_attention.1} parent=0
    _
  %s15 = ssub.s32 1, %s13
  %s16 = scalar_select 0, %s15, %s13
  $region1: #{multi_head_attention.1} parent=0
    #allocation4 [shape = 'u8[131072]{0}', space=vmem, size = 0x20000, scoped, tag = 'output window, operand 0']
    #allocation5 [shape = 's32[2]{0}', space=sflag, size = 0x8, scoped, tag = 'scoped memory for multi_head_attention.1']
    %17 = vsyncpa [#allocation5], 0
    %s18 = scalar_lea.sflag [#allocation5], 1
    %19 = vsyncpa %s18, 0
    loop: start=0, step=1, limit=4
    $region2: #{multi_head_attention.1} parent=1 // loop_pre_header
      _
    $region3: #{multi_head_attention.1} parent=1 // loop_header
      %s21 = sphi 0, %s25
      %p22 = scmp.ge.s32.totalorder %s21, 4
      %s28 = sphi 0, %s40
      %s29 = sphi 0, %s36
      %s30 = sphi 0, %s28
      %s31 = sphi 0, %s29
      %s32 = sphi 0, %s30
      %s33 = sphi 0, %s31
      %s45 = sphi 0, %s47
      %s48 = sphi 0, %s45
      %s49 = sphi 0, %s48
      %s65 = sphi 0, %s49
      %s71 = sphi 0, %s73
      %s74 = sphi 0, %s71
      %s75 = sphi 0, %s74
      %s91 = sphi 0, %s75
      %s97 = sphi 0, %s99
      %s100 = sphi 0, %s97
      %s101 = sphi 0, %s100
      %s117 = sphi 0, %s101
      %s125 = sphi 0, %s127
      %s128 = sphi 0, %s125
      %s129 = sphi 0, %s128
      %s145 = sphi 0, %s129
      %s149 = sphi 0, %s149
      %s151 = sphi 0, %s149
      %s152 = sphi 0, %s151
      %s166 = sphi 0, %s152
      %s170 = sphi 0, %s170
      %s172 = sphi 0, %s170
      %s173 = sphi 0, %s172
      %s187 = sphi 0, %s173
      %s191 = sphi 0, %s191
      %s193 = sphi 0, %s191
      %s194 = sphi 0, %s193
      %s208 = sphi 0, %s194
      %s212 = sphi 0, %s212
      %s214 = sphi 0, %s212
      %s215 = sphi 0, %s214
      %s229 = sphi 0, %s215
      %s233 = sphi 0, %s233
      %s235 = sphi 0, %s233
      %s236 = sphi 0, %s235
      %s250 = sphi 0, %s236
      %s254 = sphi 0, %s254
      %s256 = sphi 0, %s254
      %s257 = sphi 0, %s256
      %s271 = sphi 0, %s257
      %s275 = sphi 0, %s275
      %s277 = sphi 0, %s275
      %s278 = sphi 0, %s277
      %s292 = sphi 0, %s278
      %s296 = sphi 0, %s296
      %s298 = sphi 0, %s296
      %s299 = sphi 0, %s298
      %s313 = sphi 0, %s299
      %s321 = sphi 0, %s323
      %s324 = sphi 0, %s321
      %s325 = sphi 0, %s324
      %s341 = sphi 0, %s325
    $region4: #{multi_head_attention.1} parent=1 // loop_header_branch
      %24 = sbr.rel (%p22) target = $region8
    $region5: #{multi_head_attention.1} parent=1 // loop_body
      %s26 = ssub.s32 %s21, 1
      %s27 = ssub.s32 %s21, 2
      %s34 = sadd.s32 1, %s29
      %p35 = scmp.ge.s32.totalorder %s34, 1
      %s36 = scalar_select %p35, 0, %s34
      %s37 = sadd.s32 1, %s28
      %s38 = scalar_select %p35, %s37, %s28
      %p39 = scmp.ge.s32.totalorder %s38, 2
      %s40 = scalar_select %p39, 0, %s38
      %s41 = ssub.s32 %s28, %s40
      %s42 = ssub.s32 %s29, %s36
      %s43 = sor.u32 %s41, %s42
      %p44 = scmp.eq.s32.totalorder %s43, 0
      %s46 = sadd.s32 %s45, 1
      %s47 = scalar_select %p44, %s45, %s46
      %p50 = pneg %p44
      %p51 = scmp.eq.s32.totalorder %s21, 1
      %p52 = por %p50, %p51
      %p53 = scmp.ne.s32.totalorder %s45, %s48
      %p54 = scmp.eq.s32.totalorder %s21, 0
      %p55 = por %p53, %p54
      %p56 = scmp.ne.s32.totalorder %s45, %s48
      %p57 = scmp.eq.s32.totalorder %s26, 1
      %p58 = por %p56, %p57
      %p59 = scmp.ne.s32.totalorder %s48, %s49
      %p60 = scmp.eq.s32.totalorder %s26, 0
      %p61 = por %p59, %p60
      %p62 = scmp.ne.s32.totalorder %s48, %s49
      %p63 = scmp.eq.s32.totalorder %s27, 1
      %p64 = por %p62, %p63
      %p66 = scmp.ne.s32.totalorder %s49, %s65
      %p67 = scmp.eq.s32.totalorder %s27, 0
      %p68 = por %p66, %p67
      %s69 = ssub.s32 %s28, %s40
      %p70 = scmp.eq.s32.totalorder %s69, 0
      %s72 = sadd.s32 %s71, 1
      %s73 = scalar_select %p70, %s71, %s72
      %p76 = pneg %p70
      %p77 = scmp.eq.s32.totalorder %s21, 1
      %p78 = por %p76, %p77
      %p79 = scmp.ne.s32.totalorder %s71, %s74
      %p80 = scmp.eq.s32.totalorder %s21, 0
      %p81 = por %p79, %p80
      %p82 = scmp.ne.s32.totalorder %s71, %s74
      %p83 = scmp.eq.s32.totalorder %s26, 1
      %p84 = por %p82, %p83
      %p85 = scmp.ne.s32.totalorder %s74, %s75
      %p86 = scmp.eq.s32.totalorder %s26, 0
      %p87 = por %p85, %p86
      %p88 = scmp.ne.s32.totalorder %s74, %s75
      %p89 = scmp.eq.s32.totalorder %s27, 1
      %p90 = por %p88, %p89
      %p92 = scmp.ne.s32.totalorder %s75, %s91
      %p93 = scmp.eq.s32.totalorder %s27, 0
      %p94 = por %p92, %p93
      %s95 = ssub.s32 %s28, %s40
      %p96 = scmp.eq.s32.totalorder %s95, 0
      %s98 = sadd.s32 %s97, 1
      %s99 = scalar_select %p96, %s97, %s98
      %p102 = pneg %p96
      %p103 = scmp.eq.s32.totalorder %s21, 1
      %p104 = por %p102, %p103
      %p105 = scmp.ne.s32.totalorder %s97, %s100
      %p106 = scmp.eq.s32.totalorder %s21, 0
      %p107 = por %p105, %p106
      %p108 = scmp.ne.s32.totalorder %s97, %s100
      %p109 = scmp.eq.s32.totalorder %s26, 1
      %p110 = por %p108, %p109
      %p111 = scmp.ne.s32.totalorder %s100, %s101
      %p112 = scmp.eq.s32.totalorder %s26, 0
      %p113 = por %p111, %p112
      %p114 = scmp.ne.s32.totalorder %s100, %s101
      %p115 = scmp.eq.s32.totalorder %s27, 1
      %p116 = por %p114, %p115
      %p118 = scmp.ne.s32.totalorder %s101, %s117
      %p119 = scmp.eq.s32.totalorder %s27, 0
      %p120 = por %p118, %p119
      %s121 = ssub.s32 %s28, %s40
      %s122 = ssub.s32 %s29, %s36
      %s123 = sor.u32 %s121, %s122
      %p124 = scmp.eq.s32.totalorder %s123, 0
      %s126 = sadd.s32 %s125, 1
      %s127 = scalar_select %p124, %s125, %s126
      %p130 = pneg %p124
      %p131 = scmp.eq.s32.totalorder %s21, 1
      %p132 = por %p130, %p131
      %p133 = scmp.ne.s32.totalorder %s125, %s128
      %p134 = scmp.eq.s32.totalorder %s21, 0
      %p135 = por %p133, %p134
      %p136 = scmp.ne.s32.totalorder %s125, %s128
      %p137 = scmp.eq.s32.totalorder %s26, 1
      %p138 = por %p136, %p137
      %p139 = scmp.ne.s32.totalorder %s128, %s129
      %p140 = scmp.eq.s32.totalorder %s26, 0
      %p141 = por %p139, %p140
      %p142 = scmp.ne.s32.totalorder %s128, %s129
      %p143 = scmp.eq.s32.totalorder %s27, 1
      %p144 = por %p142, %p143
      %p146 = scmp.ne.s32.totalorder %s129, %s145
      %p147 = scmp.eq.s32.totalorder %s27, 0
      %p148 = por %p146, %p147
      %s150 = sadd.s32 %s149, 1
      %p153 = scmp.eq.s32.totalorder %s21, 1
      %p154 = scmp.ne.s32.totalorder %s149, %s151
      %p155 = scmp.eq.s32.totalorder %s21, 0
      %p156 = por %p154, %p155
      %p157 = scmp.ne.s32.totalorder %s149, %s151
      %p158 = scmp.eq.s32.totalorder %s26, 1
      %p159 = por %p157, %p158
      %p160 = scmp.ne.s32.totalorder %s151, %s152
      %p161 = scmp.eq.s32.totalorder %s26, 0
      %p162 = por %p160, %p161
      %p163 = scmp.ne.s32.totalorder %s151, %s152
      %p164 = scmp.eq.s32.totalorder %s27, 1
      %p165 = por %p163, %p164
      %p167 = scmp.ne.s32.totalorder %s152, %s166
      %p168 = scmp.eq.s32.totalorder %s27, 0
      %p169 = por %p167, %p168
      %s171 = sadd.s32 %s170, 1
      %p174 = scmp.eq.s32.totalorder %s21, 1
      %p175 = scmp.ne.s32.totalorder %s170, %s172
      %p176 = scmp.eq.s32.totalorder %s21, 0
      %p177 = por %p175, %p176
      %p178 = scmp.ne.s32.totalorder %s170, %s172
      %p179 = scmp.eq.s32.totalorder %s26, 1
      %p180 = por %p178, %p179
      %p181 = scmp.ne.s32.totalorder %s172, %s173
      %p182 = scmp.eq.s32.totalorder %s26, 0
      %p183 = por %p181, %p182
      %p184 = scmp.ne.s32.totalorder %s172, %s173
      %p185 = scmp.eq.s32.totalorder %s27, 1
      %p186 = por %p184, %p185
      %p188 = scmp.ne.s32.totalorder %s173, %s187
      %p189 = scmp.eq.s32.totalorder %s27, 0
      %p190 = por %p188, %p189
      %s192 = sadd.s32 %s191, 1
      %p195 = scmp.eq.s32.totalorder %s21, 1
      %p196 = scmp.ne.s32.totalorder %s191, %s193
      %p197 = scmp.eq.s32.totalorder %s21, 0
      %p198 = por %p196, %p197
      %p199 = scmp.ne.s32.totalorder %s191, %s193
      %p200 = scmp.eq.s32.totalorder %s26, 1
      %p201 = por %p199, %p200
      %p202 = scmp.ne.s32.totalorder %s193, %s194
      %p203 = scmp.eq.s32.totalorder %s26, 0
      %p204 = por %p202, %p203
      %p205 = scmp.ne.s32.totalorder %s193, %s194
      %p206 = scmp.eq.s32.totalorder %s27, 1
      %p207 = por %p205, %p206
      %p209 = scmp.ne.s32.totalorder %s194, %s208
      %p210 = scmp.eq.s32.totalorder %s27, 0
      %p211 = por %p209, %p210
      %s213 = sadd.s32 %s212, 1
      %p216 = scmp.eq.s32.totalorder %s21, 1
      %p217 = scmp.ne.s32.totalorder %s212, %s214
      %p218 = scmp.eq.s32.totalorder %s21, 0
      %p219 = por %p217, %p218
      %p220 = scmp.ne.s32.totalorder %s212, %s214
      %p221 = scmp.eq.s32.totalorder %s26, 1
      %p222 = por %p220, %p221
      %p223 = scmp.ne.s32.totalorder %s214, %s215
      %p224 = scmp.eq.s32.totalorder %s26, 0
      %p225 = por %p223, %p224
      %p226 = scmp.ne.s32.totalorder %s214, %s215
      %p227 = scmp.eq.s32.totalorder %s27, 1
      %p228 = por %p226, %p227
      %p230 = scmp.ne.s32.totalorder %s215, %s229
      %p231 = scmp.eq.s32.totalorder %s27, 0
      %p232 = por %p230, %p231
      %s234 = sadd.s32 %s233, 1
      %p237 = scmp.eq.s32.totalorder %s21, 1
      %p238 = scmp.ne.s32.totalorder %s233, %s235
      %p239 = scmp.eq.s32.totalorder %s21, 0
      %p240 = por %p238, %p239
      %p241 = scmp.ne.s32.totalorder %s233, %s235
      %p242 = scmp.eq.s32.totalorder %s26, 1
      %p243 = por %p241, %p242
      %p244 = scmp.ne.s32.totalorder %s235, %s236
      %p245 = scmp.eq.s32.totalorder %s26, 0
      %p246 = por %p244, %p245
      %p247 = scmp.ne.s32.totalorder %s235, %s236
      %p248 = scmp.eq.s32.totalorder %s27, 1
      %p249 = por %p247, %p248
      %p251 = scmp.ne.s32.totalorder %s236, %s250
      %p252 = scmp.eq.s32.totalorder %s27, 0
      %p253 = por %p251, %p252
      %s255 = sadd.s32 %s254, 1
      %p258 = scmp.eq.s32.totalorder %s21, 1
      %p259 = scmp.ne.s32.totalorder %s254, %s256
      %p260 = scmp.eq.s32.totalorder %s21, 0
      %p261 = por %p259, %p260
      %p262 = scmp.ne.s32.totalorder %s254, %s256
      %p263 = scmp.eq.s32.totalorder %s26, 1
      %p264 = por %p262, %p263
      %p265 = scmp.ne.s32.totalorder %s256, %s257
      %p266 = scmp.eq.s32.totalorder %s26, 0
      %p267 = por %p265, %p266
      %p268 = scmp.ne.s32.totalorder %s256, %s257
      %p269 = scmp.eq.s32.totalorder %s27, 1
      %p270 = por %p268, %p269
      %p272 = scmp.ne.s32.totalorder %s257, %s271
      %p273 = scmp.eq.s32.totalorder %s27, 0
      %p274 = por %p272, %p273
      %s276 = sadd.s32 %s275, 1
      %p279 = scmp.eq.s32.totalorder %s21, 1
      %p280 = scmp.ne.s32.totalorder %s275, %s277
      %p281 = scmp.eq.s32.totalorder %s21, 0
      %p282 = por %p280, %p281
      %p283 = scmp.ne.s32.totalorder %s275, %s277
      %p284 = scmp.eq.s32.totalorder %s26, 1
      %p285 = por %p283, %p284
      %p286 = scmp.ne.s32.totalorder %s277, %s278
      %p287 = scmp.eq.s32.totalorder %s26, 0
      %p288 = por %p286, %p287
      %p289 = scmp.ne.s32.totalorder %s277, %s278
      %p290 = scmp.eq.s32.totalorder %s27, 1
      %p291 = por %p289, %p290
      %p293 = scmp.ne.s32.totalorder %s278, %s292
      %p294 = scmp.eq.s32.totalorder %s27, 0
      %p295 = por %p293, %p294
      %s297 = sadd.s32 %s296, 1
      %p300 = scmp.eq.s32.totalorder %s21, 1
      %p301 = scmp.ne.s32.totalorder %s296, %s298
      %p302 = scmp.eq.s32.totalorder %s21, 0
      %p303 = por %p301, %p302
      %p304 = scmp.ne.s32.totalorder %s296, %s298
      %p305 = scmp.eq.s32.totalorder %s26, 1
      %p306 = por %p304, %p305
      %p307 = scmp.ne.s32.totalorder %s298, %s299
      %p308 = scmp.eq.s32.totalorder %s26, 0
      %p309 = por %p307, %p308
      %p310 = scmp.ne.s32.totalorder %s298, %s299
      %p311 = scmp.eq.s32.totalorder %s27, 1
      %p312 = por %p310, %p311
      %p314 = scmp.ne.s32.totalorder %s299, %s313
      %p315 = scmp.eq.s32.totalorder %s27, 0
      %p316 = por %p314, %p315
      %s317 = ssub.s32 %s28, %s40
      %s318 = ssub.s32 %s29, %s36
      %s319 = sor.u32 %s317, %s318
      %p320 = scmp.eq.s32.totalorder %s319, 0
      %s322 = sadd.s32 %s321, 1
      %s323 = scalar_select %p320, %s321, %s322
      %p326 = pneg %p320
      %p327 = scmp.eq.s32.totalorder %s21, 1
      %p328 = por %p326, %p327
      %p329 = scmp.ne.s32.totalorder %s321, %s324
      %p330 = scmp.eq.s32.totalorder %s21, 0
      %p331 = por %p329, %p330
      %p332 = scmp.ne.s32.totalorder %s321, %s324
      %p333 = scmp.eq.s32.totalorder %s26, 1
      %p334 = por %p332, %p333
      %p335 = scmp.ne.s32.totalorder %s324, %s325
      %p336 = scmp.eq.s32.totalorder %s26, 0
      %p337 = por %p335, %p336
      %p338 = scmp.ne.s32.totalorder %s324, %s325
      %p339 = scmp.eq.s32.totalorder %s27, 1
      %p340 = por %p338, %p339
      %p342 = scmp.ne.s32.totalorder %s325, %s341
      %p343 = scmp.eq.s32.totalorder %s27, 0
      %p344 = por %p342, %p343
      %p345 = scmp.le.s32.totalorder 1, %s21
      %p346 = scmp.lt.s32.totalorder %s21, 3
      %p347 = pnand %p345, %p346
      %p348 = pneg %p347
      // Predicated region
      $region9: #{multi_head_attention.1} parent=5 // pred_check
        _
      $region10: #{multi_head_attention.1} parent=5 // pred_check_branch
        %350 = sbr.rel (%p347) target = $region12
      $region11: #{multi_head_attention.1} parent=5 // pred_region
        %s351 = ssub.s32 %s21, 1
        // Predicated region
        $region13: #{multi_head_attention.1} parent=11 // pred_check
          %p352 = pneg %p162
        $region14: #{multi_head_attention.1} parent=11 // pred_check_branch
          %354 = sbr.rel (%p352) target = $region16
        $region15: #{multi_head_attention.1} parent=11 // pred_region
          _
        $region16: #{multi_head_attention.1} parent=11 // pred_fallthru
          _
        // Predicated region
        $region17: #{multi_head_attention.1} parent=11 // pred_check
          %p355 = pneg %p183
        $region18: #{multi_head_attention.1} parent=11 // pred_check_branch
          %357 = sbr.rel (%p355) target = $region20
        $region19: #{multi_head_attention.1} parent=11 // pred_region
          _
        $region20: #{multi_head_attention.1} parent=11 // pred_fallthru
          _
        // Predicated region
        $region21: #{multi_head_attention.1} parent=11 // pred_check
          %p358 = pneg %p204
        $region22: #{multi_head_attention.1} parent=11 // pred_check_branch
          %360 = sbr.rel (%p358) target = $region24
        $region23: #{multi_head_attention.1} parent=11 // pred_region
          _
        $region24: #{multi_head_attention.1} parent=11 // pred_fallthru
          _
        // Predicated region
        $region25: #{multi_head_attention.1} parent=11 // pred_check
          %p361 = pneg %p225
        $region26: #{multi_head_attention.1} parent=11 // pred_check_branch
          %363 = sbr.rel (%p361) target = $region28
        $region27: #{multi_head_attention.1} parent=11 // pred_region
          _
        $region28: #{multi_head_attention.1} parent=11 // pred_fallthru
          _
        // Predicated region
        $region29: #{multi_head_attention.1} parent=11 // pred_check
          %p364 = pneg %p246
        $region30: #{multi_head_attention.1} parent=11 // pred_check_branch
          %366 = sbr.rel (%p364) target = $region32
        $region31: #{multi_head_attention.1} parent=11 // pred_region
          _
        $region32: #{multi_head_attention.1} parent=11 // pred_fallthru
          _
        // Predicated region
        $region33: #{multi_head_attention.1} parent=11 // pred_check
          %p367 = pneg %p267
        $region34: #{multi_head_attention.1} parent=11 // pred_check_branch
          %369 = sbr.rel (%p367) target = $region36
        $region35: #{multi_head_attention.1} parent=11 // pred_region
          _
        $region36: #{multi_head_attention.1} parent=11 // pred_fallthru
          _
        // Predicated region
        $region37: #{multi_head_attention.1} parent=11 // pred_check
          %p370 = pneg %p288
        $region38: #{multi_head_attention.1} parent=11 // pred_check_branch
          %372 = sbr.rel (%p370) target = $region40
        $region39: #{multi_head_attention.1} parent=11 // pred_region
          _
        $region40: #{multi_head_attention.1} parent=11 // pred_fallthru
          _
        // Predicated region
        $region41: #{multi_head_attention.1} parent=11 // pred_check
          %p373 = pneg %p309
        $region42: #{multi_head_attention.1} parent=11 // pred_check_branch
          %375 = sbr.rel (%p373) target = $region44
        $region43: #{multi_head_attention.1} parent=11 // pred_region
          _
        $region44: #{multi_head_attention.1} parent=11 // pred_fallthru
          _
      $region12: #{multi_head_attention.1} parent=5 // pred_fallthru
        _
      %p376 = scmp.lt.s32.totalorder %s21, 2
      // Predicated region
      $region45: #{multi_head_attention.1} parent=5 // pred_check
        %p377 = pneg %p376
      $region46: #{multi_head_attention.1} parent=5 // pred_check_branch
        %379 = sbr.rel (%p377) target = $region48
      $region47: #{multi_head_attention.1} parent=5 // pred_region
        // Predicated region
        $region49: #{multi_head_attention.1} parent=47 // pred_check
          %p380 = pneg %p55
        $region50: #{multi_head_attention.1} parent=47 // pred_check_branch
          %382 = sbr.rel (%p380) target = $region52
        $region51: #{multi_head_attention.1} parent=47 // pred_region
          %s383 = smul.u32 16, %s29
          %p384 = scmp.lt.s32.totalorder %s28, 1
          %s385 = scalar_select %p384, %s28, 1
          %p386 = scmp.lt.s32.totalorder %s383, 15
          %s387 = scalar_select %p386, %s383, 15
          %s388 = smul.addr %s385, 16
          %s389 = sadd.s32 %s387, %s388
          %s390 = smul.addr %s389, 8
          %s391 = scalar_lea.vmem %s0, %s390
          %s392 = smul.u32 16, %s29
        $region52: #{multi_head_attention.1} parent=47 // pred_fallthru
          _
        // Predicated region
        $region53: #{multi_head_attention.1} parent=47 // pred_check
          %p393 = pneg %p81
        $region54: #{multi_head_attention.1} parent=47 // pred_check_branch
          %395 = sbr.rel (%p393) target = $region56
        $region55: #{multi_head_attention.1} parent=47 // pred_region
          %p396 = scmp.lt.s32.totalorder %s28, 1
          %s397 = scalar_select %p396, %s28, 1
          %s398 = smul.addr %s397, 16
          %s399 = smul.addr %s398, 8
          %s400 = scalar_lea.vmem %s1, %s399
        $region56: #{multi_head_attention.1} parent=47 // pred_fallthru
          _
        // Predicated region
        $region57: #{multi_head_attention.1} parent=47 // pred_check
          %p401 = pneg %p107
        $region58: #{multi_head_attention.1} parent=47 // pred_check_branch
          %403 = sbr.rel (%p401) target = $region60
        $region59: #{multi_head_attention.1} parent=47 // pred_region
          %p404 = scmp.lt.s32.totalorder %s28, 1
          %s405 = scalar_select %p404, %s28, 1
          %s406 = smul.addr %s405, 16
          %s407 = smul.addr %s406, 8
          %s408 = scalar_lea.vmem %s2, %s407
        $region60: #{multi_head_attention.1} parent=47 // pred_fallthru
          _
        // Predicated region
        $region61: #{multi_head_attention.1} parent=47 // pred_check
          %p409 = pneg %p135
        $region62: #{multi_head_attention.1} parent=47 // pred_check_branch
          %411 = sbr.rel (%p409) target = $region64
        $region63: #{multi_head_attention.1} parent=47 // pred_region
          %s412 = smul.u32 16, %s29
          %p413 = scmp.lt.s32.totalorder %s28, 1
          %s414 = scalar_select %p413, %s28, 1
          %p415 = scmp.lt.s32.totalorder %s412, 15
          %s416 = scalar_select %p415, %s412, 15
          %s417 = smul.addr %s414, 16
          %s418 = sadd.s32 %s416, %s417
          %s419 = smul.addr %s418, 8
          %s420 = scalar_lea.vmem %s3, %s419
          %s421 = smul.u32 16, %s29
        $region64: #{multi_head_attention.1} parent=47 // pred_fallthru
          _
      $region48: #{multi_head_attention.1} parent=5 // pred_fallthru
        _
      %p422 = scmp.le.s32.totalorder 1, %s21
      %p423 = scmp.lt.s32.totalorder %s21, 3
      %p424 = pnand %p422, %p423
      %p425 = pneg %p424
      // Predicated region
      $region65: #{multi_head_attention.1} parent=5 // pred_check
        _
      $region66: #{multi_head_attention.1} parent=5 // pred_check_branch
        %427 = sbr.rel (%p424) target = $region68
      $region67: #{multi_head_attention.1} parent=5 // pred_region
        %s428 = ssub.s32 %s21, 1
        %s429 = smul.u32 16, %s31
        %p430 = scmp.lt.s32.totalorder %s30, 1
        %s431 = scalar_select %p430, %s30, 1
        %p432 = scmp.lt.s32.totalorder %s429, 15
        %s433 = scalar_select %p432, %s429, 15
        %s434 = smul.addr %s431, 16
        %s435 = sadd.s32 %s433, %s434
        %s436 = smul.addr %s435, 8
        %s437 = scalar_lea.vmem %s0, %s436
        %p438 = pneg %p61
        %p439 = pneg %p58
        %p440 = scmp.lt.s32.totalorder %s30, 1
        %s441 = scalar_select %p440, %s30, 1
        %s442 = smul.addr %s441, 16
        %s443 = smul.addr %s442, 8
        %s444 = scalar_lea.vmem %s1, %s443
        %p445 = pneg %p87
        %p446 = pneg %p84
        %p447 = scmp.lt.s32.totalorder %s30, 1
        %s448 = scalar_select %p447, %s30, 1
        %s449 = smul.addr %s448, 16
        %s450 = smul.addr %s449, 8
        %s451 = scalar_lea.vmem %s2, %s450
        %p452 = pneg %p113
        %p453 = pneg %p110
        %s454 = smul.u32 16, %s31
        %p455 = scmp.lt.s32.totalorder %s30, 1
        %s456 = scalar_select %p455, %s30, 1
        %p457 = scmp.lt.s32.totalorder %s454, 15
        %s458 = scalar_select %p457, %s454, 15
        %s459 = smul.addr %s456, 16
        %s460 = sadd.s32 %s458, %s459
        %s461 = smul.addr %s460, 8
        %s462 = scalar_lea.vmem %s3, %s461
        %p463 = pneg %p141
        %p464 = pneg %p138
        %p465 = pneg %p162
        %p466 = pneg %p159
        %p467 = pneg %p183
        %p468 = pneg %p180
        %p469 = pneg %p204
        %p470 = pneg %p201
        %p471 = pneg %p225
        %p472 = pneg %p222
        %p473 = pneg %p246
        %p474 = pneg %p243
        %p475 = pneg %p267
        %p476 = pneg %p264
        %p477 = pneg %p288
        %p478 = pneg %p285
        %p479 = pneg %p309
        %p480 = pneg %p306
        %p481 = pneg %p337
        %p482 = pneg %p334
        %s483 = sand.u32 %s324, 1
        %s484 = scalar_lea.sflag [#allocation5], %s483
        %s485 = sand.u32 %s324, 1
        %s486 = smul.addr %s485, 128
        %s487 = scalar_lea.vmem [#allocation4], %s486
        %s488 = smul.u32 16, %s31
        %p489 = scmp.lt.s32.totalorder %s30, 1
        %s490 = scalar_select %p489, %s30, 1
        %p491 = scmp.lt.s32.totalorder %s488, 15
        %s492 = scalar_select %p491, %s488, 15
        %s493 = smul.addr %s490, 16
        %s494 = sadd.s32 %s492, %s493
        %s495 = smul.addr %s494, 8
        %s496 = scalar_lea.vmem %s0, %s495
        %s497 = smul.u32 16, %s31
        %p498 = scmp.lt.s32.totalorder %s30, 1
        %s499 = scalar_select %p498, %s30, 1
        %s500 = smul.addr %s499, 16
        %s501 = smul.addr %s500, 8
        %s502 = scalar_lea.vmem %s1, %s501
        %p503 = scmp.lt.s32.totalorder %s30, 1
        %s504 = scalar_select %p503, %s30, 1
        %s505 = smul.addr %s504, 16
        %s506 = smul.addr %s505, 8
        %s507 = scalar_lea.vmem %s2, %s506
        %s508 = smul.u32 16, %s31
        %p509 = scmp.lt.s32.totalorder %s30, 1
        %s510 = scalar_select %p509, %s30, 1
        %p511 = scmp.lt.s32.totalorder %s508, 15
        %s512 = scalar_select %p511, %s508, 15
        %s513 = smul.addr %s510, 16
        %s514 = sadd.s32 %s512, %s513
        %s515 = smul.addr %s514, 8
        %s516 = scalar_lea.vmem %s3, %s515
        %s517 = smul.u32 16, %s31
        %s518 = smul.u32 16, %s31
        %p520 = scmp.eq.s32.totalorder %s31, 0
        // Predicated region
        $region69: #{multi_head_attention.1} parent=67 // pred_check
          %p521 = pneg %p520
        $region70: #{multi_head_attention.1} parent=67 // pred_check_branch
          %523 = sbr.rel (%p521) target = $region72
        $region71: #{multi_head_attention.1} parent=67 // pred_region
          %v524 = vld [vmem:[%s502] sm:$0xff]
          %v525 = vld [vmem:[%s502 + $0x8] sm:$0xff]
          %v526 = vld [vmem:[%s502 + $0x10] sm:$0xff]
          %v527 = vld [vmem:[%s502 + $0x18] sm:$0xff]
          %v528 = vld [vmem:[%s502 + $0x20] sm:$0xff]
          %v529 = vld [vmem:[%s502 + $0x28] sm:$0xff]
          %v530 = vld [vmem:[%s502 + $0x30] sm:$0xff]
          %v531 = vld [vmem:[%s502 + $0x38] sm:$0xff]
          %v532 = vld [vmem:[%s502 + $0x40] sm:$0xff]
          %v533 = vld [vmem:[%s502 + $0x48] sm:$0xff]
          %v534 = vld [vmem:[%s502 + $0x50] sm:$0xff]
          %v535 = vld [vmem:[%s502 + $0x58] sm:$0xff]
          %v536 = vld [vmem:[%s502 + $0x60] sm:$0xff]
          %v537 = vld [vmem:[%s502 + $0x68] sm:$0xff]
          %v538 = vld [vmem:[%s502 + $0x70] sm:$0xff]
          %v539 = vld [vmem:[%s502 + $0x78] sm:$0xff]
          %v540 = vpack.c.bf16 %v525, %v524
          %v541 = vpack.c.bf16 %v527, %v526
          %v542 = vpack.c.bf16 %v529, %v528
          %v543 = vpack.c.bf16 %v531, %v530
          %v544 = vpack.c.bf16 %v533, %v532
          %v545 = vpack.c.bf16 %v535, %v534
          %v546 = vpack.c.bf16 %v537, %v536
          %v547 = vpack.c.bf16 %v539, %v538
          %v548 = vld [vmem:[%s6] sm:$0xf]
          %v549 = vld [vmem:[%s6 + $0x4] sm:$0xf]
          %v550 = vld [vmem:[%s6 + $0x8] sm:$0xf]
          %v551 = vld [vmem:[%s6 + $0xc] sm:$0xf]
          %v552 = vld [vmem:[%s6 + $0x10] sm:$0xf]
          %v553 = vld [vmem:[%s6 + $0x14] sm:$0xf]
          %v554 = vld [vmem:[%s6 + $0x18] sm:$0xf]
          %v555 = vld [vmem:[%s6 + $0x1c] sm:$0xf]
          %v556 = vld [vmem:[%s6 + $0x20] sm:$0xf]
          %v557 = vld [vmem:[%s6 + $0x24] sm:$0xf]
          %v558 = vld [vmem:[%s6 + $0x28] sm:$0xf]
          %v559 = vld [vmem:[%s6 + $0x2c] sm:$0xf]
          %v560 = vld [vmem:[%s6 + $0x30] sm:$0xf]
          %v561 = vld [vmem:[%s6 + $0x34] sm:$0xf]
          %v562 = vld [vmem:[%s6 + $0x38] sm:$0xf]
          %v563 = vld [vmem:[%s6 + $0x3c] sm:$0xf]
          %v564 = vld [vmem:[%s7] sm:$0x1]
          %v566 = vlaneseq
          %v567 = vshrl.u32 %v566, 7
          %v568 = vsub.s32 0, %v567
          %v569 = vrot.slane %v564, %v568
          %v587 = vunpack.c.l.b16 %v548
          %v588 = vunpack.c.l.b16 %v549
          %v589 = vunpack.c.l.b16 %v550
          %v590 = vunpack.c.l.b16 %v551
          %v591 = vunpack.c.l.b16 %v552
          %v592 = vunpack.c.l.b16 %v553
          %v593 = vunpack.c.l.b16 %v554
          %v594 = vunpack.c.l.b16 %v555
          %v595 = vunpack.c.l.b16 %v556
          %v596 = vunpack.c.l.b16 %v557
          %v597 = vunpack.c.l.b16 %v558
          %v598 = vunpack.c.l.b16 %v559
          %v599 = vunpack.c.l.b16 %v560
          %v600 = vunpack.c.l.b16 %v561
          %v601 = vunpack.c.l.b16 %v562
          %v602 = vunpack.c.l.b16 %v563
          %v603 = vpack.c.b16 %v588, %v587
          %v604 = vpack.c.b16 %v590, %v589
          %v605 = vpack.c.b16 %v592, %v591
          %v606 = vpack.c.b16 %v594, %v593
          %v607 = vpack.c.b16 %v596, %v595
          %v608 = vpack.c.b16 %v598, %v597
          %v609 = vpack.c.b16 %v600, %v599
          %v610 = vpack.c.b16 %v602, %v601
          %619 = vmatprep.subr.bf16.mxu0 0
          %620 = vmatpush1.bf16.msra.mxu0 %v603
          %621 = vmatprep.subr.bf16.mxu0 0
          %622 = vmatpush1.bf16.msra.mxu0 %v604
          %623 = vmatprep.subr.bf16.mxu0 0
          %624 = vmatpush1.bf16.msra.mxu0 %v605
          %625 = vmatprep.subr.bf16.mxu0 0
          %626 = vmatpush1.bf16.msra.mxu0 %v606
          %627 = vmatprep.subr.bf16.mxu0 0
          %628 = vmatpush1.bf16.msra.mxu0 %v607
          %629 = vmatprep.subr.bf16.mxu0 0
          %630 = vmatpush1.bf16.msra.mxu0 %v608
          %631 = vmatprep.subr.bf16.mxu0 0
          %632 = vmatpush1.bf16.msra.mxu0 %v609
          %633 = vmatprep.subr.bf16.mxu0 0
          %634 = vmatpush1.bf16.msra.mxu0 %v610
          %635 = vmatprep.subr.bf16.mxu0 0
          %636 = vmatpush1.bf16.msra.mxu0 0
          %637 = vmatprep.subr.bf16.mxu0 0
          %638 = vmatpush1.bf16.msra.mxu0 0
          %639 = vmatprep.subr.bf16.mxu0 0
          %640 = vmatpush1.bf16.msra.mxu0 0
          %641 = vmatprep.subr.bf16.mxu0 0
          %642 = vmatpush1.bf16.msra.mxu0 0
          %643 = vmatprep.subr.bf16.mxu0 0
          %644 = vmatpush1.bf16.msra.mxu0 0
          %645 = vmatprep.subr.bf16.mxu0 0
          %646 = vmatpush1.bf16.msra.mxu0 0
          %647 = vmatprep.subr.bf16.mxu0 0
          %648 = vmatpush1.bf16.msra.mxu0 0
          %649 = vmatprep.subr.bf16.mxu0 0
          %650 = vmatpush1.bf16.msra.mxu0 0
          %651 = vmatprep.mubr.bf16.mxu0 0
          %652 = vmatmul.mubr.bf16.gmra.mrb[0].mxu0 %v540
          %v653 = vpop.f32.mrb[0].mxu0
          %v654 = vadd.f32 %v569, %v653
          %v655 = vpop.f32.mrb[0].mxu0
          %v656 = vpop.f32.mrb[0].mxu0
          %v657 = vadd.f32 %v569, %v656
          %v658 = vpop.f32.mrb[0].mxu0
          %659 = vmatprep.mubr.bf16.mxu0 0
          %660 = vmatmul.mubr.bf16.gmra.mrb[0].mxu0 %v541
          %v661 = vpop.f32.mrb[0].mxu0
          %v662 = vadd.f32 %v569, %v661
          %v663 = vpop.f32.mrb[0].mxu0
          %v664 = vpop.f32.mrb[0].mxu0
          %v665 = vadd.f32 %v569, %v664
          %v666 = vpop.f32.mrb[0].mxu0
          %667 = vmatprep.mubr.bf16.mxu0 0
          %668 = vmatmul.mubr.bf16.gmra.mrb[0].mxu0 %v542
          %v669 = vpop.f32.mrb[0].mxu0
          %v670 = vadd.f32 %v569, %v669
          %v671 = vpop.f32.mrb[0].mxu0
          %v672 = vpop.f32.mrb[0].mxu0
          %v673 = vadd.f32 %v569, %v672
          %v674 = vpop.f32.mrb[0].mxu0
          %675 = vmatprep.mubr.bf16.mxu0 0
          %676 = vmatmul.mubr.bf16.gmra.mrb[0].mxu0 %v543
          %v677 = vpop.f32.mrb[0].mxu0
          %v678 = vadd.f32 %v569, %v677
          %v679 = vpop.f32.mrb[0].mxu0
          %v680 = vpop.f32.mrb[0].mxu0
          %v681 = vadd.f32 %v569, %v680
          %v682 = vpop.f32.mrb[0].mxu0
          %683 = vmatprep.mubr.bf16.mxu0 0
          %684 = vmatmul.mubr.bf16.gmra.mrb[0].mxu0 %v544
          %v685 = vpop.f32.mrb[0].mxu0
          %v686 = vadd.f32 %v569, %v685
          %v687 = vpop.f32.mrb[0].mxu0
          %v688 = vpop.f32.mrb[0].mxu0
          %v689 = vadd.f32 %v569, %v688
          %v690 = vpop.f32.mrb[0].mxu0
          %691 = vmatprep.mubr.bf16.mxu0 0
          %692 = vmatmul.mubr.bf16.gmra.mrb[0].mxu0 %v545
          %v693 = vpop.f32.mrb[0].mxu0
          %v694 = vadd.f32 %v569, %v693
          %v695 = vpop.f32.mrb[0].mxu0
          %v696 = vpop.f32.mrb[0].mxu0
          %v697 = vadd.f32 %v569, %v696
          %v698 = vpop.f32.mrb[0].mxu0
          %699 = vmatprep.mubr.bf16.mxu0 0
          %700 = vmatmul.mubr.bf16.gmra.mrb[0].mxu0 %v546
          %v701 = vpop.f32.mrb[0].mxu0
          %v702 = vadd.f32 %v569, %v701
          %v703 = vpop.f32.mrb[0].mxu0
          %v704 = vpop.f32.mrb[0].mxu0
          %v705 = vadd.f32 %v569, %v704
          %v706 = vpop.f32.mrb[0].mxu0
          %707 = vmatprep.mubr.bf16.mxu0 0
          %708 = vmatmul.mubr.bf16.gmra.mrb[0].mxu0 %v547
          %v709 = vpop.f32.mrb[0].mxu0
          %v710 = vadd.f32 %v569, %v709
          %v711 = vpop.f32.mrb[0].mxu0
          %v712 = vpop.f32.mrb[0].mxu0
          %v713 = vadd.f32 %v569, %v712
          %v714 = vpop.f32.mrb[0].mxu0
          %715 = vdwg.mxu0
          %v716 = vld [vmem:[%s507] sm:$0xff]
          %v717 = vld [vmem:[%s507 + $0x8] sm:$0xff]
          %v718 = vld [vmem:[%s507 + $0x10] sm:$0xff]
          %v719 = vld [vmem:[%s507 + $0x18] sm:$0xff]
          %v720 = vld [vmem:[%s507 + $0x20] sm:$0xff]
          %v721 = vld [vmem:[%s507 + $0x28] sm:$0xff]
          %v722 = vld [vmem:[%s507 + $0x30] sm:$0xff]
          %v723 = vld [vmem:[%s507 + $0x38] sm:$0xff]
          %v724 = vld [vmem:[%s507 + $0x40] sm:$0xff]
          %v725 = vld [vmem:[%s507 + $0x48] sm:$0xff]
          %v726 = vld [vmem:[%s507 + $0x50] sm:$0xff]
          %v727 = vld [vmem:[%s507 + $0x58] sm:$0xff]
          %v728 = vld [vmem:[%s507 + $0x60] sm:$0xff]
          %v729 = vld [vmem:[%s507 + $0x68] sm:$0xff]
          %v730 = vld [vmem:[%s507 + $0x70] sm:$0xff]
          %v731 = vld [vmem:[%s507 + $0x78] sm:$0xff]
          %v732 = vpack.c.bf16 %v717, %v716
          %v733 = vpack.c.bf16 %v719, %v718
          %v734 = vpack.c.bf16 %v721, %v720
          %v735 = vpack.c.bf16 %v723, %v722
          %v736 = vpack.c.bf16 %v725, %v724
          %v737 = vpack.c.bf16 %v727, %v726
          %v738 = vpack.c.bf16 %v729, %v728
          %v739 = vpack.c.bf16 %v731, %v730
          %v740 = vld [vmem:[%s8] sm:$0xf]
          %v741 = vld [vmem:[%s8 + $0x4] sm:$0xf]
          %v742 = vld [vmem:[%s8 + $0x8] sm:$0xf]
          %v743 = vld [vmem:[%s8 + $0xc] sm:$0xf]
          %v744 = vld [vmem:[%s8 + $0x10] sm:$0xf]
          %v745 = vld [vmem:[%s8 + $0x14] sm:$0xf]
          %v746 = vld [vmem:[%s8 + $0x18] sm:$0xf]
          %v747 = vld [vmem:[%s8 + $0x1c] sm:$0xf]
          %v748 = vld [vmem:[%s8 + $0x20] sm:$0xf]
          %v749 = vld [vmem:[%s8 + $0x24] sm:$0xf]
          %v750 = vld [vmem:[%s8 + $0x28] sm:$0xf]
          %v751 = vld [vmem:[%s8 + $0x2c] sm:$0xf]
          %v752 = vld [vmem:[%s8 + $0x30] sm:$0xf]
          %v753 = vld [vmem:[%s8 + $0x34] sm:$0xf]
          %v754 = vld [vmem:[%s8 + $0x38] sm:$0xf]
          %v755 = vld [vmem:[%s8 + $0x3c] sm:$0xf]
          %v756 = vld [vmem:[%s9] sm:$0x1]
          %v758 = vlaneseq
          %v759 = vshrl.u32 %v758, 7
          %v760 = vsub.s32 0, %v759
          %v761 = vrot.slane %v756, %v760
          %v779 = vunpack.c.l.b16 %v740
          %v780 = vunpack.c.l.b16 %v741
          %v781 = vunpack.c.l.b16 %v742
          %v782 = vunpack.c.l.b16 %v743
          %v783 = vunpack.c.l.b16 %v744
          %v784 = vunpack.c.l.b16 %v745
          %v785 = vunpack.c.l.b16 %v746
          %v786 = vunpack.c.l.b16 %v747
          %v787 = vunpack.c.l.b16 %v748
          %v788 = vunpack.c.l.b16 %v749
          %v789 = vunpack.c.l.b16 %v750
          %v790 = vunpack.c.l.b16 %v751
          %v791 = vunpack.c.l.b16 %v752
          %v792 = vunpack.c.l.b16 %v753
          %v793 = vunpack.c.l.b16 %v754
          %v794 = vunpack.c.l.b16 %v755
          %v795 = vpack.c.b16 %v780, %v779
          %v796 = vpack.c.b16 %v782, %v781
          %v797 = vpack.c.b16 %v784, %v783
          %v798 = vpack.c.b16 %v786, %v785
          %v799 = vpack.c.b16 %v788, %v787
          %v800 = vpack.c.b16 %v790, %v789
          %v801 = vpack.c.b16 %v792, %v791
          %v802 = vpack.c.b16 %v794, %v793
          %811 = vmatprep.subr.bf16.mxu0 0
          %812 = vmatpush1.bf16.msra.mxu0 %v795
          %813 = vmatprep.subr.bf16.mxu0 0
          %814 = vmatpush1.bf16.msra.mxu0 %v796
          %815 = vmatprep.subr.bf16.mxu0 0
          %816 = vmatpush1.bf16.msra.mxu0 %v797
          %817 = vmatprep.subr.bf16.mxu0 0
          %818 = vmatpush1.bf16.msra.mxu0 %v798
          %819 = vmatprep.subr.bf16.mxu0 0
          %820 = vmatpush1.bf16.msra.mxu0 %v799
          %821 = vmatprep.subr.bf16.mxu0 0
          %822 = vmatpush1.bf16.msra.mxu0 %v800
          %823 = vmatprep.subr.bf16.mxu0 0
          %824 = vmatpush1.bf16.msra.mxu0 %v801
          %825 = vmatprep.subr.bf16.mxu0 0
          %826 = vmatpush1.bf16.msra.mxu0 %v802
          %827 = vmatprep.subr.bf16.mxu0 0
          %828 = vmatpush1.bf16.msra.mxu0 0
          %829 = vmatprep.subr.bf16.mxu0 0
          %830 = vmatpush1.bf16.msra.mxu0 0
          %831 = vmatprep.subr.bf16.mxu0 0
          %832 = vmatpush1.bf16.msra.mxu0 0
          %833 = vmatprep.subr.bf16.mxu0 0
          %834 = vmatpush1.bf16.msra.mxu0 0
          %835 = vmatprep.subr.bf16.mxu0 0
          %836 = vmatpush1.bf16.msra.mxu0 0
          %837 = vmatprep.subr.bf16.mxu0 0
          %838 = vmatpush1.bf16.msra.mxu0 0
          %839 = vmatprep.subr.bf16.mxu0 0
          %840 = vmatpush1.bf16.msra.mxu0 0
          %841 = vmatprep.subr.bf16.mxu0 0
          %842 = vmatpush1.bf16.msra.mxu0 0
          %843 = vmatprep.mubr.bf16.mxu0 0
          %844 = vmatmul.mubr.bf16.gmra.mrb[0].mxu0 %v732
          %v845 = vpop.f32.mrb[0].mxu0
          %v846 = vadd.f32 %v761, %v845
          %v847 = vpop.f32.mrb[0].mxu0
          %v848 = vpop.f32.mrb[0].mxu0
          %v849 = vadd.f32 %v761, %v848
          %v850 = vpop.f32.mrb[0].mxu0
          %851 = vmatprep.mubr.bf16.mxu0 0
          %852 = vmatmul.mubr.bf16.gmra.mrb[0].mxu0 %v733
          %v853 = vpop.f32.mrb[0].mxu0
          %v854 = vadd.f32 %v761, %v853
          %v855 = vpop.f32.mrb[0].mxu0
          %v856 = vpop.f32.mrb[0].mxu0
          %v857 = vadd.f32 %v761, %v856
          %v858 = vpop.f32.mrb[0].mxu0
          %859 = vmatprep.mubr.bf16.mxu0 0
          %860 = vmatmul.mubr.bf16.gmra.mrb[0].mxu0 %v734
          %v861 = vpop.f32.mrb[0].mxu0
          %v862 = vadd.f32 %v761, %v861
          %v863 = vpop.f32.mrb[0].mxu0
          %v864 = vpop.f32.mrb[0].mxu0
          %v865 = vadd.f32 %v761, %v864
          %v866 = vpop.f32.mrb[0].mxu0
          %867 = vmatprep.mubr.bf16.mxu0 0
          %868 = vmatmul.mubr.bf16.gmra.mrb[0].mxu0 %v735
          %v869 = vpop.f32.mrb[0].mxu0
          %v870 = vadd.f32 %v761, %v869
          %v871 = vpop.f32.mrb[0].mxu0
          %v872 = vpop.f32.mrb[0].mxu0
          %v873 = vadd.f32 %v761, %v872
          %v874 = vpop.f32.mrb[0].mxu0
          %875 = vmatprep.mubr.bf16.mxu0 0
          %876 = vmatmul.mubr.bf16.gmra.mrb[0].mxu0 %v736
          %v877 = vpop.f32.mrb[0].mxu0
          %v878 = vadd.f32 %v761, %v877
          %v879 = vpop.f32.mrb[0].mxu0
          %v880 = vpop.f32.mrb[0].mxu0
          %v881 = vadd.f32 %v761, %v880
          %v882 = vpop.f32.mrb[0].mxu0
          %883 = vmatprep.mubr.bf16.mxu0 0
          %884 = vmatmul.mubr.bf16.gmra.mrb[0].mxu0 %v737
          %v885 = vpop.f32.mrb[0].mxu0
          %v886 = vadd.f32 %v761, %v885
          %v887 = vpop.f32.mrb[0].mxu0
          %v888 = vpop.f32.mrb[0].mxu0
          %v889 = vadd.f32 %v761, %v888
          %v890 = vpop.f32.mrb[0].mxu0
          %891 = vmatprep.mubr.bf16.mxu0 0
          %892 = vmatmul.mubr.bf16.gmra.mrb[0].mxu0 %v738
          %v893 = vpop.f32.mrb[0].mxu0
          %v894 = vadd.f32 %v761, %v893
          %v895 = vpop.f32.mrb[0].mxu0
          %v896 = vpop.f32.mrb[0].mxu0
          %v897 = vadd.f32 %v761, %v896
          %v898 = vpop.f32.mrb[0].mxu0
          %899 = vmatprep.mubr.bf16.mxu0 0
          %900 = vmatmul.mubr.bf16.gmra.mrb[0].mxu0 %v739
          %v901 = vpop.f32.mrb[0].mxu0
          %v902 = vadd.f32 %v761, %v901
          %v903 = vpop.f32.mrb[0].mxu0
          %v904 = vpop.f32.mrb[0].mxu0
          %v905 = vadd.f32 %v761, %v904
          %v906 = vpop.f32.mrb[0].mxu0
          %907 = vdwg.mxu0
          %924 = vrot.lane.b32.xlu0 %v654, 96
          %v925 = vpop.permute.xlu0 %924
          %926 = vrot.lane.b32.xlu0 %v657, 96
          %v927 = vpop.permute.xlu0 %926
          %928 = vrot.lane.b32.xlu0 %v662, 96
          %v929 = vpop.permute.xlu0 %928
          %930 = vrot.lane.b32.xlu0 %v665, 96
          %v931 = vpop.permute.xlu0 %930
          %932 = vrot.lane.b32.xlu0 %v670, 96
          %v933 = vpop.permute.xlu0 %932
          %934 = vrot.lane.b32.xlu0 %v673, 96
          %v935 = vpop.permute.xlu0 %934
          %936 = vrot.lane.b32.xlu0 %v678, 96
          %v937 = vpop.permute.xlu0 %936
          %938 = vrot.lane.b32.xlu0 %v681, 96
          %v939 = vpop.permute.xlu0 %938
          %940 = vrot.lane.b32.xlu0 %v686, 96
          %v941 = vpop.permute.xlu0 %940
          %942 = vrot.lane.b32.xlu0 %v689, 96
          %v943 = vpop.permute.xlu0 %942
          %944 = vrot.lane.b32.xlu0 %v694, 96
          %v945 = vpop.permute.xlu0 %944
          %946 = vrot.lane.b32.xlu0 %v697, 96
          %v947 = vpop.permute.xlu0 %946
          %948 = vrot.lane.b32.xlu0 %v702, 96
          %v949 = vpop.permute.xlu0 %948
          %950 = vrot.lane.b32.xlu0 %v705, 96
          %v951 = vpop.permute.xlu0 %950
          %952 = vrot.lane.b32.xlu0 %v710, 96
          %v953 = vpop.permute.xlu0 %952
          %954 = vrot.lane.b32.xlu0 %v713, 96
          %v955 = vpop.permute.xlu0 %954
          %972 = vrot.lane.b32.xlu0 %v654, 64
          %v973 = vpop.permute.xlu0 %972
          %974 = vrot.lane.b32.xlu0 %v657, 64
          %v975 = vpop.permute.xlu0 %974
          %976 = vrot.lane.b32.xlu0 %v662, 64
          %v977 = vpop.permute.xlu0 %976
          %978 = vrot.lane.b32.xlu0 %v665, 64
          %v979 = vpop.permute.xlu0 %978
          %980 = vrot.lane.b32.xlu0 %v670, 64
          %v981 = vpop.permute.xlu0 %980
          %982 = vrot.lane.b32.xlu0 %v673, 64
          %v983 = vpop.permute.xlu0 %982
          %984 = vrot.lane.b32.xlu0 %v678, 64
          %v985 = vpop.permute.xlu0 %984
          %986 = vrot.lane.b32.xlu0 %v681, 64
          %v987 = vpop.permute.xlu0 %986
          %988 = vrot.lane.b32.xlu0 %v686, 64
          %v989 = vpop.permute.xlu0 %988
          %990 = vrot.lane.b32.xlu0 %v689, 64
          %v991 = vpop.permute.xlu0 %990
          %992 = vrot.lane.b32.xlu0 %v694, 64
          %v993 = vpop.permute.xlu0 %992
          %994 = vrot.lane.b32.xlu0 %v697, 64
          %v995 = vpop.permute.xlu0 %994
          %996 = vrot.lane.b32.xlu0 %v702, 64
          %v997 = vpop.permute.xlu0 %996
          %998 = vrot.lane.b32.xlu0 %v705, 64
          %v999 = vpop.permute.xlu0 %998
          %1000 = vrot.lane.b32.xlu0 %v710, 64
          %v1001 = vpop.permute.xlu0 %1000
          %1002 = vrot.lane.b32.xlu0 %v713, 64
          %v1003 = vpop.permute.xlu0 %1002
          %1020 = vrot.lane.b32.xlu0 %v654, 32
          %v1021 = vpop.permute.xlu0 %1020
          %1022 = vrot.lane.b32.xlu0 %v657, 32
          %v1023 = vpop.permute.xlu0 %1022
          %1024 = vrot.lane.b32.xlu0 %v662, 32
          %v1025 = vpop.permute.xlu0 %1024
          %1026 = vrot.lane.b32.xlu0 %v665, 32
          %v1027 = vpop.permute.xlu0 %1026
          %1028 = vrot.lane.b32.xlu0 %v670, 32
          %v1029 = vpop.permute.xlu0 %1028
          %1030 = vrot.lane.b32.xlu0 %v673, 32
          %v1031 = vpop.permute.xlu0 %1030
          %1032 = vrot.lane.b32.xlu0 %v678, 32
          %v1033 = vpop.permute.xlu0 %1032
          %1034 = vrot.lane.b32.xlu0 %v681, 32
          %v1035 = vpop.permute.xlu0 %1034
          %1036 = vrot.lane.b32.xlu0 %v686, 32
          %v1037 = vpop.permute.xlu0 %1036
          %1038 = vrot.lane.b32.xlu0 %v689, 32
          %v1039 = vpop.permute.xlu0 %1038
          %1040 = vrot.lane.b32.xlu0 %v694, 32
          %v1041 = vpop.permute.xlu0 %1040
          %1042 = vrot.lane.b32.xlu0 %v697, 32
          %v1043 = vpop.permute.xlu0 %1042
          %1044 = vrot.lane.b32.xlu0 %v702, 32
          %v1045 = vpop.permute.xlu0 %1044
          %1046 = vrot.lane.b32.xlu0 %v705, 32
          %v1047 = vpop.permute.xlu0 %1046
          %1048 = vrot.lane.b32.xlu0 %v710, 32
          %v1049 = vpop.permute.xlu0 %1048
          %1050 = vrot.lane.b32.xlu0 %v713, 32
          %v1051 = vpop.permute.xlu0 %1050
          %v1068 = vpack.c.bf16 %v657, %v654
          %v1069 = vpack.c.bf16 %v665, %v662
          %v1070 = vpack.c.bf16 %v673, %v670
          %v1071 = vpack.c.bf16 %v681, %v678
          %v1072 = vpack.c.bf16 %v689, %v686
          %v1073 = vpack.c.bf16 %v697, %v694
          %v1074 = vpack.c.bf16 %v705, %v702
          %v1075 = vpack.c.bf16 %v713, %v710
          %v1076 = vpack.c.bf16 %v927, %v925
          %v1077 = vpack.c.bf16 %v931, %v929
          %v1078 = vpack.c.bf16 %v935, %v933
          %v1079 = vpack.c.bf16 %v939, %v937
          %v1080 = vpack.c.bf16 %v943, %v941
          %v1081 = vpack.c.bf16 %v947, %v945
          %v1082 = vpack.c.bf16 %v951, %v949
          %v1083 = vpack.c.bf16 %v955, %v953
          %v1084 = vpack.c.bf16 %v975, %v973
          %v1085 = vpack.c.bf16 %v979, %v977
          %v1086 = vpack.c.bf16 %v983, %v981
          %v1087 = vpack.c.bf16 %v987, %v985
          %v1088 = vpack.c.bf16 %v991, %v989
          %v1089 = vpack.c.bf16 %v995, %v993
          %v1090 = vpack.c.bf16 %v999, %v997
          %v1091 = vpack.c.bf16 %v1003, %v1001
          %v1092 = vpack.c.bf16 %v1023, %v1021
          %v1093 = vpack.c.bf16 %v1027, %v1025
          %v1094 = vpack.c.bf16 %v1031, %v1029
          %v1095 = vpack.c.bf16 %v1035, %v1033
          %v1096 = vpack.c.bf16 %v1039, %v1037
          %v1097 = vpack.c.bf16 %v1043, %v1041
          %v1098 = vpack.c.bf16 %v1047, %v1045
          %v1099 = vpack.c.bf16 %v1051, %v1049
          %vm1100 = vcmask 261120
          %1101 = vst.msk [vmem:[#allocation2] sm:$0xff] %vm1100, %v1068
          %1102 = vst.msk [vmem:[#allocation2 + $0x8] sm:$0xff] %vm1100, %v1069
          %1103 = vst.msk [vmem:[#allocation2 + $0x10] sm:$0xff] %vm1100, %v1070
          %1104 = vst.msk [vmem:[#allocation2 + $0x18] sm:$0xff] %vm1100, %v1071
          %1105 = vst.msk [vmem:[#allocation2 + $0x20] sm:$0xff] %vm1100, %v1072
          %1106 = vst.msk [vmem:[#allocation2 + $0x28] sm:$0xff] %vm1100, %v1073
          %1107 = vst.msk [vmem:[#allocation2 + $0x30] sm:$0xff] %vm1100, %v1074
          %1108 = vst.msk [vmem:[#allocation2 + $0x38] sm:$0xff] %vm1100, %v1075
          %1109 = vst.msk [vmem:[#allocation2 + $0x40] sm:$0xff] %vm1100, %v1076
          %1110 = vst.msk [vmem:[#allocation2 + $0x48] sm:$0xff] %vm1100, %v1077
          %1111 = vst.msk [vmem:[#allocation2 + $0x50] sm:$0xff] %vm1100, %v1078
          %1112 = vst.msk [vmem:[#allocation2 + $0x58] sm:$0xff] %vm1100, %v1079
          %1113 = vst.msk [vmem:[#allocation2 + $0x60] sm:$0xff] %vm1100, %v1080
          %1114 = vst.msk [vmem:[#allocation2 + $0x68] sm:$0xff] %vm1100, %v1081
          %1115 = vst.msk [vmem:[#allocation2 + $0x70] sm:$0xff] %vm1100, %v1082
          %1116 = vst.msk [vmem:[#allocation2 + $0x78] sm:$0xff] %vm1100, %v1083
          %1117 = vst.msk [vmem:[#allocation2 + $0x80] sm:$0xff] %vm1100, %v1084
          %1118 = vst.msk [vmem:[#allocation2 + $0x88] sm:$0xff] %vm1100, %v1085
          %1119 = vst.msk [vmem:[#allocation2 + $0x90] sm:$0xff] %vm1100, %v1086
          %1120 = vst.msk [vmem:[#allocation2 + $0x98] sm:$0xff] %vm1100, %v1087
          %1121 = vst.msk [vmem:[#allocation2 + $0xa0] sm:$0xff] %vm1100, %v1088
          %1122 = vst.msk [vmem:[#allocation2 + $0xa8] sm:$0xff] %vm1100, %v1089
          %1123 = vst.msk [vmem:[#allocation2 + $0xb0] sm:$0xff] %vm1100, %v1090
          %1124 = vst.msk [vmem:[#allocation2 + $0xb8] sm:$0xff] %vm1100, %v1091
          %1125 = vst.msk [vmem:[#allocation2 + $0xc0] sm:$0xff] %vm1100, %v1092
          %1126 = vst.msk [vmem:[#allocation2 + $0xc8] sm:$0xff] %vm1100, %v1093
          %1127 = vst.msk [vmem:[#allocation2 + $0xd0] sm:$0xff] %vm1100, %v1094
          %1128 = vst.msk [vmem:[#allocation2 + $0xd8] sm:$0xff] %vm1100, %v1095
          %1129 = vst.msk [vmem:[#allocation2 + $0xe0] sm:$0xff] %vm1100, %v1096
          %1130 = vst.msk [vmem:[#allocation2 + $0xe8] sm:$0xff] %vm1100, %v1097
          %1131 = vst.msk [vmem:[#allocation2 + $0xf0] sm:$0xff] %vm1100, %v1098
          %1132 = vst.msk [vmem:[#allocation2 + $0xf8] sm:$0xff] %vm1100, %v1099
          %1149 = vrot.lane.b32.xlu0 %v846, 96
          %v1150 = vpop.permute.xlu0 %1149
          %1151 = vrot.lane.b32.xlu0 %v849, 96
          %v1152 = vpop.permute.xlu0 %1151
          %1153 = vrot.lane.b32.xlu0 %v854, 96
          %v1154 = vpop.permute.xlu0 %1153
          %1155 = vrot.lane.b32.xlu0 %v857, 96
          %v1156 = vpop.permute.xlu0 %1155
          %1157 = vrot.lane.b32.xlu0 %v862, 96
          %v1158 = vpop.permute.xlu0 %1157
          %1159 = vrot.lane.b32.xlu0 %v865, 96
          %v1160 = vpop.permute.xlu0 %1159
          %1161 = vrot.lane.b32.xlu0 %v870, 96
          %v1162 = vpop.permute.xlu0 %1161
          %1163 = vrot.lane.b32.xlu0 %v873, 96
          %v1164 = vpop.permute.xlu0 %1163
          %1165 = vrot.lane.b32.xlu0 %v878, 96
          %v1166 = vpop.permute.xlu0 %1165
          %1167 = vrot.lane.b32.xlu0 %v881, 96
          %v1168 = vpop.permute.xlu0 %1167
          %1169 = vrot.lane.b32.xlu0 %v886, 96
          %v1170 = vpop.permute.xlu0 %1169
          %1171 = vrot.lane.b32.xlu0 %v889, 96
          %v1172 = vpop.permute.xlu0 %1171
          %1173 = vrot.lane.b32.xlu0 %v894, 96
          %v1174 = vpop.permute.xlu0 %1173
          %1175 = vrot.lane.b32.xlu0 %v897, 96
          %v1176 = vpop.permute.xlu0 %1175
          %1177 = vrot.lane.b32.xlu0 %v902, 96
          %v1178 = vpop.permute.xlu0 %1177
          %1179 = vrot.lane.b32.xlu0 %v905, 96
          %v1180 = vpop.permute.xlu0 %1179
          %1197 = vrot.lane.b32.xlu0 %v846, 64
          %v1198 = vpop.permute.xlu0 %1197
          %1199 = vrot.lane.b32.xlu0 %v849, 64
          %v1200 = vpop.permute.xlu0 %1199
          %1201 = vrot.lane.b32.xlu0 %v854, 64
          %v1202 = vpop.permute.xlu0 %1201
          %1203 = vrot.lane.b32.xlu0 %v857, 64
          %v1204 = vpop.permute.xlu0 %1203
          %1205 = vrot.lane.b32.xlu0 %v862, 64
          %v1206 = vpop.permute.xlu0 %1205
          %1207 = vrot.lane.b32.xlu0 %v865, 64
          %v1208 = vpop.permute.xlu0 %1207
          %1209 = vrot.lane.b32.xlu0 %v870, 64
          %v1210 = vpop.permute.xlu0 %1209
          %1211 = vrot.lane.b32.xlu0 %v873, 64
          %v1212 = vpop.permute.xlu0 %1211
          %1213 = vrot.lane.b32.xlu0 %v878, 64
          %v1214 = vpop.permute.xlu0 %1213
          %1215 = vrot.lane.b32.xlu0 %v881, 64
          %v1216 = vpop.permute.xlu0 %1215
          %1217 = vrot.lane.b32.xlu0 %v886, 64
          %v1218 = vpop.permute.xlu0 %1217
          %1219 = vrot.lane.b32.xlu0 %v889, 64
          %v1220 = vpop.permute.xlu0 %1219
          %1221 = vrot.lane.b32.xlu0 %v894, 64
          %v1222 = vpop.permute.xlu0 %1221
          %1223 = vrot.lane.b32.xlu0 %v897, 64
          %v1224 = vpop.permute.xlu0 %1223
          %1225 = vrot.lane.b32.xlu0 %v902, 64
          %v1226 = vpop.permute.xlu0 %1225
          %1227 = vrot.lane.b32.xlu0 %v905, 64
          %v1228 = vpop.permute.xlu0 %1227
          %1245 = vrot.lane.b32.xlu0 %v846, 32
          %v1246 = vpop.permute.xlu0 %1245
          %1247 = vrot.lane.b32.xlu0 %v849, 32
          %v1248 = vpop.permute.xlu0 %1247
          %1249 = vrot.lane.b32.xlu0 %v854, 32
          %v1250 = vpop.permute.xlu0 %1249
          %1251 = vrot.lane.b32.xlu0 %v857, 32
          %v1252 = vpop.permute.xlu0 %1251
          %1253 = vrot.lane.b32.xlu0 %v862, 32
          %v1254 = vpop.permute.xlu0 %1253
          %1255 = vrot.lane.b32.xlu0 %v865, 32
          %v1256 = vpop.permute.xlu0 %1255
          %1257 = vrot.lane.b32.xlu0 %v870, 32
          %v1258 = vpop.permute.xlu0 %1257
          %1259 = vrot.lane.b32.xlu0 %v873, 32
          %v1260 = vpop.permute.xlu0 %1259
          %1261 = vrot.lane.b32.xlu0 %v878, 32
          %v1262 = vpop.permute.xlu0 %1261
          %1263 = vrot.lane.b32.xlu0 %v881, 32
          %v1264 = vpop.permute.xlu0 %1263
          %1265 = vrot.lane.b32.xlu0 %v886, 32
          %v1266 = vpop.permute.xlu0 %1265
          %1267 = vrot.lane.b32.xlu0 %v889, 32
          %v1268 = vpop.permute.xlu0 %1267
          %1269 = vrot.lane.b32.xlu0 %v894, 32
          %v1270 = vpop.permute.xlu0 %1269
          %1271 = vrot.lane.b32.xlu0 %v897, 32
          %v1272 = vpop.permute.xlu0 %1271
          %1273 = vrot.lane.b32.xlu0 %v902, 32
          %v1274 = vpop.permute.xlu0 %1273
          %1275 = vrot.lane.b32.xlu0 %v905, 32
          %v1276 = vpop.permute.xlu0 %1275
          %v1293 = vpack.c.bf16 %v849, %v846
          %v1294 = vpack.c.bf16 %v857, %v854
          %v1295 = vpack.c.bf16 %v865, %v862
          %v1296 = vpack.c.bf16 %v873, %v870
          %v1297 = vpack.c.bf16 %v881, %v878
          %v1298 = vpack.c.bf16 %v889, %v886
          %v1299 = vpack.c.bf16 %v897, %v894
          %v1300 = vpack.c.bf16 %v905, %v902
          %v1301 = vpack.c.bf16 %v1152, %v1150
          %v1302 = vpack.c.bf16 %v1156, %v1154
          %v1303 = vpack.c.bf16 %v1160, %v1158
          %v1304 = vpack.c.bf16 %v1164, %v1162
          %v1305 = vpack.c.bf16 %v1168, %v1166
          %v1306 = vpack.c.bf16 %v1172, %v1170
          %v1307 = vpack.c.bf16 %v1176, %v1174
          %v1308 = vpack.c.bf16 %v1180, %v1178
          %v1309 = vpack.c.bf16 %v1200, %v1198
          %v1310 = vpack.c.bf16 %v1204, %v1202
          %v1311 = vpack.c.bf16 %v1208, %v1206
          %v1312 = vpack.c.bf16 %v1212, %v1210
          %v1313 = vpack.c.bf16 %v1216, %v1214
          %v1314 = vpack.c.bf16 %v1220, %v1218
          %v1315 = vpack.c.bf16 %v1224, %v1222
          %v1316 = vpack.c.bf16 %v1228, %v1226
          %v1317 = vpack.c.bf16 %v1248, %v1246
          %v1318 = vpack.c.bf16 %v1252, %v1250
          %v1319 = vpack.c.bf16 %v1256, %v1254
          %v1320 = vpack.c.bf16 %v1260, %v1258
          %v1321 = vpack.c.bf16 %v1264, %v1262
          %v1322 = vpack.c.bf16 %v1268, %v1266
          %v1323 = vpack.c.bf16 %v1272, %v1270
          %v1324 = vpack.c.bf16 %v1276, %v1274
          %1325 = vst.msk [vmem:[#allocation3] sm:$0xff] %vm1100, %v1293
          %1326 = vst.msk [vmem:[#allocation3 + $0x8] sm:$0xff] %vm1100, %v1294
          %1327 = vst.msk [vmem:[#allocation3 + $0x10] sm:$0xff] %vm1100, %v1295
          %1328 = vst.msk [vmem:[#allocation3 + $0x18] sm:$0xff] %vm1100, %v1296
          %1329 = vst.msk [vmem:[#allocation3 + $0x20] sm:$0xff] %vm1100, %v1297
          %1330 = vst.msk [vmem:[#allocation3 + $0x28] sm:$0xff] %vm1100, %v1298
          %1331 = vst.msk [vmem:[#allocation3 + $0x30] sm:$0xff] %vm1100, %v1299
          %1332 = vst.msk [vmem:[#allocation3 + $0x38] sm:$0xff] %vm1100, %v1300
          %1333 = vst.msk [vmem:[#allocation3 + $0x40] sm:$0xff] %vm1100, %v1301
          %1334 = vst.msk [vmem:[#allocation3 + $0x48] sm:$0xff] %vm1100, %v1302
          %1335 = vst.msk [vmem:[#allocation3 + $0x50] sm:$0xff] %vm1100, %v1303
          %1336 = vst.msk [vmem:[#allocation3 + $0x58] sm:$0xff] %vm1100, %v1304
          %1337 = vst.msk [vmem:[#allocation3 + $0x60] sm:$0xff] %vm1100, %v1305
          %1338 = vst.msk [vmem:[#allocation3 + $0x68] sm:$0xff] %vm1100, %v1306
          %1339 = vst.msk [vmem:[#allocation3 + $0x70] sm:$0xff] %vm1100, %v1307
          %1340 = vst.msk [vmem:[#allocation3 + $0x78] sm:$0xff] %vm1100, %v1308
          %1341 = vst.msk [vmem:[#allocation3 + $0x80] sm:$0xff] %vm1100, %v1309
          %1342 = vst.msk [vmem:[#allocation3 + $0x88] sm:$0xff] %vm1100, %v1310
          %1343 = vst.msk [vmem:[#allocation3 + $0x90] sm:$0xff] %vm1100, %v1311
          %1344 = vst.msk [vmem:[#allocation3 + $0x98] sm:$0xff] %vm1100, %v1312
          %1345 = vst.msk [vmem:[#allocation3 + $0xa0] sm:$0xff] %vm1100, %v1313
          %1346 = vst.msk [vmem:[#allocation3 + $0xa8] sm:$0xff] %vm1100, %v1314
          %1347 = vst.msk [vmem:[#allocation3 + $0xb0] sm:$0xff] %vm1100, %v1315
          %1348 = vst.msk [vmem:[#allocation3 + $0xb8] sm:$0xff] %vm1100, %v1316
          %1349 = vst.msk [vmem:[#allocation3 + $0xc0] sm:$0xff] %vm1100, %v1317
          %1350 = vst.msk [vmem:[#allocation3 + $0xc8] sm:$0xff] %vm1100, %v1318
          %1351 = vst.msk [vmem:[#allocation3 + $0xd0] sm:$0xff] %vm1100, %v1319
          %1352 = vst.msk [vmem:[#allocation3 + $0xd8] sm:$0xff] %vm1100, %v1320
          %1353 = vst.msk [vmem:[#allocation3 + $0xe0] sm:$0xff] %vm1100, %v1321
          %1354 = vst.msk [vmem:[#allocation3 + $0xe8] sm:$0xff] %vm1100, %v1322
          %1355 = vst.msk [vmem:[#allocation3 + $0xf0] sm:$0xff] %vm1100, %v1323
          %1356 = vst.msk [vmem:[#allocation3 + $0xf8] sm:$0xff] %vm1100, %v1324
        $region72: #{multi_head_attention.1} parent=67 // pred_fallthru
          _
        %v1357 = vld [vmem:[%s496] sm:$0xff]
        %v1358 = vld [vmem:[%s496 + $0x8] sm:$0xff]
        %v1359 = vld [vmem:[%s496 + $0x10] sm:$0xff]
        %v1360 = vld [vmem:[%s496 + $0x18] sm:$0xff]
        %v1361 = vld [vmem:[%s496 + $0x20] sm:$0xff]
        %v1362 = vld [vmem:[%s496 + $0x28] sm:$0xff]
        %v1363 = vld [vmem:[%s496 + $0x30] sm:$0xff]
        %v1364 = vld [vmem:[%s496 + $0x38] sm:$0xff]
        %v1365 = vld [vmem:[%s496 + $0x40] sm:$0xff]
        %v1366 = vld [vmem:[%s496 + $0x48] sm:$0xff]
        %v1367 = vld [vmem:[%s496 + $0x50] sm:$0xff]
        %v1368 = vld [vmem:[%s496 + $0x58] sm:$0xff]
        %v1369 = vld [vmem:[%s496 + $0x60] sm:$0xff]
        %v1370 = vld [vmem:[%s496 + $0x68] sm:$0xff]
        %v1371 = vld [vmem:[%s496 + $0x70] sm:$0xff]
        %v1372 = vld [vmem:[%s496 + $0x78] sm:$0xff]
        %v1373 = vpack.c.bf16 %v1358, %v1357
        %v1374 = vpack.c.bf16 %v1360, %v1359
        %v1375 = vpack.c.bf16 %v1362, %v1361
        %v1376 = vpack.c.bf16 %v1364, %v1363
        %v1377 = vpack.c.bf16 %v1366, %v1365
        %v1378 = vpack.c.bf16 %v1368, %v1367
        %v1379 = vpack.c.bf16 %v1370, %v1369
        %v1380 = vpack.c.bf16 %v1372, %v1371
        %v1381 = vld [vmem:[%s4] sm:$0xf]
        %v1382 = vld [vmem:[%s4 + $0x4] sm:$0xf]
        %v1383 = vld [vmem:[%s4 + $0x8] sm:$0xf]
        %v1384 = vld [vmem:[%s4 + $0xc] sm:$0xf]
        %v1385 = vld [vmem:[%s4 + $0x10] sm:$0xf]
        %v1386 = vld [vmem:[%s4 + $0x14] sm:$0xf]
        %v1387 = vld [vmem:[%s4 + $0x18] sm:$0xf]
        %v1388 = vld [vmem:[%s4 + $0x1c] sm:$0xf]
        %v1389 = vld [vmem:[%s4 + $0x20] sm:$0xf]
        %v1390 = vld [vmem:[%s4 + $0x24] sm:$0xf]
        %v1391 = vld [vmem:[%s4 + $0x28] sm:$0xf]
        %v1392 = vld [vmem:[%s4 + $0x2c] sm:$0xf]
        %v1393 = vld [vmem:[%s4 + $0x30] sm:$0xf]
        %v1394 = vld [vmem:[%s4 + $0x34] sm:$0xf]
        %v1395 = vld [vmem:[%s4 + $0x38] sm:$0xf]
        %v1396 = vld [vmem:[%s4 + $0x3c] sm:$0xf]
        %v1397 = vld [vmem:[%s5] sm:$0x1]
        %v1399 = vlaneseq
        %v1400 = vshrl.u32 %v1399, 7
        %v1401 = vsub.s32 0, %v1400
        %v1402 = vrot.slane %v1397, %v1401
        %v1420 = vunpack.c.l.b16 %v1381
        %v1421 = vunpack.c.l.b16 %v1382
        %v1422 = vunpack.c.l.b16 %v1383
        %v1423 = vunpack.c.l.b16 %v1384
        %v1424 = vunpack.c.l.b16 %v1385
        %v1425 = vunpack.c.l.b16 %v1386
        %v1426 = vunpack.c.l.b16 %v1387
        %v1427 = vunpack.c.l.b16 %v1388
        %v1428 = vunpack.c.l.b16 %v1389
        %v1429 = vunpack.c.l.b16 %v1390
        %v1430 = vunpack.c.l.b16 %v1391
        %v1431 = vunpack.c.l.b16 %v1392
        %v1432 = vunpack.c.l.b16 %v1393
        %v1433 = vunpack.c.l.b16 %v1394
        %v1434 = vunpack.c.l.b16 %v1395
        %v1435 = vunpack.c.l.b16 %v1396
        %v1436 = vpack.c.b16 %v1421, %v1420
        %v1437 = vpack.c.b16 %v1423, %v1422
        %v1438 = vpack.c.b16 %v1425, %v1424
        %v1439 = vpack.c.b16 %v1427, %v1426
        %v1440 = vpack.c.b16 %v1429, %v1428
        %v1441 = vpack.c.b16 %v1431, %v1430
        %v1442 = vpack.c.b16 %v1433, %v1432
        %v1443 = vpack.c.b16 %v1435, %v1434
        %1452 = vmatprep.subr.bf16.mxu0 0
        %1453 = vmatpush1.bf16.msra.mxu0 %v1436
        %1454 = vmatprep.subr.bf16.mxu0 0
        %1455 = vmatpush1.bf16.msra.mxu0 %v1437
        %1456 = vmatprep.subr.bf16.mxu0 0
        %1457 = vmatpush1.bf16.msra.mxu0 %v1438
        %1458 = vmatprep.subr.bf16.mxu0 0
        %1459 = vmatpush1.bf16.msra.mxu0 %v1439
        %1460 = vmatprep.subr.bf16.mxu0 0
        %1461 = vmatpush1.bf16.msra.mxu0 %v1440
        %1462 = vmatprep.subr.bf16.mxu0 0
        %1463 = vmatpush1.bf16.msra.mxu0 %v1441
        %1464 = vmatprep.subr.bf16.mxu0 0
        %1465 = vmatpush1.bf16.msra.mxu0 %v1442
        %1466 = vmatprep.subr.bf16.mxu0 0
        %1467 = vmatpush1.bf16.msra.mxu0 %v1443
        %1468 = vmatprep.subr.bf16.mxu0 0
        %1469 = vmatpush1.bf16.msra.mxu0 0
        %1470 = vmatprep.subr.bf16.mxu0 0
        %1471 = vmatpush1.bf16.msra.mxu0 0
        %1472 = vmatprep.subr.bf16.mxu0 0
        %1473 = vmatpush1.bf16.msra.mxu0 0
        %1474 = vmatprep.subr.bf16.mxu0 0
        %1475 = vmatpush1.bf16.msra.mxu0 0
        %1476 = vmatprep.subr.bf16.mxu0 0
        %1477 = vmatpush1.bf16.msra.mxu0 0
        %1478 = vmatprep.subr.bf16.mxu0 0
        %1479 = vmatpush1.bf16.msra.mxu0 0
        %1480 = vmatprep.subr.bf16.mxu0 0
        %1481 = vmatpush1.bf16.msra.mxu0 0
        %1482 = vmatprep.subr.bf16.mxu0 0
        %1483 = vmatpush1.bf16.msra.mxu0 0
        %1484 = vmatprep.mubr.bf16.mxu0 0
        %1485 = vmatmul.mubr.bf16.gmra.mrb[0].mxu0 %v1373
        %v1486 = vpop.f32.mrb[0].mxu0
        %v1487 = vadd.f32 %v1402, %v1486
        %v1488 = vpop.f32.mrb[0].mxu0
        %v1489 = vpop.f32.mrb[0].mxu0
        %v1490 = vadd.f32 %v1402, %v1489
        %v1491 = vpop.f32.mrb[0].mxu0
        %1492 = vmatprep.mubr.bf16.mxu0 0
        %1493 = vmatmul.mubr.bf16.gmra.mrb[0].mxu0 %v1374
        %v1494 = vpop.f32.mrb[0].mxu0
        %v1495 = vadd.f32 %v1402, %v1494
        %v1496 = vpop.f32.mrb[0].mxu0
        %v1497 = vpop.f32.mrb[0].mxu0
        %v1498 = vadd.f32 %v1402, %v1497
        %v1499 = vpop.f32.mrb[0].mxu0
        %1500 = vmatprep.mubr.bf16.mxu0 0
        %1501 = vmatmul.mubr.bf16.gmra.mrb[0].mxu0 %v1375
        %v1502 = vpop.f32.mrb[0].mxu0
        %v1503 = vadd.f32 %v1402, %v1502
        %v1504 = vpop.f32.mrb[0].mxu0
        %v1505 = vpop.f32.mrb[0].mxu0
        %v1506 = vadd.f32 %v1402, %v1505
        %v1507 = vpop.f32.mrb[0].mxu0
        %1508 = vmatprep.mubr.bf16.mxu0 0
        %1509 = vmatmul.mubr.bf16.gmra.mrb[0].mxu0 %v1376
        %v1510 = vpop.f32.mrb[0].mxu0
        %v1511 = vadd.f32 %v1402, %v1510
        %v1512 = vpop.f32.mrb[0].mxu0
        %v1513 = vpop.f32.mrb[0].mxu0
        %v1514 = vadd.f32 %v1402, %v1513
        %v1515 = vpop.f32.mrb[0].mxu0
        %1516 = vmatprep.mubr.bf16.mxu0 0
        %1517 = vmatmul.mubr.bf16.gmra.mrb[0].mxu0 %v1377
        %v1518 = vpop.f32.mrb[0].mxu0
        %v1519 = vadd.f32 %v1402, %v1518
        %v1520 = vpop.f32.mrb[0].mxu0
        %v1521 = vpop.f32.mrb[0].mxu0
        %v1522 = vadd.f32 %v1402, %v1521
        %v1523 = vpop.f32.mrb[0].mxu0
        %1524 = vmatprep.mubr.bf16.mxu0 0
        %1525 = vmatmul.mubr.bf16.gmra.mrb[0].mxu0 %v1378
        %v1526 = vpop.f32.mrb[0].mxu0
        %v1527 = vadd.f32 %v1402, %v1526
        %v1528 = vpop.f32.mrb[0].mxu0
        %v1529 = vpop.f32.mrb[0].mxu0
        %v1530 = vadd.f32 %v1402, %v1529
        %v1531 = vpop.f32.mrb[0].mxu0
        %1532 = vmatprep.mubr.bf16.mxu0 0
        %1533 = vmatmul.mubr.bf16.gmra.mrb[0].mxu0 %v1379
        %v1534 = vpop.f32.mrb[0].mxu0
        %v1535 = vadd.f32 %v1402, %v1534
        %v1536 = vpop.f32.mrb[0].mxu0
        %v1537 = vpop.f32.mrb[0].mxu0
        %v1538 = vadd.f32 %v1402, %v1537
        %v1539 = vpop.f32.mrb[0].mxu0
        %1540 = vmatprep.mubr.bf16.mxu0 0
        %1541 = vmatmul.mubr.bf16.gmra.mrb[0].mxu0 %v1380
        %v1542 = vpop.f32.mrb[0].mxu0
        %v1543 = vadd.f32 %v1402, %v1542
        %v1544 = vpop.f32.mrb[0].mxu0
        %v1545 = vpop.f32.mrb[0].mxu0
        %v1546 = vadd.f32 %v1402, %v1545
        %v1547 = vpop.f32.mrb[0].mxu0
        %1548 = vdwg.mxu0
        %v1549 = vld [vmem:[%s516] sm:$0xff]
        %v1550 = vld [vmem:[%s516 + $0x8] sm:$0xff]
        %v1551 = vld [vmem:[%s516 + $0x10] sm:$0xff]
        %v1552 = vld [vmem:[%s516 + $0x18] sm:$0xff]
        %v1553 = vld [vmem:[%s516 + $0x20] sm:$0xff]
        %v1554 = vld [vmem:[%s516 + $0x28] sm:$0xff]
        %v1555 = vld [vmem:[%s516 + $0x30] sm:$0xff]
        %v1556 = vld [vmem:[%s516 + $0x38] sm:$0xff]
        %v1557 = vld [vmem:[%s516 + $0x40] sm:$0xff]
        %v1558 = vld [vmem:[%s516 + $0x48] sm:$0xff]
        %v1559 = vld [vmem:[%s516 + $0x50] sm:$0xff]
        %v1560 = vld [vmem:[%s516 + $0x58] sm:$0xff]
        %v1561 = vld [vmem:[%s516 + $0x60] sm:$0xff]
        %v1562 = vld [vmem:[%s516 + $0x68] sm:$0xff]
        %v1563 = vld [vmem:[%s516 + $0x70] sm:$0xff]
        %v1564 = vld [vmem:[%s516 + $0x78] sm:$0xff]
        %v1565 = vmul.f32 %v1549, -1e+09
        %v1566 = vmul.f32 %v1550, -1e+09
        %v1567 = vmul.f32 %v1551, -1e+09
        %v1568 = vmul.f32 %v1552, -1e+09
        %v1569 = vmul.f32 %v1553, -1e+09
        %v1570 = vmul.f32 %v1554, -1e+09
        %v1571 = vmul.f32 %v1555, -1e+09
        %v1572 = vmul.f32 %v1556, -1e+09
        %v1573 = vmul.f32 %v1557, -1e+09
        %v1574 = vmul.f32 %v1558, -1e+09
        %v1575 = vmul.f32 %v1559, -1e+09
        %v1576 = vmul.f32 %v1560, -1e+09
        %v1577 = vmul.f32 %v1561, -1e+09
        %v1578 = vmul.f32 %v1562, -1e+09
        %v1579 = vmul.f32 %v1563, -1e+09
        %v1580 = vmul.f32 %v1564, -1e+09
        %v1581 = vld [vmem:[#allocation2] sm:$0xff]
        %v1582 = vld [vmem:[#allocation2 + $0x8] sm:$0xff]
        %v1583 = vld [vmem:[#allocation2 + $0x10] sm:$0xff]
        %v1584 = vld [vmem:[#allocation2 + $0x18] sm:$0xff]
        %v1585 = vld [vmem:[#allocation2 + $0x20] sm:$0xff]
        %v1586 = vld [vmem:[#allocation2 + $0x28] sm:$0xff]
        %v1587 = vld [vmem:[#allocation2 + $0x30] sm:$0xff]
        %v1588 = vld [vmem:[#allocation2 + $0x38] sm:$0xff]
        %v1589 = vld [vmem:[#allocation2 + $0x40] sm:$0xff]
        %v1590 = vld [vmem:[#allocation2 + $0x48] sm:$0xff]
        %v1591 = vld [vmem:[#allocation2 + $0x50] sm:$0xff]
        %v1592 = vld [vmem:[#allocation2 + $0x58] sm:$0xff]
        %v1593 = vld [vmem:[#allocation2 + $0x60] sm:$0xff]
        %v1594 = vld [vmem:[#allocation2 + $0x68] sm:$0xff]
        %v1595 = vld [vmem:[#allocation2 + $0x70] sm:$0xff]
        %v1596 = vld [vmem:[#allocation2 + $0x78] sm:$0xff]
        %v1597 = vld [vmem:[#allocation2 + $0x80] sm:$0xff]
        %v1598 = vld [vmem:[#allocation2 + $0x88] sm:$0xff]
        %v1599 = vld [vmem:[#allocation2 + $0x90] sm:$0xff]
        %v1600 = vld [vmem:[#allocation2 + $0x98] sm:$0xff]
        %v1601 = vld [vmem:[#allocation2 + $0xa0] sm:$0xff]
        %v1602 = vld [vmem:[#allocation2 + $0xa8] sm:$0xff]
        %v1603 = vld [vmem:[#allocation2 + $0xb0] sm:$0xff]
        %v1604 = vld [vmem:[#allocation2 + $0xb8] sm:$0xff]
        %v1605 = vld [vmem:[#allocation2 + $0xc0] sm:$0xff]
        %v1606 = vld [vmem:[#allocation2 + $0xc8] sm:$0xff]
        %v1607 = vld [vmem:[#allocation2 + $0xd0] sm:$0xff]
        %v1608 = vld [vmem:[#allocation2 + $0xd8] sm:$0xff]
        %v1609 = vld [vmem:[#allocation2 + $0xe0] sm:$0xff]
        %v1610 = vld [vmem:[#allocation2 + $0xe8] sm:$0xff]
        %v1611 = vld [vmem:[#allocation2 + $0xf0] sm:$0xff]
        %v1612 = vld [vmem:[#allocation2 + $0xf8] sm:$0xff]
        %v1613 = vld [vmem:[#allocation3] sm:$0xff]
        %v1614 = vld [vmem:[#allocation3 + $0x8] sm:$0xff]
        %v1615 = vld [vmem:[#allocation3 + $0x10] sm:$0xff]
        %v1616 = vld [vmem:[#allocation3 + $0x18] sm:$0xff]
        %v1617 = vld [vmem:[#allocation3 + $0x20] sm:$0xff]
        %v1618 = vld [vmem:[#allocation3 + $0x28] sm:$0xff]
        %v1619 = vld [vmem:[#allocation3 + $0x30] sm:$0xff]
        %v1620 = vld [vmem:[#allocation3 + $0x38] sm:$0xff]
        %v1621 = vld [vmem:[#allocation3 + $0x40] sm:$0xff]
        %v1622 = vld [vmem:[#allocation3 + $0x48] sm:$0xff]
        %v1623 = vld [vmem:[#allocation3 + $0x50] sm:$0xff]
        %v1624 = vld [vmem:[#allocation3 + $0x58] sm:$0xff]
        %v1625 = vld [vmem:[#allocation3 + $0x60] sm:$0xff]
        %v1626 = vld [vmem:[#allocation3 + $0x68] sm:$0xff]
        %v1627 = vld [vmem:[#allocation3 + $0x70] sm:$0xff]
        %v1628 = vld [vmem:[#allocation3 + $0x78] sm:$0xff]
        %v1629 = vld [vmem:[#allocation3 + $0x80] sm:$0xff]
        %v1630 = vld [vmem:[#allocation3 + $0x88] sm:$0xff]
        %v1631 = vld [vmem:[#allocation3 + $0x90] sm:$0xff]
        %v1632 = vld [vmem:[#allocation3 + $0x98] sm:$0xff]
        %v1633 = vld [vmem:[#allocation3 + $0xa0] sm:$0xff]
        %v1634 = vld [vmem:[#allocation3 + $0xa8] sm:$0xff]
        %v1635 = vld [vmem:[#allocation3 + $0xb0] sm:$0xff]
        %v1636 = vld [vmem:[#allocation3 + $0xb8] sm:$0xff]
        %v1637 = vld [vmem:[#allocation3 + $0xc0] sm:$0xff]
        %v1638 = vld [vmem:[#allocation3 + $0xc8] sm:$0xff]
        %v1639 = vld [vmem:[#allocation3 + $0xd0] sm:$0xff]
        %v1640 = vld [vmem:[#allocation3 + $0xd8] sm:$0xff]
        %v1641 = vld [vmem:[#allocation3 + $0xe0] sm:$0xff]
        %v1642 = vld [vmem:[#allocation3 + $0xe8] sm:$0xff]
        %v1643 = vld [vmem:[#allocation3 + $0xf0] sm:$0xff]
        %v1644 = vld [vmem:[#allocation3 + $0xf8] sm:$0xff]
        %1661 = vrot.lane.b32.xlu0 %v1487, 96
        %v1662 = vpop.permute.xlu0 %1661
        %1663 = vrot.lane.b32.xlu0 %v1490, 96
        %v1664 = vpop.permute.xlu0 %1663
        %1665 = vrot.lane.b32.xlu0 %v1495, 96
        %v1666 = vpop.permute.xlu0 %1665
        %1667 = vrot.lane.b32.xlu0 %v1498, 96
        %v1668 = vpop.permute.xlu0 %1667
        %1669 = vrot.lane.b32.xlu0 %v1503, 96
        %v1670 = vpop.permute.xlu0 %1669
        %1671 = vrot.lane.b32.xlu0 %v1506, 96
        %v1672 = vpop.permute.xlu0 %1671
        %1673 = vrot.lane.b32.xlu0 %v1511, 96
        %v1674 = vpop.permute.xlu0 %1673
        %1675 = vrot.lane.b32.xlu0 %v1514, 96
        %v1676 = vpop.permute.xlu0 %1675
        %1677 = vrot.lane.b32.xlu0 %v1519, 96
        %v1678 = vpop.permute.xlu0 %1677
        %1679 = vrot.lane.b32.xlu0 %v1522, 96
        %v1680 = vpop.permute.xlu0 %1679
        %1681 = vrot.lane.b32.xlu0 %v1527, 96
        %v1682 = vpop.permute.xlu0 %1681
        %1683 = vrot.lane.b32.xlu0 %v1530, 96
        %v1684 = vpop.permute.xlu0 %1683
        %1685 = vrot.lane.b32.xlu0 %v1535, 96
        %v1686 = vpop.permute.xlu0 %1685
        %1687 = vrot.lane.b32.xlu0 %v1538, 96
        %v1688 = vpop.permute.xlu0 %1687
        %1689 = vrot.lane.b32.xlu0 %v1543, 96
        %v1690 = vpop.permute.xlu0 %1689
        %1691 = vrot.lane.b32.xlu0 %v1546, 96
        %v1692 = vpop.permute.xlu0 %1691
        %1709 = vrot.lane.b32.xlu0 %v1487, 64
        %v1710 = vpop.permute.xlu0 %1709
        %1711 = vrot.lane.b32.xlu0 %v1490, 64
        %v1712 = vpop.permute.xlu0 %1711
        %1713 = vrot.lane.b32.xlu0 %v1495, 64
        %v1714 = vpop.permute.xlu0 %1713
        %1715 = vrot.lane.b32.xlu0 %v1498, 64
        %v1716 = vpop.permute.xlu0 %1715
        %1717 = vrot.lane.b32.xlu0 %v1503, 64
        %v1718 = vpop.permute.xlu0 %1717
        %1719 = vrot.lane.b32.xlu0 %v1506, 64
        %v1720 = vpop.permute.xlu0 %1719
        %1721 = vrot.lane.b32.xlu0 %v1511, 64
        %v1722 = vpop.permute.xlu0 %1721
        %1723 = vrot.lane.b32.xlu0 %v1514, 64
        %v1724 = vpop.permute.xlu0 %1723
        %1725 = vrot.lane.b32.xlu0 %v1519, 64
        %v1726 = vpop.permute.xlu0 %1725
        %1727 = vrot.lane.b32.xlu0 %v1522, 64
        %v1728 = vpop.permute.xlu0 %1727
        %1729 = vrot.lane.b32.xlu0 %v1527, 64
        %v1730 = vpop.permute.xlu0 %1729
        %1731 = vrot.lane.b32.xlu0 %v1530, 64
        %v1732 = vpop.permute.xlu0 %1731
        %1733 = vrot.lane.b32.xlu0 %v1535, 64
        %v1734 = vpop.permute.xlu0 %1733
        %1735 = vrot.lane.b32.xlu0 %v1538, 64
        %v1736 = vpop.permute.xlu0 %1735
        %1737 = vrot.lane.b32.xlu0 %v1543, 64
        %v1738 = vpop.permute.xlu0 %1737
        %1739 = vrot.lane.b32.xlu0 %v1546, 64
        %v1740 = vpop.permute.xlu0 %1739
        %1757 = vrot.lane.b32.xlu0 %v1487, 32
        %v1758 = vpop.permute.xlu0 %1757
        %1759 = vrot.lane.b32.xlu0 %v1490, 32
        %v1760 = vpop.permute.xlu0 %1759
        %1761 = vrot.lane.b32.xlu0 %v1495, 32
        %v1762 = vpop.permute.xlu0 %1761
        %1763 = vrot.lane.b32.xlu0 %v1498, 32
        %v1764 = vpop.permute.xlu0 %1763
        %1765 = vrot.lane.b32.xlu0 %v1503, 32
        %v1766 = vpop.permute.xlu0 %1765
        %1767 = vrot.lane.b32.xlu0 %v1506, 32
        %v1768 = vpop.permute.xlu0 %1767
        %1769 = vrot.lane.b32.xlu0 %v1511, 32
        %v1770 = vpop.permute.xlu0 %1769
        %1771 = vrot.lane.b32.xlu0 %v1514, 32
        %v1772 = vpop.permute.xlu0 %1771
        %1773 = vrot.lane.b32.xlu0 %v1519, 32
        %v1774 = vpop.permute.xlu0 %1773
        %1775 = vrot.lane.b32.xlu0 %v1522, 32
        %v1776 = vpop.permute.xlu0 %1775
        %1777 = vrot.lane.b32.xlu0 %v1527, 32
        %v1778 = vpop.permute.xlu0 %1777
        %1779 = vrot.lane.b32.xlu0 %v1530, 32
        %v1780 = vpop.permute.xlu0 %1779
        %1781 = vrot.lane.b32.xlu0 %v1535, 32
        %v1782 = vpop.permute.xlu0 %1781
        %1783 = vrot.lane.b32.xlu0 %v1538, 32
        %v1784 = vpop.permute.xlu0 %1783
        %1785 = vrot.lane.b32.xlu0 %v1543, 32
        %v1786 = vpop.permute.xlu0 %1785
        %1787 = vrot.lane.b32.xlu0 %v1546, 32
        %v1788 = vpop.permute.xlu0 %1787
        %v1805 = vpack.c.bf16 %v1490, %v1487
        %v1806 = vpack.c.bf16 %v1498, %v1495
        %v1807 = vpack.c.bf16 %v1506, %v1503
        %v1808 = vpack.c.bf16 %v1514, %v1511
        %v1809 = vpack.c.bf16 %v1522, %v1519
        %v1810 = vpack.c.bf16 %v1530, %v1527
        %v1811 = vpack.c.bf16 %v1538, %v1535
        %v1812 = vpack.c.bf16 %v1546, %v1543
        %v1813 = vpack.c.bf16 %v1664, %v1662
        %v1814 = vpack.c.bf16 %v1668, %v1666
        %v1815 = vpack.c.bf16 %v1672, %v1670
        %v1816 = vpack.c.bf16 %v1676, %v1674
        %v1817 = vpack.c.bf16 %v1680, %v1678
        %v1818 = vpack.c.bf16 %v1684, %v1682
        %v1819 = vpack.c.bf16 %v1688, %v1686
        %v1820 = vpack.c.bf16 %v1692, %v1690
        %v1821 = vpack.c.bf16 %v1712, %v1710
        %v1822 = vpack.c.bf16 %v1716, %v1714
        %v1823 = vpack.c.bf16 %v1720, %v1718
        %v1824 = vpack.c.bf16 %v1724, %v1722
        %v1825 = vpack.c.bf16 %v1728, %v1726
        %v1826 = vpack.c.bf16 %v1732, %v1730
        %v1827 = vpack.c.bf16 %v1736, %v1734
        %v1828 = vpack.c.bf16 %v1740, %v1738
        %v1829 = vpack.c.bf16 %v1760, %v1758
        %v1830 = vpack.c.bf16 %v1764, %v1762
        %v1831 = vpack.c.bf16 %v1768, %v1766
        %v1832 = vpack.c.bf16 %v1772, %v1770
        %v1833 = vpack.c.bf16 %v1776, %v1774
        %v1834 = vpack.c.bf16 %v1780, %v1778
        %v1835 = vpack.c.bf16 %v1784, %v1782
        %v1836 = vpack.c.bf16 %v1788, %v1786
        %vm1837 = vcmask 261120
        %v1839 = vsel %vm1837, %v1805, 0
        %v1842 = vsel %vm1837, %v1806, 0
        %v1845 = vsel %vm1837, %v1807, 0
        %v1848 = vsel %vm1837, %v1808, 0
        %v1851 = vsel %vm1837, %v1809, 0
        %v1854 = vsel %vm1837, %v1810, 0
        %v1857 = vsel %vm1837, %v1811, 0
        %v1860 = vsel %vm1837, %v1812, 0
        %v1863 = vsel %vm1837, %v1581, 0
        %v1866 = vsel %vm1837, %v1582, 0
        %v1869 = vsel %vm1837, %v1583, 0
        %v1872 = vsel %vm1837, %v1584, 0
        %v1875 = vsel %vm1837, %v1585, 0
        %v1878 = vsel %vm1837, %v1586, 0
        %v1881 = vsel %vm1837, %v1587, 0
        %v1884 = vsel %vm1837, %v1588, 0
        %1886 = vmatprep.subr.bf16.mxu0 0
        %1887 = vmatpush1.bf16.xpose.msra.mxu0 %v1863
        %1888 = vmatprep.subr.bf16.mxu0 0
        %1889 = vmatpush1.bf16.xpose.msra.mxu0 %v1866
        %1890 = vmatprep.subr.bf16.mxu0 0
        %1891 = vmatpush1.bf16.xpose.msra.mxu0 %v1869
        %1892 = vmatprep.subr.bf16.mxu0 0
        %1893 = vmatpush1.bf16.xpose.msra.mxu0 %v1872
        %1894 = vmatprep.subr.bf16.mxu0 0
        %1895 = vmatpush1.bf16.xpose.msra.mxu0 %v1875
        %1896 = vmatprep.subr.bf16.mxu0 0
        %1897 = vmatpush1.bf16.xpose.msra.mxu0 %v1878
        %1898 = vmatprep.subr.bf16.mxu0 0
        %1899 = vmatpush1.bf16.xpose.msra.mxu0 %v1881
        %1900 = vmatprep.subr.bf16.mxu0 0
        %1901 = vmatpush1.bf16.xpose.msra.mxu0 %v1884
        %1902 = vmatprep.subr.bf16.mxu0 0
        %1903 = vmatpush1.bf16.xpose.msra.mxu0 0
        %1904 = vmatprep.subr.bf16.mxu0 0
        %1905 = vmatpush1.bf16.xpose.msra.mxu0 0
        %1906 = vmatprep.subr.bf16.mxu0 0
        %1907 = vmatpush1.bf16.xpose.msra.mxu0 0
        %1908 = vmatprep.subr.bf16.mxu0 0
        %1909 = vmatpush1.bf16.xpose.msra.mxu0 0
        %1910 = vmatprep.subr.bf16.mxu0 0
        %1911 = vmatpush1.bf16.xpose.msra.mxu0 0
        %1912 = vmatprep.subr.bf16.mxu0 0
        %1913 = vmatpush1.bf16.xpose.msra.mxu0 0
        %1914 = vmatprep.subr.bf16.mxu0 0
        %1915 = vmatpush1.bf16.xpose.msra.mxu0 0
        %1916 = vmatprep.subr.bf16.mxu0 0
        %1917 = vmatpush1.bf16.xpose.msra.mxu0 0
        %1918 = vmatprep.mubr.bf16.mxu0 0
        %1919 = vmatmul.mubr.bf16.gmra.mrb[0].mxu0 %v1839
        %v1920 = vpop.f32.mrb[0].mxu0
        %v1921 = vadd.f32 %v1565, %v1920
        %v1922 = vpop.f32.mrb[0].mxu0
        %v1923 = vpop.f32.mrb[0].mxu0
        %v1924 = vadd.f32 %v1566, %v1923
        %v1925 = vpop.f32.mrb[0].mxu0
        %1926 = vmatprep.mubr.bf16.mxu0 0
        %1927 = vmatmul.mubr.bf16.gmra.mrb[0].mxu0 %v1842
        %v1928 = vpop.f32.mrb[0].mxu0
        %v1929 = vadd.f32 %v1567, %v1928
        %v1930 = vpop.f32.mrb[0].mxu0
        %v1931 = vpop.f32.mrb[0].mxu0
        %v1932 = vadd.f32 %v1568, %v1931
        %v1933 = vpop.f32.mrb[0].mxu0
        %1934 = vmatprep.mubr.bf16.mxu0 0
        %1935 = vmatmul.mubr.bf16.gmra.mrb[0].mxu0 %v1845
        %v1936 = vpop.f32.mrb[0].mxu0
        %v1937 = vadd.f32 %v1569, %v1936
        %v1938 = vpop.f32.mrb[0].mxu0
        %v1939 = vpop.f32.mrb[0].mxu0
        %v1940 = vadd.f32 %v1570, %v1939
        %v1941 = vpop.f32.mrb[0].mxu0
        %1942 = vmatprep.mubr.bf16.mxu0 0
        %1943 = vmatmul.mubr.bf16.gmra.mrb[0].mxu0 %v1848
        %v1944 = vpop.f32.mrb[0].mxu0
        %v1945 = vadd.f32 %v1571, %v1944
        %v1946 = vpop.f32.mrb[0].mxu0
        %v1947 = vpop.f32.mrb[0].mxu0
        %v1948 = vadd.f32 %v1572, %v1947
        %v1949 = vpop.f32.mrb[0].mxu0
        %1950 = vmatprep.mubr.bf16.mxu0 0
        %1951 = vmatmul.mubr.bf16.gmra.mrb[0].mxu0 %v1851
        %v1952 = vpop.f32.mrb[0].mxu0
        %v1953 = vadd.f32 %v1573, %v1952
        %v1954 = vpop.f32.mrb[0].mxu0
        %v1955 = vpop.f32.mrb[0].mxu0
        %v1956 = vadd.f32 %v1574, %v1955
        %v1957 = vpop.f32.mrb[0].mxu0
        %1958 = vmatprep.mubr.bf16.mxu0 0
        %1959 = vmatmul.mubr.bf16.gmra.mrb[0].mxu0 %v1854
        %v1960 = vpop.f32.mrb[0].mxu0
        %v1961 = vadd.f32 %v1575, %v1960
        %v1962 = vpop.f32.mrb[0].mxu0
        %v1963 = vpop.f32.mrb[0].mxu0
        %v1964 = vadd.f32 %v1576, %v1963
        %v1965 = vpop.f32.mrb[0].mxu0
        %1966 = vmatprep.mubr.bf16.mxu0 0
        %1967 = vmatmul.mubr.bf16.gmra.mrb[0].mxu0 %v1857
        %v1968 = vpop.f32.mrb[0].mxu0
        %v1969 = vadd.f32 %v1577, %v1968
        %v1970 = vpop.f32.mrb[0].mxu0
        %v1971 = vpop.f32.mrb[0].mxu0
        %v1972 = vadd.f32 %v1578, %v1971
        %v1973 = vpop.f32.mrb[0].mxu0
        %1974 = vmatprep.mubr.bf16.mxu0 0
        %1975 = vmatmul.mubr.bf16.gmra.mrb[0].mxu0 %v1860
        %v1976 = vpop.f32.mrb[0].mxu0
        %v1977 = vadd.f32 %v1579, %v1976
        %v1978 = vpop.f32.mrb[0].mxu0
        %v1979 = vpop.f32.mrb[0].mxu0
        %v1980 = vadd.f32 %v1580, %v1979
        %v1981 = vpop.f32.mrb[0].mxu0
        %1982 = vdwg.mxu0
        %v1984 = vsel %vm1837, %v1813, 0
        %v1987 = vsel %vm1837, %v1814, 0
        %v1990 = vsel %vm1837, %v1815, 0
        %v1993 = vsel %vm1837, %v1816, 0
        %v1996 = vsel %vm1837, %v1817, 0
        %v1999 = vsel %vm1837, %v1818, 0
        %v2002 = vsel %vm1837, %v1819, 0
        %v2005 = vsel %vm1837, %v1820, 0
        %v2008 = vsel %vm1837, %v1589, 0
        %v2011 = vsel %vm1837, %v1590, 0
        %v2014 = vsel %vm1837, %v1591, 0
        %v2017 = vsel %vm1837, %v1592, 0
        %v2020 = vsel %vm1837, %v1593, 0
        %v2023 = vsel %vm1837, %v1594, 0
        %v2026 = vsel %vm1837, %v1595, 0
        %v2029 = vsel %vm1837, %v1596, 0
        %2031 = vmatprep.subr.bf16.mxu0 0
        %2032 = vmatpush1.bf16.xpose.msra.mxu0 %v2008
        %2033 = vmatprep.subr.bf16.mxu0 0
        %2034 = vmatpush1.bf16.xpose.msra.mxu0 %v2011
        %2035 = vmatprep.subr.bf16.mxu0 0
        %2036 = vmatpush1.bf16.xpose.msra.mxu0 %v2014
        %2037 = vmatprep.subr.bf16.mxu0 0
        %2038 = vmatpush1.bf16.xpose.msra.mxu0 %v2017
        %2039 = vmatprep.subr.bf16.mxu0 0
        %2040 = vmatpush1.bf16.xpose.msra.mxu0 %v2020
        %2041 = vmatprep.subr.bf16.mxu0 0
        %2042 = vmatpush1.bf16.xpose.msra.mxu0 %v2023
        %2043 = vmatprep.subr.bf16.mxu0 0
        %2044 = vmatpush1.bf16.xpose.msra.mxu0 %v2026
        %2045 = vmatprep.subr.bf16.mxu0 0
        %2046 = vmatpush1.bf16.xpose.msra.mxu0 %v2029
        %2047 = vmatprep.subr.bf16.mxu0 0
        %2048 = vmatpush1.bf16.xpose.msra.mxu0 0
        %2049 = vmatprep.subr.bf16.mxu0 0
        %2050 = vmatpush1.bf16.xpose.msra.mxu0 0
        %2051 = vmatprep.subr.bf16.mxu0 0
        %2052 = vmatpush1.bf16.xpose.msra.mxu0 0
        %2053 = vmatprep.subr.bf16.mxu0 0
        %2054 = vmatpush1.bf16.xpose.msra.mxu0 0
        %2055 = vmatprep.subr.bf16.mxu0 0
        %2056 = vmatpush1.bf16.xpose.msra.mxu0 0
        %2057 = vmatprep.subr.bf16.mxu0 0
        %2058 = vmatpush1.bf16.xpose.msra.mxu0 0
        %2059 = vmatprep.subr.bf16.mxu0 0
        %2060 = vmatpush1.bf16.xpose.msra.mxu0 0
        %2061 = vmatprep.subr.bf16.mxu0 0
        %2062 = vmatpush1.bf16.xpose.msra.mxu0 0
        %2063 = vmatprep.mubr.bf16.mxu0 0
        %2064 = vmatmul.mubr.bf16.gmra.mrb[0].mxu0 %v1984
        %v2065 = vpop.f32.mrb[0].mxu0
        %v2066 = vadd.f32 %v1565, %v2065
        %v2067 = vpop.f32.mrb[0].mxu0
        %v2068 = vpop.f32.mrb[0].mxu0
        %v2069 = vadd.f32 %v1566, %v2068
        %v2070 = vpop.f32.mrb[0].mxu0
        %2071 = vmatprep.mubr.bf16.mxu0 0
        %2072 = vmatmul.mubr.bf16.gmra.mrb[0].mxu0 %v1987
        %v2073 = vpop.f32.mrb[0].mxu0
        %v2074 = vadd.f32 %v1567, %v2073
        %v2075 = vpop.f32.mrb[0].mxu0
        %v2076 = vpop.f32.mrb[0].mxu0
        %v2077 = vadd.f32 %v1568, %v2076
        %v2078 = vpop.f32.mrb[0].mxu0
        %2079 = vmatprep.mubr.bf16.mxu0 0
        %2080 = vmatmul.mubr.bf16.gmra.mrb[0].mxu0 %v1990
        %v2081 = vpop.f32.mrb[0].mxu0
        %v2082 = vadd.f32 %v1569, %v2081
        %v2083 = vpop.f32.mrb[0].mxu0
        %v2084 = vpop.f32.mrb[0].mxu0
        %v2085 = vadd.f32 %v1570, %v2084
        %v2086 = vpop.f32.mrb[0].mxu0
        %2087 = vmatprep.mubr.bf16.mxu0 0
        %2088 = vmatmul.mubr.bf16.gmra.mrb[0].mxu0 %v1993
        %v2089 = vpop.f32.mrb[0].mxu0
        %v2090 = vadd.f32 %v1571, %v2089
        %v2091 = vpop.f32.mrb[0].mxu0
        %v2092 = vpop.f32.mrb[0].mxu0
        %v2093 = vadd.f32 %v1572, %v2092
        %v2094 = vpop.f32.mrb[0].mxu0
        %2095 = vmatprep.mubr.bf16.mxu0 0
        %2096 = vmatmul.mubr.bf16.gmra.mrb[0].mxu0 %v1996
        %v2097 = vpop.f32.mrb[0].mxu0
        %v2098 = vadd.f32 %v1573, %v2097
        %v2099 = vpop.f32.mrb[0].mxu0
        %v2100 = vpop.f32.mrb[0].mxu0
        %v2101 = vadd.f32 %v1574, %v2100
        %v2102 = vpop.f32.mrb[0].mxu0
        %2103 = vmatprep.mubr.bf16.mxu0 0
        %2104 = vmatmul.mubr.bf16.gmra.mrb[0].mxu0 %v1999
        %v2105 = vpop.f32.mrb[0].mxu0
        %v2106 = vadd.f32 %v1575, %v2105
        %v2107 = vpop.f32.mrb[0].mxu0
        %v2108 = vpop.f32.mrb[0].mxu0
        %v2109 = vadd.f32 %v1576, %v2108
        %v2110 = vpop.f32.mrb[0].mxu0
        %2111 = vmatprep.mubr.bf16.mxu0 0
        %2112 = vmatmul.mubr.bf16.gmra.mrb[0].mxu0 %v2002
        %v2113 = vpop.f32.mrb[0].mxu0
        %v2114 = vadd.f32 %v1577, %v2113
        %v2115 = vpop.f32.mrb[0].mxu0
        %v2116 = vpop.f32.mrb[0].mxu0
        %v2117 = vadd.f32 %v1578, %v2116
        %v2118 = vpop.f32.mrb[0].mxu0
        %2119 = vmatprep.mubr.bf16.mxu0 0
        %2120 = vmatmul.mubr.bf16.gmra.mrb[0].mxu0 %v2005
        %v2121 = vpop.f32.mrb[0].mxu0
        %v2122 = vadd.f32 %v1579, %v2121
        %v2123 = vpop.f32.mrb[0].mxu0
        %v2124 = vpop.f32.mrb[0].mxu0
        %v2125 = vadd.f32 %v1580, %v2124
        %v2126 = vpop.f32.mrb[0].mxu0
        %2127 = vdwg.mxu0
        %v2129 = vsel %vm1837, %v1821, 0
        %v2132 = vsel %vm1837, %v1822, 0
        %v2135 = vsel %vm1837, %v1823, 0
        %v2138 = vsel %vm1837, %v1824, 0
        %v2141 = vsel %vm1837, %v1825, 0
        %v2144 = vsel %vm1837, %v1826, 0
        %v2147 = vsel %vm1837, %v1827, 0
        %v2150 = vsel %vm1837, %v1828, 0
        %v2153 = vsel %vm1837, %v1597, 0
        %v2156 = vsel %vm1837, %v1598, 0
        %v2159 = vsel %vm1837, %v1599, 0
        %v2162 = vsel %vm1837, %v1600, 0
        %v2165 = vsel %vm1837, %v1601, 0
        %v2168 = vsel %vm1837, %v1602, 0
        %v2171 = vsel %vm1837, %v1603, 0
        %v2174 = vsel %vm1837, %v1604, 0
        %2176 = vmatprep.subr.bf16.mxu0 0
        %2177 = vmatpush1.bf16.xpose.msra.mxu0 %v2153
        %2178 = vmatprep.subr.bf16.mxu0 0
        %2179 = vmatpush1.bf16.xpose.msra.mxu0 %v2156
        %2180 = vmatprep.subr.bf16.mxu0 0
        %2181 = vmatpush1.bf16.xpose.msra.mxu0 %v2159
        %2182 = vmatprep.subr.bf16.mxu0 0
        %2183 = vmatpush1.bf16.xpose.msra.mxu0 %v2162
        %2184 = vmatprep.subr.bf16.mxu0 0
        %2185 = vmatpush1.bf16.xpose.msra.mxu0 %v2165
        %2186 = vmatprep.subr.bf16.mxu0 0
        %2187 = vmatpush1.bf16.xpose.msra.mxu0 %v2168
        %2188 = vmatprep.subr.bf16.mxu0 0
        %2189 = vmatpush1.bf16.xpose.msra.mxu0 %v2171
        %2190 = vmatprep.subr.bf16.mxu0 0
        %2191 = vmatpush1.bf16.xpose.msra.mxu0 %v2174
        %2192 = vmatprep.subr.bf16.mxu0 0
        %2193 = vmatpush1.bf16.xpose.msra.mxu0 0
        %2194 = vmatprep.subr.bf16.mxu0 0
        %2195 = vmatpush1.bf16.xpose.msra.mxu0 0
        %2196 = vmatprep.subr.bf16.mxu0 0
        %2197 = vmatpush1.bf16.xpose.msra.mxu0 0
        %2198 = vmatprep.subr.bf16.mxu0 0
        %2199 = vmatpush1.bf16.xpose.msra.mxu0 0
        %2200 = vmatprep.subr.bf16.mxu0 0
        %2201 = vmatpush1.bf16.xpose.msra.mxu0 0
        %2202 = vmatprep.subr.bf16.mxu0 0
        %2203 = vmatpush1.bf16.xpose.msra.mxu0 0
        %2204 = vmatprep.subr.bf16.mxu0 0
        %2205 = vmatpush1.bf16.xpose.msra.mxu0 0
        %2206 = vmatprep.subr.bf16.mxu0 0
        %2207 = vmatpush1.bf16.xpose.msra.mxu0 0
        %2208 = vmatprep.mubr.bf16.mxu0 0
        %2209 = vmatmul.mubr.bf16.gmra.mrb[0].mxu0 %v2129
        %v2210 = vpop.f32.mrb[0].mxu0
        %v2211 = vadd.f32 %v1565, %v2210
        %v2212 = vpop.f32.mrb[0].mxu0
        %v2213 = vpop.f32.mrb[0].mxu0
        %v2214 = vadd.f32 %v1566, %v2213
        %v2215 = vpop.f32.mrb[0].mxu0
        %2216 = vmatprep.mubr.bf16.mxu0 0
        %2217 = vmatmul.mubr.bf16.gmra.mrb[0].mxu0 %v2132
        %v2218 = vpop.f32.mrb[0].mxu0
        %v2219 = vadd.f32 %v1567, %v2218
        %v2220 = vpop.f32.mrb[0].mxu0
        %v2221 = vpop.f32.mrb[0].mxu0
        %v2222 = vadd.f32 %v1568, %v2221
        %v2223 = vpop.f32.mrb[0].mxu0
        %2224 = vmatprep.mubr.bf16.mxu0 0
        %2225 = vmatmul.mubr.bf16.gmra.mrb[0].mxu0 %v2135
        %v2226 = vpop.f32.mrb[0].mxu0
        %v2227 = vadd.f32 %v1569, %v2226
        %v2228 = vpop.f32.mrb[0].mxu0
        %v2229 = vpop.f32.mrb[0].mxu0
        %v2230 = vadd.f32 %v1570, %v2229
        %v2231 = vpop.f32.mrb[0].mxu0
        %2232 = vmatprep.mubr.bf16.mxu0 0
        %2233 = vmatmul.mubr.bf16.gmra.mrb[0].mxu0 %v2138
        %v2234 = vpop.f32.mrb[0].mxu0
        %v2235 = vadd.f32 %v1571, %v2234
        %v2236 = vpop.f32.mrb[0].mxu0
        %v2237 = vpop.f32.mrb[0].mxu0
        %v2238 = vadd.f32 %v1572, %v2237
        %v2239 = vpop.f32.mrb[0].mxu0
        %2240 = vmatprep.mubr.bf16.mxu0 0
        %2241 = vmatmul.mubr.bf16.gmra.mrb[0].mxu0 %v2141
        %v2242 = vpop.f32.mrb[0].mxu0
        %v2243 = vadd.f32 %v1573, %v2242
        %v2244 = vpop.f32.mrb[0].mxu0
        %v2245 = vpop.f32.mrb[0].mxu0
        %v2246 = vadd.f32 %v1574, %v2245
        %v2247 = vpop.f32.mrb[0].mxu0
        %2248 = vmatprep.mubr.bf16.mxu0 0
        %2249 = vmatmul.mubr.bf16.gmra.mrb[0].mxu0 %v2144
        %v2250 = vpop.f32.mrb[0].mxu0
        %v2251 = vadd.f32 %v1575, %v2250
        %v2252 = vpop.f32.mrb[0].mxu0
        %v2253 = vpop.f32.mrb[0].mxu0
        %v2254 = vadd.f32 %v1576, %v2253
        %v2255 = vpop.f32.mrb[0].mxu0
        %2256 = vmatprep.mubr.bf16.mxu0 0
        %2257 = vmatmul.mubr.bf16.gmra.mrb[0].mxu0 %v2147
        %v2258 = vpop.f32.mrb[0].mxu0
        %v2259 = vadd.f32 %v1577, %v2258
        %v2260 = vpop.f32.mrb[0].mxu0
        %v2261 = vpop.f32.mrb[0].mxu0
        %v2262 = vadd.f32 %v1578, %v2261
        %v2263 = vpop.f32.mrb[0].mxu0
        %2264 = vmatprep.mubr.bf16.mxu0 0
        %2265 = vmatmul.mubr.bf16.gmra.mrb[0].mxu0 %v2150
        %v2266 = vpop.f32.mrb[0].mxu0
        %v2267 = vadd.f32 %v1579, %v2266
        %v2268 = vpop.f32.mrb[0].mxu0
        %v2269 = vpop.f32.mrb[0].mxu0
        %v2270 = vadd.f32 %v1580, %v2269
        %v2271 = vpop.f32.mrb[0].mxu0
        %2272 = vdwg.mxu0
        %v2274 = vsel %vm1837, %v1829, 0
        %v2277 = vsel %vm1837, %v1830, 0
        %v2280 = vsel %vm1837, %v1831, 0
        %v2283 = vsel %vm1837, %v1832, 0
        %v2286 = vsel %vm1837, %v1833, 0
        %v2289 = vsel %vm1837, %v1834, 0
        %v2292 = vsel %vm1837, %v1835, 0
        %v2295 = vsel %vm1837, %v1836, 0
        %v2298 = vsel %vm1837, %v1605, 0
        %v2301 = vsel %vm1837, %v1606, 0
        %v2304 = vsel %vm1837, %v1607, 0
        %v2307 = vsel %vm1837, %v1608, 0
        %v2310 = vsel %vm1837, %v1609, 0
        %v2313 = vsel %vm1837, %v1610, 0
        %v2316 = vsel %vm1837, %v1611, 0
        %v2319 = vsel %vm1837, %v1612, 0
        %2321 = vmatprep.subr.bf16.mxu0 0
        %2322 = vmatpush1.bf16.xpose.msra.mxu0 %v2298
        %2323 = vmatprep.subr.bf16.mxu0 0
        %2324 = vmatpush1.bf16.xpose.msra.mxu0 %v2301
        %2325 = vmatprep.subr.bf16.mxu0 0
        %2326 = vmatpush1.bf16.xpose.msra.mxu0 %v2304
        %2327 = vmatprep.subr.bf16.mxu0 0
        %2328 = vmatpush1.bf16.xpose.msra.mxu0 %v2307
        %2329 = vmatprep.subr.bf16.mxu0 0
        %2330 = vmatpush1.bf16.xpose.msra.mxu0 %v2310
        %2331 = vmatprep.subr.bf16.mxu0 0
        %2332 = vmatpush1.bf16.xpose.msra.mxu0 %v2313
        %2333 = vmatprep.subr.bf16.mxu0 0
        %2334 = vmatpush1.bf16.xpose.msra.mxu0 %v2316
        %2335 = vmatprep.subr.bf16.mxu0 0
        %2336 = vmatpush1.bf16.xpose.msra.mxu0 %v2319
        %2337 = vmatprep.subr.bf16.mxu0 0
        %2338 = vmatpush1.bf16.xpose.msra.mxu0 0
        %2339 = vmatprep.subr.bf16.mxu0 0
        %2340 = vmatpush1.bf16.xpose.msra.mxu0 0
        %2341 = vmatprep.subr.bf16.mxu0 0
        %2342 = vmatpush1.bf16.xpose.msra.mxu0 0
        %2343 = vmatprep.subr.bf16.mxu0 0
        %2344 = vmatpush1.bf16.xpose.msra.mxu0 0
        %2345 = vmatprep.subr.bf16.mxu0 0
        %2346 = vmatpush1.bf16.xpose.msra.mxu0 0
        %2347 = vmatprep.subr.bf16.mxu0 0
        %2348 = vmatpush1.bf16.xpose.msra.mxu0 0
        %2349 = vmatprep.subr.bf16.mxu0 0
        %2350 = vmatpush1.bf16.xpose.msra.mxu0 0
        %2351 = vmatprep.subr.bf16.mxu0 0
        %2352 = vmatpush1.bf16.xpose.msra.mxu0 0
        %2353 = vmatprep.mubr.bf16.mxu0 0
        %2354 = vmatmul.mubr.bf16.gmra.mrb[0].mxu0 %v2274
        %v2355 = vpop.f32.mrb[0].mxu0
        %v2356 = vadd.f32 %v1565, %v2355
        %v2357 = vpop.f32.mrb[0].mxu0
        %v2358 = vpop.f32.mrb[0].mxu0
        %v2359 = vadd.f32 %v1566, %v2358
        %v2360 = vpop.f32.mrb[0].mxu0
        %2361 = vmatprep.mubr.bf16.mxu0 0
        %2362 = vmatmul.mubr.bf16.gmra.mrb[0].mxu0 %v2277
        %v2363 = vpop.f32.mrb[0].mxu0
        %v2364 = vadd.f32 %v1567, %v2363
        %v2365 = vpop.f32.mrb[0].mxu0
        %v2366 = vpop.f32.mrb[0].mxu0
        %v2367 = vadd.f32 %v1568, %v2366
        %v2368 = vpop.f32.mrb[0].mxu0
        %2369 = vmatprep.mubr.bf16.mxu0 0
        %2370 = vmatmul.mubr.bf16.gmra.mrb[0].mxu0 %v2280
        %v2371 = vpop.f32.mrb[0].mxu0
        %v2372 = vadd.f32 %v1569, %v2371
        %v2373 = vpop.f32.mrb[0].mxu0
        %v2374 = vpop.f32.mrb[0].mxu0
        %v2375 = vadd.f32 %v1570, %v2374
        %v2376 = vpop.f32.mrb[0].mxu0
        %2377 = vmatprep.mubr.bf16.mxu0 0
        %2378 = vmatmul.mubr.bf16.gmra.mrb[0].mxu0 %v2283
        %v2379 = vpop.f32.mrb[0].mxu0
        %v2380 = vadd.f32 %v1571, %v2379
        %v2381 = vpop.f32.mrb[0].mxu0
        %v2382 = vpop.f32.mrb[0].mxu0
        %v2383 = vadd.f32 %v1572, %v2382
        %v2384 = vpop.f32.mrb[0].mxu0
        %2385 = vmatprep.mubr.bf16.mxu0 0
        %2386 = vmatmul.mubr.bf16.gmra.mrb[0].mxu0 %v2286
        %v2387 = vpop.f32.mrb[0].mxu0
        %v2388 = vadd.f32 %v1573, %v2387
        %v2389 = vpop.f32.mrb[0].mxu0
        %v2390 = vpop.f32.mrb[0].mxu0
        %v2391 = vadd.f32 %v1574, %v2390
        %v2392 = vpop.f32.mrb[0].mxu0
        %2393 = vmatprep.mubr.bf16.mxu0 0
        %2394 = vmatmul.mubr.bf16.gmra.mrb[0].mxu0 %v2289
        %v2395 = vpop.f32.mrb[0].mxu0
        %v2396 = vadd.f32 %v1575, %v2395
        %v2397 = vpop.f32.mrb[0].mxu0
        %v2398 = vpop.f32.mrb[0].mxu0
        %v2399 = vadd.f32 %v1576, %v2398
        %v2400 = vpop.f32.mrb[0].mxu0
        %2401 = vmatprep.mubr.bf16.mxu0 0
        %2402 = vmatmul.mubr.bf16.gmra.mrb[0].mxu0 %v2292
        %v2403 = vpop.f32.mrb[0].mxu0
        %v2404 = vadd.f32 %v1577, %v2403
        %v2405 = vpop.f32.mrb[0].mxu0
        %v2406 = vpop.f32.mrb[0].mxu0
        %v2407 = vadd.f32 %v1578, %v2406
        %v2408 = vpop.f32.mrb[0].mxu0
        %2409 = vmatprep.mubr.bf16.mxu0 0
        %2410 = vmatmul.mubr.bf16.gmra.mrb[0].mxu0 %v2295
        %v2411 = vpop.f32.mrb[0].mxu0
        %v2412 = vadd.f32 %v1579, %v2411
        %v2413 = vpop.f32.mrb[0].mxu0
        %v2414 = vpop.f32.mrb[0].mxu0
        %v2415 = vadd.f32 %v1580, %v2414
        %v2416 = vpop.f32.mrb[0].mxu0
        %2417 = vdwg.mxu0
        %2418 = vmax.xlane.f32.xlu0 %v1921
        %v2419 = vpop.xlane.xlu0 %2418
        %2420 = vmax.xlane.f32.xlu0 %v1924
        %v2421 = vpop.xlane.xlu0 %2420
        %2422 = vmax.xlane.f32.xlu0 %v1929
        %v2423 = vpop.xlane.xlu0 %2422
        %2424 = vmax.xlane.f32.xlu0 %v1932
        %v2425 = vpop.xlane.xlu0 %2424
        %2426 = vmax.xlane.f32.xlu0 %v1937
        %v2427 = vpop.xlane.xlu0 %2426
        %2428 = vmax.xlane.f32.xlu0 %v1940
        %v2429 = vpop.xlane.xlu0 %2428
        %2430 = vmax.xlane.f32.xlu0 %v1945
        %v2431 = vpop.xlane.xlu0 %2430
        %2432 = vmax.xlane.f32.xlu0 %v1948
        %v2433 = vpop.xlane.xlu0 %2432
        %2434 = vmax.xlane.f32.xlu0 %v1953
        %v2435 = vpop.xlane.xlu0 %2434
        %2436 = vmax.xlane.f32.xlu0 %v1956
        %v2437 = vpop.xlane.xlu0 %2436
        %2438 = vmax.xlane.f32.xlu0 %v1961
        %v2439 = vpop.xlane.xlu0 %2438
        %2440 = vmax.xlane.f32.xlu0 %v1964
        %v2441 = vpop.xlane.xlu0 %2440
        %2442 = vmax.xlane.f32.xlu0 %v1969
        %v2443 = vpop.xlane.xlu0 %2442
        %2444 = vmax.xlane.f32.xlu0 %v1972
        %v2445 = vpop.xlane.xlu0 %2444
        %2446 = vmax.xlane.f32.xlu0 %v1977
        %v2447 = vpop.xlane.xlu0 %2446
        %2448 = vmax.xlane.f32.xlu0 %v1980
        %v2449 = vpop.xlane.xlu0 %2448
        %2450 = vmax.xlane.f32.xlu0 %v2066
        %v2451 = vpop.xlane.xlu0 %2450
        %2452 = vmax.xlane.f32.xlu0 %v2069
        %v2453 = vpop.xlane.xlu0 %2452
        %2454 = vmax.xlane.f32.xlu0 %v2074
        %v2455 = vpop.xlane.xlu0 %2454
        %2456 = vmax.xlane.f32.xlu0 %v2077
        %v2457 = vpop.xlane.xlu0 %2456
        %2458 = vmax.xlane.f32.xlu0 %v2082
        %v2459 = vpop.xlane.xlu0 %2458
        %2460 = vmax.xlane.f32.xlu0 %v2085
        %v2461 = vpop.xlane.xlu0 %2460
        %2462 = vmax.xlane.f32.xlu0 %v2090
        %v2463 = vpop.xlane.xlu0 %2462
        %2464 = vmax.xlane.f32.xlu0 %v2093
        %v2465 = vpop.xlane.xlu0 %2464
        %2466 = vmax.xlane.f32.xlu0 %v2098
        %v2467 = vpop.xlane.xlu0 %2466
        %2468 = vmax.xlane.f32.xlu0 %v2101
        %v2469 = vpop.xlane.xlu0 %2468
        %2470 = vmax.xlane.f32.xlu0 %v2106
        %v2471 = vpop.xlane.xlu0 %2470
        %2472 = vmax.xlane.f32.xlu0 %v2109
        %v2473 = vpop.xlane.xlu0 %2472
        %2474 = vmax.xlane.f32.xlu0 %v2114
        %v2475 = vpop.xlane.xlu0 %2474
        %2476 = vmax.xlane.f32.xlu0 %v2117
        %v2477 = vpop.xlane.xlu0 %2476
        %2478 = vmax.xlane.f32.xlu0 %v2122
        %v2479 = vpop.xlane.xlu0 %2478
        %2480 = vmax.xlane.f32.xlu0 %v2125
        %v2481 = vpop.xlane.xlu0 %2480
        %2482 = vmax.xlane.f32.xlu0 %v2211
        %v2483 = vpop.xlane.xlu0 %2482
        %2484 = vmax.xlane.f32.xlu0 %v2214
        %v2485 = vpop.xlane.xlu0 %2484
        %2486 = vmax.xlane.f32.xlu0 %v2219
        %v2487 = vpop.xlane.xlu0 %2486
        %2488 = vmax.xlane.f32.xlu0 %v2222
        %v2489 = vpop.xlane.xlu0 %2488
        %2490 = vmax.xlane.f32.xlu0 %v2227
        %v2491 = vpop.xlane.xlu0 %2490
        %2492 = vmax.xlane.f32.xlu0 %v2230
        %v2493 = vpop.xlane.xlu0 %2492
        %2494 = vmax.xlane.f32.xlu0 %v2235
        %v2495 = vpop.xlane.xlu0 %2494
        %2496 = vmax.xlane.f32.xlu0 %v2238
        %v2497 = vpop.xlane.xlu0 %2496
        %2498 = vmax.xlane.f32.xlu0 %v2243
        %v2499 = vpop.xlane.xlu0 %2498
        %2500 = vmax.xlane.f32.xlu0 %v2246
        %v2501 = vpop.xlane.xlu0 %2500
        %2502 = vmax.xlane.f32.xlu0 %v2251
        %v2503 = vpop.xlane.xlu0 %2502
        %2504 = vmax.xlane.f32.xlu0 %v2254
        %v2505 = vpop.xlane.xlu0 %2504
        %2506 = vmax.xlane.f32.xlu0 %v2259
        %v2507 = vpop.xlane.xlu0 %2506
        %2508 = vmax.xlane.f32.xlu0 %v2262
        %v2509 = vpop.xlane.xlu0 %2508
        %2510 = vmax.xlane.f32.xlu0 %v2267
        %v2511 = vpop.xlane.xlu0 %2510
        %2512 = vmax.xlane.f32.xlu0 %v2270
        %v2513 = vpop.xlane.xlu0 %2512
        %2514 = vmax.xlane.f32.xlu0 %v2356
        %v2515 = vpop.xlane.xlu0 %2514
        %2516 = vmax.xlane.f32.xlu0 %v2359
        %v2517 = vpop.xlane.xlu0 %2516
        %2518 = vmax.xlane.f32.xlu0 %v2364
        %v2519 = vpop.xlane.xlu0 %2518
        %2520 = vmax.xlane.f32.xlu0 %v2367
        %v2521 = vpop.xlane.xlu0 %2520
        %2522 = vmax.xlane.f32.xlu0 %v2372
        %v2523 = vpop.xlane.xlu0 %2522
        %2524 = vmax.xlane.f32.xlu0 %v2375
        %v2525 = vpop.xlane.xlu0 %2524
        %2526 = vmax.xlane.f32.xlu0 %v2380
        %v2527 = vpop.xlane.xlu0 %2526
        %2528 = vmax.xlane.f32.xlu0 %v2383
        %v2529 = vpop.xlane.xlu0 %2528
        %2530 = vmax.xlane.f32.xlu0 %v2388
        %v2531 = vpop.xlane.xlu0 %2530
        %2532 = vmax.xlane.f32.xlu0 %v2391
        %v2533 = vpop.xlane.xlu0 %2532
        %2534 = vmax.xlane.f32.xlu0 %v2396
        %v2535 = vpop.xlane.xlu0 %2534
        %2536 = vmax.xlane.f32.xlu0 %v2399
        %v2537 = vpop.xlane.xlu0 %2536
        %2538 = vmax.xlane.f32.xlu0 %v2404
        %v2539 = vpop.xlane.xlu0 %2538
        %2540 = vmax.xlane.f32.xlu0 %v2407
        %v2541 = vpop.xlane.xlu0 %2540
        %2542 = vmax.xlane.f32.xlu0 %v2412
        %v2543 = vpop.xlane.xlu0 %2542
        %2544 = vmax.xlane.f32.xlu0 %v2415
        %v2545 = vpop.xlane.xlu0 %2544
        %v2546 = vsub.f32 %v1921, %v2419
        %v2547 = vsub.f32 %v1924, %v2421
        %v2548 = vsub.f32 %v1929, %v2423
        %v2549 = vsub.f32 %v1932, %v2425
        %v2550 = vsub.f32 %v1937, %v2427
        %v2551 = vsub.f32 %v1940, %v2429
        %v2552 = vsub.f32 %v1945, %v2431
        %v2553 = vsub.f32 %v1948, %v2433
        %v2554 = vsub.f32 %v1953, %v2435
        %v2555 = vsub.f32 %v1956, %v2437
        %v2556 = vsub.f32 %v1961, %v2439
        %v2557 = vsub.f32 %v1964, %v2441
        %v2558 = vsub.f32 %v1969, %v2443
        %v2559 = vsub.f32 %v1972, %v2445
        %v2560 = vsub.f32 %v1977, %v2447
        %v2561 = vsub.f32 %v1980, %v2449
        %v2562 = vsub.f32 %v2066, %v2451
        %v2563 = vsub.f32 %v2069, %v2453
        %v2564 = vsub.f32 %v2074, %v2455
        %v2565 = vsub.f32 %v2077, %v2457
        %v2566 = vsub.f32 %v2082, %v2459
        %v2567 = vsub.f32 %v2085, %v2461
        %v2568 = vsub.f32 %v2090, %v2463
        %v2569 = vsub.f32 %v2093, %v2465
        %v2570 = vsub.f32 %v2098, %v2467
        %v2571 = vsub.f32 %v2101, %v2469
        %v2572 = vsub.f32 %v2106, %v2471
        %v2573 = vsub.f32 %v2109, %v2473
        %v2574 = vsub.f32 %v2114, %v2475
        %v2575 = vsub.f32 %v2117, %v2477
        %v2576 = vsub.f32 %v2122, %v2479
        %v2577 = vsub.f32 %v2125, %v2481
        %v2578 = vsub.f32 %v2211, %v2483
        %v2579 = vsub.f32 %v2214, %v2485
        %v2580 = vsub.f32 %v2219, %v2487
        %v2581 = vsub.f32 %v2222, %v2489
        %v2582 = vsub.f32 %v2227, %v2491
        %v2583 = vsub.f32 %v2230, %v2493
        %v2584 = vsub.f32 %v2235, %v2495
        %v2585 = vsub.f32 %v2238, %v2497
        %v2586 = vsub.f32 %v2243, %v2499
        %v2587 = vsub.f32 %v2246, %v2501
        %v2588 = vsub.f32 %v2251, %v2503
        %v2589 = vsub.f32 %v2254, %v2505
        %v2590 = vsub.f32 %v2259, %v2507
        %v2591 = vsub.f32 %v2262, %v2509
        %v2592 = vsub.f32 %v2267, %v2511
        %v2593 = vsub.f32 %v2270, %v2513
        %v2594 = vsub.f32 %v2356, %v2515
        %v2595 = vsub.f32 %v2359, %v2517
        %v2596 = vsub.f32 %v2364, %v2519
        %v2597 = vsub.f32 %v2367, %v2521
        %v2598 = vsub.f32 %v2372, %v2523
        %v2599 = vsub.f32 %v2375, %v2525
        %v2600 = vsub.f32 %v2380, %v2527
        %v2601 = vsub.f32 %v2383, %v2529
        %v2602 = vsub.f32 %v2388, %v2531
        %v2603 = vsub.f32 %v2391, %v2533
        %v2604 = vsub.f32 %v2396, %v2535
        %v2605 = vsub.f32 %v2399, %v2537
        %v2606 = vsub.f32 %v2404, %v2539
        %v2607 = vsub.f32 %v2407, %v2541
        %v2608 = vsub.f32 %v2412, %v2543
        %v2609 = vsub.f32 %v2415, %v2545
        %v2610 = vmul.f32 %v2546, 1.442695
        %v2611 = vpow.pop %v2610
        %v2612 = vmul.f32 %v2547, 1.442695
        %v2613 = vpow.pop %v2612
        %v2614 = vmul.f32 %v2548, 1.442695
        %v2615 = vpow.pop %v2614
        %v2616 = vmul.f32 %v2549, 1.442695
        %v2617 = vpow.pop %v2616
        %v2618 = vmul.f32 %v2550, 1.442695
        %v2619 = vpow.pop %v2618
        %v2620 = vmul.f32 %v2551, 1.442695
        %v2621 = vpow.pop %v2620
        %v2622 = vmul.f32 %v2552, 1.442695
        %v2623 = vpow.pop %v2622
        %v2624 = vmul.f32 %v2553, 1.442695
        %v2625 = vpow.pop %v2624
        %v2626 = vmul.f32 %v2554, 1.442695
        %v2627 = vpow.pop %v2626
        %v2628 = vmul.f32 %v2555, 1.442695
        %v2629 = vpow.pop %v2628
        %v2630 = vmul.f32 %v2556, 1.442695
        %v2631 = vpow.pop %v2630
        %v2632 = vmul.f32 %v2557, 1.442695
        %v2633 = vpow.pop %v2632
        %v2634 = vmul.f32 %v2558, 1.442695
        %v2635 = vpow.pop %v2634
        %v2636 = vmul.f32 %v2559, 1.442695
        %v2637 = vpow.pop %v2636
        %v2638 = vmul.f32 %v2560, 1.442695
        %v2639 = vpow.pop %v2638
        %v2640 = vmul.f32 %v2561, 1.442695
        %v2641 = vpow.pop %v2640
        %v2642 = vmul.f32 %v2562, 1.442695
        %v2643 = vpow.pop %v2642
        %v2644 = vmul.f32 %v2563, 1.442695
        %v2645 = vpow.pop %v2644
        %v2646 = vmul.f32 %v2564, 1.442695
        %v2647 = vpow.pop %v2646
        %v2648 = vmul.f32 %v2565, 1.442695
        %v2649 = vpow.pop %v2648
        %v2650 = vmul.f32 %v2566, 1.442695
        %v2651 = vpow.pop %v2650
        %v2652 = vmul.f32 %v2567, 1.442695
        %v2653 = vpow.pop %v2652
        %v2654 = vmul.f32 %v2568, 1.442695
        %v2655 = vpow.pop %v2654
        %v2656 = vmul.f32 %v2569, 1.442695
        %v2657 = vpow.pop %v2656
        %v2658 = vmul.f32 %v2570, 1.442695
        %v2659 = vpow.pop %v2658
        %v2660 = vmul.f32 %v2571, 1.442695
        %v2661 = vpow.pop %v2660
        %v2662 = vmul.f32 %v2572, 1.442695
        %v2663 = vpow.pop %v2662
        %v2664 = vmul.f32 %v2573, 1.442695
        %v2665 = vpow.pop %v2664
        %v2666 = vmul.f32 %v2574, 1.442695
        %v2667 = vpow.pop %v2666
        %v2668 = vmul.f32 %v2575, 1.442695
        %v2669 = vpow.pop %v2668
        %v2670 = vmul.f32 %v2576, 1.442695
        %v2671 = vpow.pop %v2670
        %v2672 = vmul.f32 %v2577, 1.442695
        %v2673 = vpow.pop %v2672
        %v2674 = vmul.f32 %v2578, 1.442695
        %v2675 = vpow.pop %v2674
        %v2676 = vmul.f32 %v2579, 1.442695
        %v2677 = vpow.pop %v2676
        %v2678 = vmul.f32 %v2580, 1.442695
        %v2679 = vpow.pop %v2678
        %v2680 = vmul.f32 %v2581, 1.442695
        %v2681 = vpow.pop %v2680
        %v2682 = vmul.f32 %v2582, 1.442695
        %v2683 = vpow.pop %v2682
        %v2684 = vmul.f32 %v2583, 1.442695
        %v2685 = vpow.pop %v2684
        %v2686 = vmul.f32 %v2584, 1.442695
        %v2687 = vpow.pop %v2686
        %v2688 = vmul.f32 %v2585, 1.442695
        %v2689 = vpow.pop %v2688
        %v2690 = vmul.f32 %v2586, 1.442695
        %v2691 = vpow.pop %v2690
        %v2692 = vmul.f32 %v2587, 1.442695
        %v2693 = vpow.pop %v2692
        %v2694 = vmul.f32 %v2588, 1.442695
        %v2695 = vpow.pop %v2694
        %v2696 = vmul.f32 %v2589, 1.442695
        %v2697 = vpow.pop %v2696
        %v2698 = vmul.f32 %v2590, 1.442695
        %v2699 = vpow.pop %v2698
        %v2700 = vmul.f32 %v2591, 1.442695
        %v2701 = vpow.pop %v2700
        %v2702 = vmul.f32 %v2592, 1.442695
        %v2703 = vpow.pop %v2702
        %v2704 = vmul.f32 %v2593, 1.442695
        %v2705 = vpow.pop %v2704
        %v2706 = vmul.f32 %v2594, 1.442695
        %v2707 = vpow.pop %v2706
        %v2708 = vmul.f32 %v2595, 1.442695
        %v2709 = vpow.pop %v2708
        %v2710 = vmul.f32 %v2596, 1.442695
        %v2711 = vpow.pop %v2710
        %v2712 = vmul.f32 %v2597, 1.442695
        %v2713 = vpow.pop %v2712
        %v2714 = vmul.f32 %v2598, 1.442695
        %v2715 = vpow.pop %v2714
        %v2716 = vmul.f32 %v2599, 1.442695
        %v2717 = vpow.pop %v2716
        %v2718 = vmul.f32 %v2600, 1.442695
        %v2719 = vpow.pop %v2718
        %v2720 = vmul.f32 %v2601, 1.442695
        %v2721 = vpow.pop %v2720
        %v2722 = vmul.f32 %v2602, 1.442695
        %v2723 = vpow.pop %v2722
        %v2724 = vmul.f32 %v2603, 1.442695
        %v2725 = vpow.pop %v2724
        %v2726 = vmul.f32 %v2604, 1.442695
        %v2727 = vpow.pop %v2726
        %v2728 = vmul.f32 %v2605, 1.442695
        %v2729 = vpow.pop %v2728
        %v2730 = vmul.f32 %v2606, 1.442695
        %v2731 = vpow.pop %v2730
        %v2732 = vmul.f32 %v2607, 1.442695
        %v2733 = vpow.pop %v2732
        %v2734 = vmul.f32 %v2608, 1.442695
        %v2735 = vpow.pop %v2734
        %v2736 = vmul.f32 %v2609, 1.442695
        %v2737 = vpow.pop %v2736
        %2738 = vadd.xlane.f32.xlu0 %v2611
        %v2739 = vpop.xlane.xlu0 %2738
        %2740 = vadd.xlane.f32.xlu0 %v2613
        %v2741 = vpop.xlane.xlu0 %2740
        %2742 = vadd.xlane.f32.xlu0 %v2615
        %v2743 = vpop.xlane.xlu0 %2742
        %2744 = vadd.xlane.f32.xlu0 %v2617
        %v2745 = vpop.xlane.xlu0 %2744
        %2746 = vadd.xlane.f32.xlu0 %v2619
        %v2747 = vpop.xlane.xlu0 %2746
        %2748 = vadd.xlane.f32.xlu0 %v2621
        %v2749 = vpop.xlane.xlu0 %2748
        %2750 = vadd.xlane.f32.xlu0 %v2623
        %v2751 = vpop.xlane.xlu0 %2750
        %2752 = vadd.xlane.f32.xlu0 %v2625
        %v2753 = vpop.xlane.xlu0 %2752
        %2754 = vadd.xlane.f32.xlu0 %v2627
        %v2755 = vpop.xlane.xlu0 %2754
        %2756 = vadd.xlane.f32.xlu0 %v2629
        %v2757 = vpop.xlane.xlu0 %2756
        %2758 = vadd.xlane.f32.xlu0 %v2631
        %v2759 = vpop.xlane.xlu0 %2758
        %2760 = vadd.xlane.f32.xlu0 %v2633
        %v2761 = vpop.xlane.xlu0 %2760
        %2762 = vadd.xlane.f32.xlu0 %v2635
        %v2763 = vpop.xlane.xlu0 %2762
        %2764 = vadd.xlane.f32.xlu0 %v2637
        %v2765 = vpop.xlane.xlu0 %2764
        %2766 = vadd.xlane.f32.xlu0 %v2639
        %v2767 = vpop.xlane.xlu0 %2766
        %2768 = vadd.xlane.f32.xlu0 %v2641
        %v2769 = vpop.xlane.xlu0 %2768
        %2770 = vadd.xlane.f32.xlu0 %v2643
        %v2771 = vpop.xlane.xlu0 %2770
        %2772 = vadd.xlane.f32.xlu0 %v2645
        %v2773 = vpop.xlane.xlu0 %2772
        %2774 = vadd.xlane.f32.xlu0 %v2647
        %v2775 = vpop.xlane.xlu0 %2774
        %2776 = vadd.xlane.f32.xlu0 %v2649
        %v2777 = vpop.xlane.xlu0 %2776
        %2778 = vadd.xlane.f32.xlu0 %v2651
        %v2779 = vpop.xlane.xlu0 %2778
        %2780 = vadd.xlane.f32.xlu0 %v2653
        %v2781 = vpop.xlane.xlu0 %2780
        %2782 = vadd.xlane.f32.xlu0 %v2655
        %v2783 = vpop.xlane.xlu0 %2782
        %2784 = vadd.xlane.f32.xlu0 %v2657
        %v2785 = vpop.xlane.xlu0 %2784
        %2786 = vadd.xlane.f32.xlu0 %v2659
        %v2787 = vpop.xlane.xlu0 %2786
        %2788 = vadd.xlane.f32.xlu0 %v2661
        %v2789 = vpop.xlane.xlu0 %2788
        %2790 = vadd.xlane.f32.xlu0 %v2663
        %v2791 = vpop.xlane.xlu0 %2790
        %2792 = vadd.xlane.f32.xlu0 %v2665
        %v2793 = vpop.xlane.xlu0 %2792
        %2794 = vadd.xlane.f32.xlu0 %v2667
        %v2795 = vpop.xlane.xlu0 %2794
        %2796 = vadd.xlane.f32.xlu0 %v2669
        %v2797 = vpop.xlane.xlu0 %2796
        %2798 = vadd.xlane.f32.xlu0 %v2671
        %v2799 = vpop.xlane.xlu0 %2798
        %2800 = vadd.xlane.f32.xlu0 %v2673
        %v2801 = vpop.xlane.xlu0 %2800
        %2802 = vadd.xlane.f32.xlu0 %v2675
        %v2803 = vpop.xlane.xlu0 %2802
        %2804 = vadd.xlane.f32.xlu0 %v2677
        %v2805 = vpop.xlane.xlu0 %2804
        %2806 = vadd.xlane.f32.xlu0 %v2679
        %v2807 = vpop.xlane.xlu0 %2806
        %2808 = vadd.xlane.f32.xlu0 %v2681
        %v2809 = vpop.xlane.xlu0 %2808
        %2810 = vadd.xlane.f32.xlu0 %v2683
        %v2811 = vpop.xlane.xlu0 %2810
        %2812 = vadd.xlane.f32.xlu0 %v2685
        %v2813 = vpop.xlane.xlu0 %2812
        %2814 = vadd.xlane.f32.xlu0 %v2687
        %v2815 = vpop.xlane.xlu0 %2814
        %2816 = vadd.xlane.f32.xlu0 %v2689
        %v2817 = vpop.xlane.xlu0 %2816
        %2818 = vadd.xlane.f32.xlu0 %v2691
        %v2819 = vpop.xlane.xlu0 %2818
        %2820 = vadd.xlane.f32.xlu0 %v2693
        %v2821 = vpop.xlane.xlu0 %2820
        %2822 = vadd.xlane.f32.xlu0 %v2695
        %v2823 = vpop.xlane.xlu0 %2822
        %2824 = vadd.xlane.f32.xlu0 %v2697
        %v2825 = vpop.xlane.xlu0 %2824
        %2826 = vadd.xlane.f32.xlu0 %v2699
        %v2827 = vpop.xlane.xlu0 %2826
        %2828 = vadd.xlane.f32.xlu0 %v2701
        %v2829 = vpop.xlane.xlu0 %2828
        %2830 = vadd.xlane.f32.xlu0 %v2703
        %v2831 = vpop.xlane.xlu0 %2830
        %2832 = vadd.xlane.f32.xlu0 %v2705
        %v2833 = vpop.xlane.xlu0 %2832
        %2834 = vadd.xlane.f32.xlu0 %v2707
        %v2835 = vpop.xlane.xlu0 %2834
        %2836 = vadd.xlane.f32.xlu0 %v2709
        %v2837 = vpop.xlane.xlu0 %2836
        %2838 = vadd.xlane.f32.xlu0 %v2711
        %v2839 = vpop.xlane.xlu0 %2838
        %2840 = vadd.xlane.f32.xlu0 %v2713
        %v2841 = vpop.xlane.xlu0 %2840
        %2842 = vadd.xlane.f32.xlu0 %v2715
        %v2843 = vpop.xlane.xlu0 %2842
        %2844 = vadd.xlane.f32.xlu0 %v2717
        %v2845 = vpop.xlane.xlu0 %2844
        %2846 = vadd.xlane.f32.xlu0 %v2719
        %v2847 = vpop.xlane.xlu0 %2846
        %2848 = vadd.xlane.f32.xlu0 %v2721
        %v2849 = vpop.xlane.xlu0 %2848
        %2850 = vadd.xlane.f32.xlu0 %v2723
        %v2851 = vpop.xlane.xlu0 %2850
        %2852 = vadd.xlane.f32.xlu0 %v2725
        %v2853 = vpop.xlane.xlu0 %2852
        %2854 = vadd.xlane.f32.xlu0 %v2727
        %v2855 = vpop.xlane.xlu0 %2854
        %2856 = vadd.xlane.f32.xlu0 %v2729
        %v2857 = vpop.xlane.xlu0 %2856
        %2858 = vadd.xlane.f32.xlu0 %v2731
        %v2859 = vpop.xlane.xlu0 %2858
        %2860 = vadd.xlane.f32.xlu0 %v2733
        %v2861 = vpop.xlane.xlu0 %2860
        %2862 = vadd.xlane.f32.xlu0 %v2735
        %v2863 = vpop.xlane.xlu0 %2862
        %2864 = vadd.xlane.f32.xlu0 %v2737
        %v2865 = vpop.xlane.xlu0 %2864
        %v2866 = vrcp.pop %v2739
        %v2867 = vrcp.pop %v2741
        %v2868 = vrcp.pop %v2743
        %v2869 = vrcp.pop %v2745
        %v2870 = vrcp.pop %v2747
        %v2871 = vrcp.pop %v2749
        %v2872 = vrcp.pop %v2751
        %v2873 = vrcp.pop %v2753
        %v2874 = vrcp.pop %v2755
        %v2875 = vrcp.pop %v2757
        %v2876 = vrcp.pop %v2759
        %v2877 = vrcp.pop %v2761
        %v2878 = vrcp.pop %v2763
        %v2879 = vrcp.pop %v2765
        %v2880 = vrcp.pop %v2767
        %v2881 = vrcp.pop %v2769
        %v2882 = vrcp.pop %v2771
        %v2883 = vrcp.pop %v2773
        %v2884 = vrcp.pop %v2775
        %v2885 = vrcp.pop %v2777
        %v2886 = vrcp.pop %v2779
        %v2887 = vrcp.pop %v2781
        %v2888 = vrcp.pop %v2783
        %v2889 = vrcp.pop %v2785
        %v2890 = vrcp.pop %v2787
        %v2891 = vrcp.pop %v2789
        %v2892 = vrcp.pop %v2791
        %v2893 = vrcp.pop %v2793
        %v2894 = vrcp.pop %v2795
        %v2895 = vrcp.pop %v2797
        %v2896 = vrcp.pop %v2799
        %v2897 = vrcp.pop %v2801
        %v2898 = vrcp.pop %v2803
        %v2899 = vrcp.pop %v2805
        %v2900 = vrcp.pop %v2807
        %v2901 = vrcp.pop %v2809
        %v2902 = vrcp.pop %v2811
        %v2903 = vrcp.pop %v2813
        %v2904 = vrcp.pop %v2815
        %v2905 = vrcp.pop %v2817
        %v2906 = vrcp.pop %v2819
        %v2907 = vrcp.pop %v2821
        %v2908 = vrcp.pop %v2823
        %v2909 = vrcp.pop %v2825
        %v2910 = vrcp.pop %v2827
        %v2911 = vrcp.pop %v2829
        %v2912 = vrcp.pop %v2831
        %v2913 = vrcp.pop %v2833
        %v2914 = vrcp.pop %v2835
        %v2915 = vrcp.pop %v2837
        %v2916 = vrcp.pop %v2839
        %v2917 = vrcp.pop %v2841
        %v2918 = vrcp.pop %v2843
        %v2919 = vrcp.pop %v2845
        %v2920 = vrcp.pop %v2847
        %v2921 = vrcp.pop %v2849
        %v2922 = vrcp.pop %v2851
        %v2923 = vrcp.pop %v2853
        %v2924 = vrcp.pop %v2855
        %v2925 = vrcp.pop %v2857
        %v2926 = vrcp.pop %v2859
        %v2927 = vrcp.pop %v2861
        %v2928 = vrcp.pop %v2863
        %v2929 = vrcp.pop %v2865
        %v2930 = vmul.f32 %v2611, %v2866
        %v2931 = vmul.f32 %v2613, %v2867
        %v2932 = vmul.f32 %v2615, %v2868
        %v2933 = vmul.f32 %v2617, %v2869
        %v2934 = vmul.f32 %v2619, %v2870
        %v2935 = vmul.f32 %v2621, %v2871
        %v2936 = vmul.f32 %v2623, %v2872
        %v2937 = vmul.f32 %v2625, %v2873
        %v2938 = vmul.f32 %v2627, %v2874
        %v2939 = vmul.f32 %v2629, %v2875
        %v2940 = vmul.f32 %v2631, %v2876
        %v2941 = vmul.f32 %v2633, %v2877
        %v2942 = vmul.f32 %v2635, %v2878
        %v2943 = vmul.f32 %v2637, %v2879
        %v2944 = vmul.f32 %v2639, %v2880
        %v2945 = vmul.f32 %v2641, %v2881
        %v2946 = vmul.f32 %v2643, %v2882
        %v2947 = vmul.f32 %v2645, %v2883
        %v2948 = vmul.f32 %v2647, %v2884
        %v2949 = vmul.f32 %v2649, %v2885
        %v2950 = vmul.f32 %v2651, %v2886
        %v2951 = vmul.f32 %v2653, %v2887
        %v2952 = vmul.f32 %v2655, %v2888
        %v2953 = vmul.f32 %v2657, %v2889
        %v2954 = vmul.f32 %v2659, %v2890
        %v2955 = vmul.f32 %v2661, %v2891
        %v2956 = vmul.f32 %v2663, %v2892
        %v2957 = vmul.f32 %v2665, %v2893
        %v2958 = vmul.f32 %v2667, %v2894
        %v2959 = vmul.f32 %v2669, %v2895
        %v2960 = vmul.f32 %v2671, %v2896
        %v2961 = vmul.f32 %v2673, %v2897
        %v2962 = vmul.f32 %v2675, %v2898
        %v2963 = vmul.f32 %v2677, %v2899
        %v2964 = vmul.f32 %v2679, %v2900
        %v2965 = vmul.f32 %v2681, %v2901
        %v2966 = vmul.f32 %v2683, %v2902
        %v2967 = vmul.f32 %v2685, %v2903
        %v2968 = vmul.f32 %v2687, %v2904
        %v2969 = vmul.f32 %v2689, %v2905
        %v2970 = vmul.f32 %v2691, %v2906
        %v2971 = vmul.f32 %v2693, %v2907
        %v2972 = vmul.f32 %v2695, %v2908
        %v2973 = vmul.f32 %v2697, %v2909
        %v2974 = vmul.f32 %v2699, %v2910
        %v2975 = vmul.f32 %v2701, %v2911
        %v2976 = vmul.f32 %v2703, %v2912
        %v2977 = vmul.f32 %v2705, %v2913
        %v2978 = vmul.f32 %v2707, %v2914
        %v2979 = vmul.f32 %v2709, %v2915
        %v2980 = vmul.f32 %v2711, %v2916
        %v2981 = vmul.f32 %v2713, %v2917
        %v2982 = vmul.f32 %v2715, %v2918
        %v2983 = vmul.f32 %v2717, %v2919
        %v2984 = vmul.f32 %v2719, %v2920
        %v2985 = vmul.f32 %v2721, %v2921
        %v2986 = vmul.f32 %v2723, %v2922
        %v2987 = vmul.f32 %v2725, %v2923
        %v2988 = vmul.f32 %v2727, %v2924
        %v2989 = vmul.f32 %v2729, %v2925
        %v2990 = vmul.f32 %v2731, %v2926
        %v2991 = vmul.f32 %v2733, %v2927
        %v2992 = vmul.f32 %v2735, %v2928
        %v2993 = vmul.f32 %v2737, %v2929
        %v2994 = vpack.c.bf16 %v2931, %v2930
        %v2995 = vpack.c.bf16 %v2933, %v2932
        %v2996 = vpack.c.bf16 %v2935, %v2934
        %v2997 = vpack.c.bf16 %v2937, %v2936
        %v2998 = vpack.c.bf16 %v2939, %v2938
        %v2999 = vpack.c.bf16 %v2941, %v2940
        %v3000 = vpack.c.bf16 %v2943, %v2942
        %v3001 = vpack.c.bf16 %v2945, %v2944
        %v3002 = vpack.c.bf16 %v2947, %v2946
        %v3003 = vpack.c.bf16 %v2949, %v2948
        %v3004 = vpack.c.bf16 %v2951, %v2950
        %v3005 = vpack.c.bf16 %v2953, %v2952
        %v3006 = vpack.c.bf16 %v2955, %v2954
        %v3007 = vpack.c.bf16 %v2957, %v2956
        %v3008 = vpack.c.bf16 %v2959, %v2958
        %v3009 = vpack.c.bf16 %v2961, %v2960
        %v3010 = vpack.c.bf16 %v2963, %v2962
        %v3011 = vpack.c.bf16 %v2965, %v2964
        %v3012 = vpack.c.bf16 %v2967, %v2966
        %v3013 = vpack.c.bf16 %v2969, %v2968
        %v3014 = vpack.c.bf16 %v2971, %v2970
        %v3015 = vpack.c.bf16 %v2973, %v2972
        %v3016 = vpack.c.bf16 %v2975, %v2974
        %v3017 = vpack.c.bf16 %v2977, %v2976
        %v3018 = vpack.c.bf16 %v2979, %v2978
        %v3019 = vpack.c.bf16 %v2981, %v2980
        %v3020 = vpack.c.bf16 %v2983, %v2982
        %v3021 = vpack.c.bf16 %v2985, %v2984
        %v3022 = vpack.c.bf16 %v2987, %v2986
        %v3023 = vpack.c.bf16 %v2989, %v2988
        %v3024 = vpack.c.bf16 %v2991, %v2990
        %v3025 = vpack.c.bf16 %v2993, %v2992
        %3026 = vmatprep.subr.bf16.mxu0 0
        %3027 = vmatpush1.bf16.msra.mxu0 %v1613
        %3028 = vmatprep.subr.bf16.mxu0 0
        %3029 = vmatpush1.bf16.msra.mxu0 %v1614
        %3030 = vmatprep.subr.bf16.mxu0 0
        %3031 = vmatpush1.bf16.msra.mxu0 %v1615
        %3032 = vmatprep.subr.bf16.mxu0 0
        %3033 = vmatpush1.bf16.msra.mxu0 %v1616
        %3034 = vmatprep.subr.bf16.mxu0 0
        %3035 = vmatpush1.bf16.msra.mxu0 %v1617
        %3036 = vmatprep.subr.bf16.mxu0 0
        %3037 = vmatpush1.bf16.msra.mxu0 %v1618
        %3038 = vmatprep.subr.bf16.mxu0 0
        %3039 = vmatpush1.bf16.msra.mxu0 %v1619
        %3040 = vmatprep.subr.bf16.mxu0 0
        %3041 = vmatpush1.bf16.msra.mxu0 %v1620
        %3042 = vmatprep.subr.bf16.mxu0 0
        %3043 = vmatpush1.bf16.msra.mxu0 0
        %3044 = vmatprep.subr.bf16.mxu0 0
        %3045 = vmatpush1.bf16.msra.mxu0 0
        %3046 = vmatprep.subr.bf16.mxu0 0
        %3047 = vmatpush1.bf16.msra.mxu0 0
        %3048 = vmatprep.subr.bf16.mxu0 0
        %3049 = vmatpush1.bf16.msra.mxu0 0
        %3050 = vmatprep.subr.bf16.mxu0 0
        %3051 = vmatpush1.bf16.msra.mxu0 0
        %3052 = vmatprep.subr.bf16.mxu0 0
        %3053 = vmatpush1.bf16.msra.mxu0 0
        %3054 = vmatprep.subr.bf16.mxu0 0
        %3055 = vmatpush1.bf16.msra.mxu0 0
        %3056 = vmatprep.subr.bf16.mxu0 0
        %3057 = vmatpush1.bf16.msra.mxu0 0
        %3058 = vmatprep.mubr.bf16.mxu0 0
        %3059 = vmatmul.mubr.bf16.gmra.mrb[0].mxu0 %v2994
        %v3060 = vpop.f32.mrb[0].mxu0
        %v3061 = vadd.f32 0.0, %v3060
        %v3062 = vpop.f32.mrb[0].mxu0
        %v3063 = vpop.f32.mrb[0].mxu0
        %v3064 = vadd.f32 0.0, %v3063
        %v3065 = vpop.f32.mrb[0].mxu0
        %3066 = vmatprep.mubr.bf16.mxu0 0
        %3067 = vmatmul.mubr.bf16.gmra.mrb[0].mxu0 %v2995
        %v3068 = vpop.f32.mrb[0].mxu0
        %v3069 = vadd.f32 0.0, %v3068
        %v3070 = vpop.f32.mrb[0].mxu0
        %v3071 = vpop.f32.mrb[0].mxu0
        %v3072 = vadd.f32 0.0, %v3071
        %v3073 = vpop.f32.mrb[0].mxu0
        %3074 = vmatprep.mubr.bf16.mxu0 0
        %3075 = vmatmul.mubr.bf16.gmra.mrb[0].mxu0 %v2996
        %v3076 = vpop.f32.mrb[0].mxu0
        %v3077 = vadd.f32 0.0, %v3076
        %v3078 = vpop.f32.mrb[0].mxu0
        %v3079 = vpop.f32.mrb[0].mxu0
        %v3080 = vadd.f32 0.0, %v3079
        %v3081 = vpop.f32.mrb[0].mxu0
        %3082 = vmatprep.mubr.bf16.mxu0 0
        %3083 = vmatmul.mubr.bf16.gmra.mrb[0].mxu0 %v2997
        %v3084 = vpop.f32.mrb[0].mxu0
        %v3085 = vadd.f32 0.0, %v3084
        %v3086 = vpop.f32.mrb[0].mxu0
        %v3087 = vpop.f32.mrb[0].mxu0
        %v3088 = vadd.f32 0.0, %v3087
        %v3089 = vpop.f32.mrb[0].mxu0
        %3090 = vmatprep.mubr.bf16.mxu0 0
        %3091 = vmatmul.mubr.bf16.gmra.mrb[0].mxu0 %v2998
        %v3092 = vpop.f32.mrb[0].mxu0
        %v3093 = vadd.f32 0.0, %v3092
        %v3094 = vpop.f32.mrb[0].mxu0
        %v3095 = vpop.f32.mrb[0].mxu0
        %v3096 = vadd.f32 0.0, %v3095
        %v3097 = vpop.f32.mrb[0].mxu0
        %3098 = vmatprep.mubr.bf16.mxu0 0
        %3099 = vmatmul.mubr.bf16.gmra.mrb[0].mxu0 %v2999
        %v3100 = vpop.f32.mrb[0].mxu0
        %v3101 = vadd.f32 0.0, %v3100
        %v3102 = vpop.f32.mrb[0].mxu0
        %v3103 = vpop.f32.mrb[0].mxu0
        %v3104 = vadd.f32 0.0, %v3103
        %v3105 = vpop.f32.mrb[0].mxu0
        %3106 = vmatprep.mubr.bf16.mxu0 0
        %3107 = vmatmul.mubr.bf16.gmra.mrb[0].mxu0 %v3000
        %v3108 = vpop.f32.mrb[0].mxu0
        %v3109 = vadd.f32 0.0, %v3108
        %v3110 = vpop.f32.mrb[0].mxu0
        %v3111 = vpop.f32.mrb[0].mxu0
        %v3112 = vadd.f32 0.0, %v3111
        %v3113 = vpop.f32.mrb[0].mxu0
        %3114 = vmatprep.mubr.bf16.mxu0 0
        %3115 = vmatmul.mubr.bf16.gmra.mrb[0].mxu0 %v3001
        %v3116 = vpop.f32.mrb[0].mxu0
        %v3117 = vadd.f32 0.0, %v3116
        %v3118 = vpop.f32.mrb[0].mxu0
        %v3119 = vpop.f32.mrb[0].mxu0
        %v3120 = vadd.f32 0.0, %v3119
        %v3121 = vpop.f32.mrb[0].mxu0
        %3122 = vdwg.mxu0
        %3123 = vmatprep.subr.bf16.mxu0 0
        %3124 = vmatpush1.bf16.msra.mxu0 %v1621
        %3125 = vmatprep.subr.bf16.mxu0 0
        %3126 = vmatpush1.bf16.msra.mxu0 %v1622
        %3127 = vmatprep.subr.bf16.mxu0 0
        %3128 = vmatpush1.bf16.msra.mxu0 %v1623
        %3129 = vmatprep.subr.bf16.mxu0 0
        %3130 = vmatpush1.bf16.msra.mxu0 %v1624
        %3131 = vmatprep.subr.bf16.mxu0 0
        %3132 = vmatpush1.bf16.msra.mxu0 %v1625
        %3133 = vmatprep.subr.bf16.mxu0 0
        %3134 = vmatpush1.bf16.msra.mxu0 %v1626
        %3135 = vmatprep.subr.bf16.mxu0 0
        %3136 = vmatpush1.bf16.msra.mxu0 %v1627
        %3137 = vmatprep.subr.bf16.mxu0 0
        %3138 = vmatpush1.bf16.msra.mxu0 %v1628
        %3139 = vmatprep.subr.bf16.mxu0 0
        %3140 = vmatpush1.bf16.msra.mxu0 0
        %3141 = vmatprep.subr.bf16.mxu0 0
        %3142 = vmatpush1.bf16.msra.mxu0 0
        %3143 = vmatprep.subr.bf16.mxu0 0
        %3144 = vmatpush1.bf16.msra.mxu0 0
        %3145 = vmatprep.subr.bf16.mxu0 0
        %3146 = vmatpush1.bf16.msra.mxu0 0
        %3147 = vmatprep.subr.bf16.mxu0 0
        %3148 = vmatpush1.bf16.msra.mxu0 0
        %3149 = vmatprep.subr.bf16.mxu0 0
        %3150 = vmatpush1.bf16.msra.mxu0 0
        %3151 = vmatprep.subr.bf16.mxu0 0
        %3152 = vmatpush1.bf16.msra.mxu0 0
        %3153 = vmatprep.subr.bf16.mxu0 0
        %3154 = vmatpush1.bf16.msra.mxu0 0
        %3155 = vmatprep.mubr.bf16.mxu0 0
        %3156 = vmatmul.mubr.bf16.gmra.mrb[0].mxu0 %v3002
        %v3157 = vpop.f32.mrb[0].mxu0
        %v3158 = vadd.f32 0.0, %v3157
        %v3159 = vpop.f32.mrb[0].mxu0
        %v3160 = vpop.f32.mrb[0].mxu0
        %v3161 = vadd.f32 0.0, %v3160
        %v3162 = vpop.f32.mrb[0].mxu0
        %3163 = vmatprep.mubr.bf16.mxu0 0
        %3164 = vmatmul.mubr.bf16.gmra.mrb[0].mxu0 %v3003
        %v3165 = vpop.f32.mrb[0].mxu0
        %v3166 = vadd.f32 0.0, %v3165
        %v3167 = vpop.f32.mrb[0].mxu0
        %v3168 = vpop.f32.mrb[0].mxu0
        %v3169 = vadd.f32 0.0, %v3168
        %v3170 = vpop.f32.mrb[0].mxu0
        %3171 = vmatprep.mubr.bf16.mxu0 0
        %3172 = vmatmul.mubr.bf16.gmra.mrb[0].mxu0 %v3004
        %v3173 = vpop.f32.mrb[0].mxu0
        %v3174 = vadd.f32 0.0, %v3173
        %v3175 = vpop.f32.mrb[0].mxu0
        %v3176 = vpop.f32.mrb[0].mxu0
        %v3177 = vadd.f32 0.0, %v3176
        %v3178 = vpop.f32.mrb[0].mxu0
        %3179 = vmatprep.mubr.bf16.mxu0 0
        %3180 = vmatmul.mubr.bf16.gmra.mrb[0].mxu0 %v3005
        %v3181 = vpop.f32.mrb[0].mxu0
        %v3182 = vadd.f32 0.0, %v3181
        %v3183 = vpop.f32.mrb[0].mxu0
        %v3184 = vpop.f32.mrb[0].mxu0
        %v3185 = vadd.f32 0.0, %v3184
        %v3186 = vpop.f32.mrb[0].mxu0
        %3187 = vmatprep.mubr.bf16.mxu0 0
        %3188 = vmatmul.mubr.bf16.gmra.mrb[0].mxu0 %v3006
        %v3189 = vpop.f32.mrb[0].mxu0
        %v3190 = vadd.f32 0.0, %v3189
        %v3191 = vpop.f32.mrb[0].mxu0
        %v3192 = vpop.f32.mrb[0].mxu0
        %v3193 = vadd.f32 0.0, %v3192
        %v3194 = vpop.f32.mrb[0].mxu0
        %3195 = vmatprep.mubr.bf16.mxu0 0
        %3196 = vmatmul.mubr.bf16.gmra.mrb[0].mxu0 %v3007
        %v3197 = vpop.f32.mrb[0].mxu0
        %v3198 = vadd.f32 0.0, %v3197
        %v3199 = vpop.f32.mrb[0].mxu0
        %v3200 = vpop.f32.mrb[0].mxu0
        %v3201 = vadd.f32 0.0, %v3200
        %v3202 = vpop.f32.mrb[0].mxu0
        %3203 = vmatprep.mubr.bf16.mxu0 0
        %3204 = vmatmul.mubr.bf16.gmra.mrb[0].mxu0 %v3008
        %v3205 = vpop.f32.mrb[0].mxu0
        %v3206 = vadd.f32 0.0, %v3205
        %v3207 = vpop.f32.mrb[0].mxu0
        %v3208 = vpop.f32.mrb[0].mxu0
        %v3209 = vadd.f32 0.0, %v3208
        %v3210 = vpop.f32.mrb[0].mxu0
        %3211 = vmatprep.mubr.bf16.mxu0 0
        %3212 = vmatmul.mubr.bf16.gmra.mrb[0].mxu0 %v3009
        %v3213 = vpop.f32.mrb[0].mxu0
        %v3214 = vadd.f32 0.0, %v3213
        %v3215 = vpop.f32.mrb[0].mxu0
        %v3216 = vpop.f32.mrb[0].mxu0
        %v3217 = vadd.f32 0.0, %v3216
        %v3218 = vpop.f32.mrb[0].mxu0
        %3219 = vdwg.mxu0
        %3220 = vmatprep.subr.bf16.mxu0 0
        %3221 = vmatpush1.bf16.msra.mxu0 %v1629
        %3222 = vmatprep.subr.bf16.mxu0 0
        %3223 = vmatpush1.bf16.msra.mxu0 %v1630
        %3224 = vmatprep.subr.bf16.mxu0 0
        %3225 = vmatpush1.bf16.msra.mxu0 %v1631
        %3226 = vmatprep.subr.bf16.mxu0 0
        %3227 = vmatpush1.bf16.msra.mxu0 %v1632
        %3228 = vmatprep.subr.bf16.mxu0 0
        %3229 = vmatpush1.bf16.msra.mxu0 %v1633
        %3230 = vmatprep.subr.bf16.mxu0 0
        %3231 = vmatpush1.bf16.msra.mxu0 %v1634
        %3232 = vmatprep.subr.bf16.mxu0 0
        %3233 = vmatpush1.bf16.msra.mxu0 %v1635
        %3234 = vmatprep.subr.bf16.mxu0 0
        %3235 = vmatpush1.bf16.msra.mxu0 %v1636
        %3236 = vmatprep.subr.bf16.mxu0 0
        %3237 = vmatpush1.bf16.msra.mxu0 0
        %3238 = vmatprep.subr.bf16.mxu0 0
        %3239 = vmatpush1.bf16.msra.mxu0 0
        %3240 = vmatprep.subr.bf16.mxu0 0
        %3241 = vmatpush1.bf16.msra.mxu0 0
        %3242 = vmatprep.subr.bf16.mxu0 0
        %3243 = vmatpush1.bf16.msra.mxu0 0
        %3244 = vmatprep.subr.bf16.mxu0 0
        %3245 = vmatpush1.bf16.msra.mxu0 0
        %3246 = vmatprep.subr.bf16.mxu0 0
        %3247 = vmatpush1.bf16.msra.mxu0 0
        %3248 = vmatprep.subr.bf16.mxu0 0
        %3249 = vmatpush1.bf16.msra.mxu0 0
        %3250 = vmatprep.subr.bf16.mxu0 0
        %3251 = vmatpush1.bf16.msra.mxu0 0
        %3252 = vmatprep.mubr.bf16.mxu0 0
        %3253 = vmatmul.mubr.bf16.gmra.mrb[0].mxu0 %v3010
        %v3254 = vpop.f32.mrb[0].mxu0
        %v3255 = vadd.f32 0.0, %v3254
        %v3256 = vpop.f32.mrb[0].mxu0
        %v3257 = vpop.f32.mrb[0].mxu0
        %v3258 = vadd.f32 0.0, %v3257
        %v3259 = vpop.f32.mrb[0].mxu0
        %3260 = vmatprep.mubr.bf16.mxu0 0
        %3261 = vmatmul.mubr.bf16.gmra.mrb[0].mxu0 %v3011
        %v3262 = vpop.f32.mrb[0].mxu0
        %v3263 = vadd.f32 0.0, %v3262
        %v3264 = vpop.f32.mrb[0].mxu0
        %v3265 = vpop.f32.mrb[0].mxu0
        %v3266 = vadd.f32 0.0, %v3265
        %v3267 = vpop.f32.mrb[0].mxu0
        %3268 = vmatprep.mubr.bf16.mxu0 0
        %3269 = vmatmul.mubr.bf16.gmra.mrb[0].mxu0 %v3012
        %v3270 = vpop.f32.mrb[0].mxu0
        %v3271 = vadd.f32 0.0, %v3270
        %v3272 = vpop.f32.mrb[0].mxu0
        %v3273 = vpop.f32.mrb[0].mxu0
        %v3274 = vadd.f32 0.0, %v3273
        %v3275 = vpop.f32.mrb[0].mxu0
        %3276 = vmatprep.mubr.bf16.mxu0 0
        %3277 = vmatmul.mubr.bf16.gmra.mrb[0].mxu0 %v3013
        %v3278 = vpop.f32.mrb[0].mxu0
        %v3279 = vadd.f32 0.0, %v3278
        %v3280 = vpop.f32.mrb[0].mxu0
        %v3281 = vpop.f32.mrb[0].mxu0
        %v3282 = vadd.f32 0.0, %v3281
        %v3283 = vpop.f32.mrb[0].mxu0
        %3284 = vmatprep.mubr.bf16.mxu0 0
        %3285 = vmatmul.mubr.bf16.gmra.mrb[0].mxu0 %v3014
        %v3286 = vpop.f32.mrb[0].mxu0
        %v3287 = vadd.f32 0.0, %v3286
        %v3288 = vpop.f32.mrb[0].mxu0
        %v3289 = vpop.f32.mrb[0].mxu0
        %v3290 = vadd.f32 0.0, %v3289
        %v3291 = vpop.f32.mrb[0].mxu0
        %3292 = vmatprep.mubr.bf16.mxu0 0
        %3293 = vmatmul.mubr.bf16.gmra.mrb[0].mxu0 %v3015
        %v3294 = vpop.f32.mrb[0].mxu0
        %v3295 = vadd.f32 0.0, %v3294
        %v3296 = vpop.f32.mrb[0].mxu0
        %v3297 = vpop.f32.mrb[0].mxu0
        %v3298 = vadd.f32 0.0, %v3297
        %v3299 = vpop.f32.mrb[0].mxu0
        %3300 = vmatprep.mubr.bf16.mxu0 0
        %3301 = vmatmul.mubr.bf16.gmra.mrb[0].mxu0 %v3016
        %v3302 = vpop.f32.mrb[0].mxu0
        %v3303 = vadd.f32 0.0, %v3302
        %v3304 = vpop.f32.mrb[0].mxu0
        %v3305 = vpop.f32.mrb[0].mxu0
        %v3306 = vadd.f32 0.0, %v3305
        %v3307 = vpop.f32.mrb[0].mxu0
        %3308 = vmatprep.mubr.bf16.mxu0 0
        %3309 = vmatmul.mubr.bf16.gmra.mrb[0].mxu0 %v3017
        %v3310 = vpop.f32.mrb[0].mxu0
        %v3311 = vadd.f32 0.0, %v3310
        %v3312 = vpop.f32.mrb[0].mxu0
        %v3313 = vpop.f32.mrb[0].mxu0
        %v3314 = vadd.f32 0.0, %v3313
        %v3315 = vpop.f32.mrb[0].mxu0
        %3316 = vdwg.mxu0
        %3317 = vmatprep.subr.bf16.mxu0 0
        %3318 = vmatpush1.bf16.msra.mxu0 %v1637
        %3319 = vmatprep.subr.bf16.mxu0 0
        %3320 = vmatpush1.bf16.msra.mxu0 %v1638
        %3321 = vmatprep.subr.bf16.mxu0 0
        %3322 = vmatpush1.bf16.msra.mxu0 %v1639
        %3323 = vmatprep.subr.bf16.mxu0 0
        %3324 = vmatpush1.bf16.msra.mxu0 %v1640
        %3325 = vmatprep.subr.bf16.mxu0 0
        %3326 = vmatpush1.bf16.msra.mxu0 %v1641
        %3327 = vmatprep.subr.bf16.mxu0 0
        %3328 = vmatpush1.bf16.msra.mxu0 %v1642
        %3329 = vmatprep.subr.bf16.mxu0 0
        %3330 = vmatpush1.bf16.msra.mxu0 %v1643
        %3331 = vmatprep.subr.bf16.mxu0 0
        %3332 = vmatpush1.bf16.msra.mxu0 %v1644
        %3333 = vmatprep.subr.bf16.mxu0 0
        %3334 = vmatpush1.bf16.msra.mxu0 0
        %3335 = vmatprep.subr.bf16.mxu0 0
        %3336 = vmatpush1.bf16.msra.mxu0 0
        %3337 = vmatprep.subr.bf16.mxu0 0
        %3338 = vmatpush1.bf16.msra.mxu0 0
        %3339 = vmatprep.subr.bf16.mxu0 0
        %3340 = vmatpush1.bf16.msra.mxu0 0
        %3341 = vmatprep.subr.bf16.mxu0 0
        %3342 = vmatpush1.bf16.msra.mxu0 0
        %3343 = vmatprep.subr.bf16.mxu0 0
        %3344 = vmatpush1.bf16.msra.mxu0 0
        %3345 = vmatprep.subr.bf16.mxu0 0
        %3346 = vmatpush1.bf16.msra.mxu0 0
        %3347 = vmatprep.subr.bf16.mxu0 0
        %3348 = vmatpush1.bf16.msra.mxu0 0
        %3349 = vmatprep.mubr.bf16.mxu0 0
        %3350 = vmatmul.mubr.bf16.gmra.mrb[0].mxu0 %v3018
        %v3351 = vpop.f32.mrb[0].mxu0
        %v3352 = vadd.f32 0.0, %v3351
        %v3353 = vpop.f32.mrb[0].mxu0
        %v3354 = vpop.f32.mrb[0].mxu0
        %v3355 = vadd.f32 0.0, %v3354
        %v3356 = vpop.f32.mrb[0].mxu0
        %3357 = vmatprep.mubr.bf16.mxu0 0
        %3358 = vmatmul.mubr.bf16.gmra.mrb[0].mxu0 %v3019
        %v3359 = vpop.f32.mrb[0].mxu0
        %v3360 = vadd.f32 0.0, %v3359
        %v3361 = vpop.f32.mrb[0].mxu0
        %v3362 = vpop.f32.mrb[0].mxu0
        %v3363 = vadd.f32 0.0, %v3362
        %v3364 = vpop.f32.mrb[0].mxu0
        %3365 = vmatprep.mubr.bf16.mxu0 0
        %3366 = vmatmul.mubr.bf16.gmra.mrb[0].mxu0 %v3020
        %v3367 = vpop.f32.mrb[0].mxu0
        %v3368 = vadd.f32 0.0, %v3367
        %v3369 = vpop.f32.mrb[0].mxu0
        %v3370 = vpop.f32.mrb[0].mxu0
        %v3371 = vadd.f32 0.0, %v3370
        %v3372 = vpop.f32.mrb[0].mxu0
        %3373 = vmatprep.mubr.bf16.mxu0 0
        %3374 = vmatmul.mubr.bf16.gmra.mrb[0].mxu0 %v3021
        %v3375 = vpop.f32.mrb[0].mxu0
        %v3376 = vadd.f32 0.0, %v3375
        %v3377 = vpop.f32.mrb[0].mxu0
        %v3378 = vpop.f32.mrb[0].mxu0
        %v3379 = vadd.f32 0.0, %v3378
        %v3380 = vpop.f32.mrb[0].mxu0
        %3381 = vmatprep.mubr.bf16.mxu0 0
        %3382 = vmatmul.mubr.bf16.gmra.mrb[0].mxu0 %v3022
        %v3383 = vpop.f32.mrb[0].mxu0
        %v3384 = vadd.f32 0.0, %v3383
        %v3385 = vpop.f32.mrb[0].mxu0
        %v3386 = vpop.f32.mrb[0].mxu0
        %v3387 = vadd.f32 0.0, %v3386
        %v3388 = vpop.f32.mrb[0].mxu0
        %3389 = vmatprep.mubr.bf16.mxu0 0
        %3390 = vmatmul.mubr.bf16.gmra.mrb[0].mxu0 %v3023
        %v3391 = vpop.f32.mrb[0].mxu0
        %v3392 = vadd.f32 0.0, %v3391
        %v3393 = vpop.f32.mrb[0].mxu0
        %v3394 = vpop.f32.mrb[0].mxu0
        %v3395 = vadd.f32 0.0, %v3394
        %v3396 = vpop.f32.mrb[0].mxu0
        %3397 = vmatprep.mubr.bf16.mxu0 0
        %3398 = vmatmul.mubr.bf16.gmra.mrb[0].mxu0 %v3024
        %v3399 = vpop.f32.mrb[0].mxu0
        %v3400 = vadd.f32 0.0, %v3399
        %v3401 = vpop.f32.mrb[0].mxu0
        %v3402 = vpop.f32.mrb[0].mxu0
        %v3403 = vadd.f32 0.0, %v3402
        %v3404 = vpop.f32.mrb[0].mxu0
        %3405 = vmatprep.mubr.bf16.mxu0 0
        %3406 = vmatmul.mubr.bf16.gmra.mrb[0].mxu0 %v3025
        %v3407 = vpop.f32.mrb[0].mxu0
        %v3408 = vadd.f32 0.0, %v3407
        %v3409 = vpop.f32.mrb[0].mxu0
        %v3410 = vpop.f32.mrb[0].mxu0
        %v3411 = vadd.f32 0.0, %v3410
        %v3412 = vpop.f32.mrb[0].mxu0
        %3413 = vdwg.mxu0
        %3430 = vrot.lane.b32.xlu0 %v3158, 32
        %v3431 = vpop.permute.xlu0 %3430
        %3432 = vrot.lane.b32.xlu0 %v3161, 32
        %v3433 = vpop.permute.xlu0 %3432
        %3434 = vrot.lane.b32.xlu0 %v3166, 32
        %v3435 = vpop.permute.xlu0 %3434
        %3436 = vrot.lane.b32.xlu0 %v3169, 32
        %v3437 = vpop.permute.xlu0 %3436
        %3438 = vrot.lane.b32.xlu0 %v3174, 32
        %v3439 = vpop.permute.xlu0 %3438
        %3440 = vrot.lane.b32.xlu0 %v3177, 32
        %v3441 = vpop.permute.xlu0 %3440
        %3442 = vrot.lane.b32.xlu0 %v3182, 32
        %v3443 = vpop.permute.xlu0 %3442
        %3444 = vrot.lane.b32.xlu0 %v3185, 32
        %v3445 = vpop.permute.xlu0 %3444
        %3446 = vrot.lane.b32.xlu0 %v3190, 32
        %v3447 = vpop.permute.xlu0 %3446
        %3448 = vrot.lane.b32.xlu0 %v3193, 32
        %v3449 = vpop.permute.xlu0 %3448
        %3450 = vrot.lane.b32.xlu0 %v3198, 32
        %v3451 = vpop.permute.xlu0 %3450
        %3452 = vrot.lane.b32.xlu0 %v3201, 32
        %v3453 = vpop.permute.xlu0 %3452
        %3454 = vrot.lane.b32.xlu0 %v3206, 32
        %v3455 = vpop.permute.xlu0 %3454
        %3456 = vrot.lane.b32.xlu0 %v3209, 32
        %v3457 = vpop.permute.xlu0 %3456
        %3458 = vrot.lane.b32.xlu0 %v3214, 32
        %v3459 = vpop.permute.xlu0 %3458
        %3460 = vrot.lane.b32.xlu0 %v3217, 32
        %v3461 = vpop.permute.xlu0 %3460
        %3494 = vrot.lane.b32.xlu0 %v3255, 64
        %v3495 = vpop.permute.xlu0 %3494
        %3496 = vrot.lane.b32.xlu0 %v3258, 64
        %v3497 = vpop.permute.xlu0 %3496
        %3498 = vrot.lane.b32.xlu0 %v3263, 64
        %v3499 = vpop.permute.xlu0 %3498
        %3500 = vrot.lane.b32.xlu0 %v3266, 64
        %v3501 = vpop.permute.xlu0 %3500
        %3502 = vrot.lane.b32.xlu0 %v3271, 64
        %v3503 = vpop.permute.xlu0 %3502
        %3504 = vrot.lane.b32.xlu0 %v3274, 64
        %v3505 = vpop.permute.xlu0 %3504
        %3506 = vrot.lane.b32.xlu0 %v3279, 64
        %v3507 = vpop.permute.xlu0 %3506
        %3508 = vrot.lane.b32.xlu0 %v3282, 64
        %v3509 = vpop.permute.xlu0 %3508
        %3510 = vrot.lane.b32.xlu0 %v3287, 64
        %v3511 = vpop.permute.xlu0 %3510
        %3512 = vrot.lane.b32.xlu0 %v3290, 64
        %v3513 = vpop.permute.xlu0 %3512
        %3514 = vrot.lane.b32.xlu0 %v3295, 64
        %v3515 = vpop.permute.xlu0 %3514
        %3516 = vrot.lane.b32.xlu0 %v3298, 64
        %v3517 = vpop.permute.xlu0 %3516
        %3518 = vrot.lane.b32.xlu0 %v3303, 64
        %v3519 = vpop.permute.xlu0 %3518
        %3520 = vrot.lane.b32.xlu0 %v3306, 64
        %v3521 = vpop.permute.xlu0 %3520
        %3522 = vrot.lane.b32.xlu0 %v3311, 64
        %v3523 = vpop.permute.xlu0 %3522
        %3524 = vrot.lane.b32.xlu0 %v3314, 64
        %v3525 = vpop.permute.xlu0 %3524
        %3558 = vrot.lane.b32.xlu0 %v3352, 96
        %v3559 = vpop.permute.xlu0 %3558
        %3560 = vrot.lane.b32.xlu0 %v3355, 96
        %v3561 = vpop.permute.xlu0 %3560
        %3562 = vrot.lane.b32.xlu0 %v3360, 96
        %v3563 = vpop.permute.xlu0 %3562
        %3564 = vrot.lane.b32.xlu0 %v3363, 96
        %v3565 = vpop.permute.xlu0 %3564
        %3566 = vrot.lane.b32.xlu0 %v3368, 96
        %v3567 = vpop.permute.xlu0 %3566
        %3568 = vrot.lane.b32.xlu0 %v3371, 96
        %v3569 = vpop.permute.xlu0 %3568
        %3570 = vrot.lane.b32.xlu0 %v3376, 96
        %v3571 = vpop.permute.xlu0 %3570
        %3572 = vrot.lane.b32.xlu0 %v3379, 96
        %v3573 = vpop.permute.xlu0 %3572
        %3574 = vrot.lane.b32.xlu0 %v3384, 96
        %v3575 = vpop.permute.xlu0 %3574
        %3576 = vrot.lane.b32.xlu0 %v3387, 96
        %v3577 = vpop.permute.xlu0 %3576
        %3578 = vrot.lane.b32.xlu0 %v3392, 96
        %v3579 = vpop.permute.xlu0 %3578
        %3580 = vrot.lane.b32.xlu0 %v3395, 96
        %v3581 = vpop.permute.xlu0 %3580
        %3582 = vrot.lane.b32.xlu0 %v3400, 96
        %v3583 = vpop.permute.xlu0 %3582
        %3584 = vrot.lane.b32.xlu0 %v3403, 96
        %v3585 = vpop.permute.xlu0 %3584
        %3586 = vrot.lane.b32.xlu0 %v3408, 96
        %v3587 = vpop.permute.xlu0 %3586
        %3588 = vrot.lane.b32.xlu0 %v3411, 96
        %v3589 = vpop.permute.xlu0 %3588
        %v3606 = vsel %vm1837, %v3061, %v3431
        %v3607 = vsel %vm1837, %v3064, %v3433
        %v3608 = vsel %vm1837, %v3069, %v3435
        %v3609 = vsel %vm1837, %v3072, %v3437
        %v3610 = vsel %vm1837, %v3077, %v3439
        %v3611 = vsel %vm1837, %v3080, %v3441
        %v3612 = vsel %vm1837, %v3085, %v3443
        %v3613 = vsel %vm1837, %v3088, %v3445
        %v3614 = vsel %vm1837, %v3093, %v3447
        %v3615 = vsel %vm1837, %v3096, %v3449
        %v3616 = vsel %vm1837, %v3101, %v3451
        %v3617 = vsel %vm1837, %v3104, %v3453
        %v3618 = vsel %vm1837, %v3109, %v3455
        %v3619 = vsel %vm1837, %v3112, %v3457
        %v3620 = vsel %vm1837, %v3117, %v3459
        %v3621 = vsel %vm1837, %v3120, %v3461
        %vm3622 = vcmask 523264
        %v3623 = vsel %vm3622, %v3606, %v3495
        %v3624 = vsel %vm3622, %v3607, %v3497
        %v3625 = vsel %vm3622, %v3608, %v3499
        %v3626 = vsel %vm3622, %v3609, %v3501
        %v3627 = vsel %vm3622, %v3610, %v3503
        %v3628 = vsel %vm3622, %v3611, %v3505
        %v3629 = vsel %vm3622, %v3612, %v3507
        %v3630 = vsel %vm3622, %v3613, %v3509
        %v3631 = vsel %vm3622, %v3614, %v3511
        %v3632 = vsel %vm3622, %v3615, %v3513
        %v3633 = vsel %vm3622, %v3616, %v3515
        %v3634 = vsel %vm3622, %v3617, %v3517
        %v3635 = vsel %vm3622, %v3618, %v3519
        %v3636 = vsel %vm3622, %v3619, %v3521
        %v3637 = vsel %vm3622, %v3620, %v3523
        %v3638 = vsel %vm3622, %v3621, %v3525
        %vm3639 = vcmask 785408
        %v3640 = vsel %vm3639, %v3623, %v3559
        %v3641 = vsel %vm3639, %v3624, %v3561
        %v3642 = vsel %vm3639, %v3625, %v3563
        %v3643 = vsel %vm3639, %v3626, %v3565
        %v3644 = vsel %vm3639, %v3627, %v3567
        %v3645 = vsel %vm3639, %v3628, %v3569
        %v3646 = vsel %vm3639, %v3629, %v3571
        %v3647 = vsel %vm3639, %v3630, %v3573
        %v3648 = vsel %vm3639, %v3631, %v3575
        %v3649 = vsel %vm3639, %v3632, %v3577
        %v3650 = vsel %vm3639, %v3633, %v3579
        %v3651 = vsel %vm3639, %v3634, %v3581
        %v3652 = vsel %vm3639, %v3635, %v3583
        %v3653 = vsel %vm3639, %v3636, %v3585
        %v3654 = vsel %vm3639, %v3637, %v3587
        %v3655 = vsel %vm3639, %v3638, %v3589
        %v3656 = vpack.c.bf16 %v3641, %v3640
        %v3657 = vpack.c.bf16 %v3643, %v3642
        %v3658 = vpack.c.bf16 %v3645, %v3644
        %v3659 = vpack.c.bf16 %v3647, %v3646
        %v3660 = vpack.c.bf16 %v3649, %v3648
        %v3661 = vpack.c.bf16 %v3651, %v3650
        %v3662 = vpack.c.bf16 %v3653, %v3652
        %v3663 = vpack.c.bf16 %v3655, %v3654
        %v3664 = vld [vmem:[%s10] sm:$0xf]
        %v3665 = vld [vmem:[%s10 + $0x4] sm:$0xf]
        %v3666 = vld [vmem:[%s10 + $0x8] sm:$0xf]
        %v3667 = vld [vmem:[%s10 + $0xc] sm:$0xf]
        %v3668 = vld [vmem:[%s10 + $0x10] sm:$0xf]
        %v3669 = vld [vmem:[%s10 + $0x14] sm:$0xf]
        %v3670 = vld [vmem:[%s10 + $0x18] sm:$0xf]
        %v3671 = vld [vmem:[%s10 + $0x1c] sm:$0xf]
        %v3672 = vld [vmem:[%s10 + $0x20] sm:$0xf]
        %v3673 = vld [vmem:[%s10 + $0x24] sm:$0xf]
        %v3674 = vld [vmem:[%s10 + $0x28] sm:$0xf]
        %v3675 = vld [vmem:[%s10 + $0x2c] sm:$0xf]
        %v3676 = vld [vmem:[%s10 + $0x30] sm:$0xf]
        %v3677 = vld [vmem:[%s10 + $0x34] sm:$0xf]
        %v3678 = vld [vmem:[%s10 + $0x38] sm:$0xf]
        %v3679 = vld [vmem:[%s10 + $0x3c] sm:$0xf]
        %v3680 = vld [vmem:[%s11] sm:$0x1]
        %v3682 = vlaneseq
        %v3683 = vshrl.u32 %v3682, 7
        %v3684 = vsub.s32 0, %v3683
        %v3685 = vrot.slane %v3680, %v3684
        %v3703 = vunpack.c.l.b16 %v3664
        %v3704 = vunpack.c.l.b16 %v3665
        %v3705 = vunpack.c.l.b16 %v3666
        %v3706 = vunpack.c.l.b16 %v3667
        %v3707 = vunpack.c.l.b16 %v3668
        %v3708 = vunpack.c.l.b16 %v3669
        %v3709 = vunpack.c.l.b16 %v3670
        %v3710 = vunpack.c.l.b16 %v3671
        %v3711 = vunpack.c.l.b16 %v3672
        %v3712 = vunpack.c.l.b16 %v3673
        %v3713 = vunpack.c.l.b16 %v3674
        %v3714 = vunpack.c.l.b16 %v3675
        %v3715 = vunpack.c.l.b16 %v3676
        %v3716 = vunpack.c.l.b16 %v3677
        %v3717 = vunpack.c.l.b16 %v3678
        %v3718 = vunpack.c.l.b16 %v3679
        %v3719 = vpack.c.b16 %v3704, %v3703
        %v3720 = vpack.c.b16 %v3706, %v3705
        %v3721 = vpack.c.b16 %v3708, %v3707
        %v3722 = vpack.c.b16 %v3710, %v3709
        %v3723 = vpack.c.b16 %v3712, %v3711
        %v3724 = vpack.c.b16 %v3714, %v3713
        %v3725 = vpack.c.b16 %v3716, %v3715
        %v3726 = vpack.c.b16 %v3718, %v3717
        %3735 = vmatprep.subr.bf16.mxu0 0
        %3736 = vmatpush1.bf16.msra.mxu0 %v3719
        %3737 = vmatprep.subr.bf16.mxu0 0
        %3738 = vmatpush1.bf16.msra.mxu0 %v3720
        %3739 = vmatprep.subr.bf16.mxu0 0
        %3740 = vmatpush1.bf16.msra.mxu0 %v3721
        %3741 = vmatprep.subr.bf16.mxu0 0
        %3742 = vmatpush1.bf16.msra.mxu0 %v3722
        %3743 = vmatprep.subr.bf16.mxu0 0
        %3744 = vmatpush1.bf16.msra.mxu0 %v3723
        %3745 = vmatprep.subr.bf16.mxu0 0
        %3746 = vmatpush1.bf16.msra.mxu0 %v3724
        %3747 = vmatprep.subr.bf16.mxu0 0
        %3748 = vmatpush1.bf16.msra.mxu0 %v3725
        %3749 = vmatprep.subr.bf16.mxu0 0
        %3750 = vmatpush1.bf16.msra.mxu0 %v3726
        %3751 = vmatprep.subr.bf16.mxu0 0
        %3752 = vmatpush1.bf16.msra.mxu0 0
        %3753 = vmatprep.subr.bf16.mxu0 0
        %3754 = vmatpush1.bf16.msra.mxu0 0
        %3755 = vmatprep.subr.bf16.mxu0 0
        %3756 = vmatpush1.bf16.msra.mxu0 0
        %3757 = vmatprep.subr.bf16.mxu0 0
        %3758 = vmatpush1.bf16.msra.mxu0 0
        %3759 = vmatprep.subr.bf16.mxu0 0
        %3760 = vmatpush1.bf16.msra.mxu0 0
        %3761 = vmatprep.subr.bf16.mxu0 0
        %3762 = vmatpush1.bf16.msra.mxu0 0
        %3763 = vmatprep.subr.bf16.mxu0 0
        %3764 = vmatpush1.bf16.msra.mxu0 0
        %3765 = vmatprep.subr.bf16.mxu0 0
        %3766 = vmatpush1.bf16.msra.mxu0 0
        %3767 = vmatprep.mubr.bf16.mxu0 0
        %3768 = vmatmul.mubr.bf16.gmra.mrb[0].mxu0 %v3656
        %v3769 = vpop.f32.mrb[0].mxu0
        %v3770 = vadd.f32 %v3685, %v3769
        %v3771 = vpop.f32.mrb[0].mxu0
        %v3772 = vpop.f32.mrb[0].mxu0
        %v3773 = vadd.f32 %v3685, %v3772
        %v3774 = vpop.f32.mrb[0].mxu0
        %3775 = vmatprep.mubr.bf16.mxu0 0
        %3776 = vmatmul.mubr.bf16.gmra.mrb[0].mxu0 %v3657
        %v3777 = vpop.f32.mrb[0].mxu0
        %v3778 = vadd.f32 %v3685, %v3777
        %v3779 = vpop.f32.mrb[0].mxu0
        %v3780 = vpop.f32.mrb[0].mxu0
        %v3781 = vadd.f32 %v3685, %v3780
        %v3782 = vpop.f32.mrb[0].mxu0
        %3783 = vmatprep.mubr.bf16.mxu0 0
        %3784 = vmatmul.mubr.bf16.gmra.mrb[0].mxu0 %v3658
        %v3785 = vpop.f32.mrb[0].mxu0
        %v3786 = vadd.f32 %v3685, %v3785
        %v3787 = vpop.f32.mrb[0].mxu0
        %v3788 = vpop.f32.mrb[0].mxu0
        %v3789 = vadd.f32 %v3685, %v3788
        %v3790 = vpop.f32.mrb[0].mxu0
        %3791 = vmatprep.mubr.bf16.mxu0 0
        %3792 = vmatmul.mubr.bf16.gmra.mrb[0].mxu0 %v3659
        %v3793 = vpop.f32.mrb[0].mxu0
        %v3794 = vadd.f32 %v3685, %v3793
        %v3795 = vpop.f32.mrb[0].mxu0
        %v3796 = vpop.f32.mrb[0].mxu0
        %v3797 = vadd.f32 %v3685, %v3796
        %v3798 = vpop.f32.mrb[0].mxu0
        %3799 = vmatprep.mubr.bf16.mxu0 0
        %3800 = vmatmul.mubr.bf16.gmra.mrb[0].mxu0 %v3660
        %v3801 = vpop.f32.mrb[0].mxu0
        %v3802 = vadd.f32 %v3685, %v3801
        %v3803 = vpop.f32.mrb[0].mxu0
        %v3804 = vpop.f32.mrb[0].mxu0
        %v3805 = vadd.f32 %v3685, %v3804
        %v3806 = vpop.f32.mrb[0].mxu0
        %3807 = vmatprep.mubr.bf16.mxu0 0
        %3808 = vmatmul.mubr.bf16.gmra.mrb[0].mxu0 %v3661
        %v3809 = vpop.f32.mrb[0].mxu0
        %v3810 = vadd.f32 %v3685, %v3809
        %v3811 = vpop.f32.mrb[0].mxu0
        %v3812 = vpop.f32.mrb[0].mxu0
        %v3813 = vadd.f32 %v3685, %v3812
        %v3814 = vpop.f32.mrb[0].mxu0
        %3815 = vmatprep.mubr.bf16.mxu0 0
        %3816 = vmatmul.mubr.bf16.gmra.mrb[0].mxu0 %v3662
        %v3817 = vpop.f32.mrb[0].mxu0
        %v3818 = vadd.f32 %v3685, %v3817
        %v3819 = vpop.f32.mrb[0].mxu0
        %v3820 = vpop.f32.mrb[0].mxu0
        %v3821 = vadd.f32 %v3685, %v3820
        %v3822 = vpop.f32.mrb[0].mxu0
        %3823 = vmatprep.mubr.bf16.mxu0 0
        %3824 = vmatmul.mubr.bf16.gmra.mrb[0].mxu0 %v3663
        %v3825 = vpop.f32.mrb[0].mxu0
        %v3826 = vadd.f32 %v3685, %v3825
        %v3827 = vpop.f32.mrb[0].mxu0
        %v3828 = vpop.f32.mrb[0].mxu0
        %v3829 = vadd.f32 %v3685, %v3828
        %v3830 = vpop.f32.mrb[0].mxu0
        %3831 = vdwg.mxu0
        %3832 = vst [vmem:[%s487] sm:$0xff] %v3770
        %3833 = vst [vmem:[%s487 + $0x8] sm:$0xff] %v3773
        %3834 = vst [vmem:[%s487 + $0x10] sm:$0xff] %v3778
        %3835 = vst [vmem:[%s487 + $0x18] sm:$0xff] %v3781
        %3836 = vst [vmem:[%s487 + $0x20] sm:$0xff] %v3786
        %3837 = vst [vmem:[%s487 + $0x28] sm:$0xff] %v3789
        %3838 = vst [vmem:[%s487 + $0x30] sm:$0xff] %v3794
        %3839 = vst [vmem:[%s487 + $0x38] sm:$0xff] %v3797
        %3840 = vst [vmem:[%s487 + $0x40] sm:$0xff] %v3802
        %3841 = vst [vmem:[%s487 + $0x48] sm:$0xff] %v3805
        %3842 = vst [vmem:[%s487 + $0x50] sm:$0xff] %v3810
        %3843 = vst [vmem:[%s487 + $0x58] sm:$0xff] %v3813
        %3844 = vst [vmem:[%s487 + $0x60] sm:$0xff] %v3818
        %3845 = vst [vmem:[%s487 + $0x68] sm:$0xff] %v3821
        %3846 = vst [vmem:[%s487 + $0x70] sm:$0xff] %v3826
        %3847 = vst [vmem:[%s487 + $0x78] sm:$0xff] %v3829
        %s3848 = sand.u32 %s324, 1
        %s3849 = scalar_lea.sflag [#allocation5], %s3848
        %s3850 = sand.u32 %s324, 1
        %s3851 = smul.addr %s3850, 128
        %s3852 = scalar_lea.vmem [#allocation4], %s3851
        // Predicated region
        $region73: #{multi_head_attention.1} parent=67 // pred_check
          %p3853 = pneg %p334
        $region74: #{multi_head_attention.1} parent=67 // pred_check_branch
          %3855 = sbr.rel (%p3853) target = $region76
        $region75: #{multi_head_attention.1} parent=67 // pred_region
          %s3856 = smul.u32 16, %s31
          %s3858 = ssub.s32 2048, 2048
          %3859 = vsyncadd %s3849, %s3858
          %s3860 = smul.addr %s30, 16
          %s3861 = sadd.s32 %s3856, %s3860
          %s3862 = smul.addr %s3861, 128
          %s3863 = scalar_lea.hbm %s12, %s3862
          %s3864 = sshll.u32 %s3852, 4
          %s3865 = int_to_ptr.vmem [resolvable:$true] %s3864
          %3870 = dma.vmem_to_hbm [thread:$0]  %s3865, 2048, %s3863, %s3849, 128, 128, 8
        $region76: #{multi_head_attention.1} parent=67 // pred_fallthru
          _
      $region68: #{multi_head_attention.1} parent=5 // pred_fallthru
        _
      %p3871 = scmp.le.s32.totalorder 2, %s21
      // Predicated region
      $region77: #{multi_head_attention.1} parent=5 // pred_check
        %p3872 = pneg %p3871
      $region78: #{multi_head_attention.1} parent=5 // pred_check_branch
        %3874 = sbr.rel (%p3872) target = $region80
      $region79: #{multi_head_attention.1} parent=5 // pred_region
        %s3875 = ssub.s32 %s21, 2
        // Predicated region
        $region81: #{multi_head_attention.1} parent=79 // pred_check
          %p3876 = pneg %p340
        $region82: #{multi_head_attention.1} parent=79 // pred_check_branch
          %3878 = sbr.rel (%p3876) target = $region84
        $region83: #{multi_head_attention.1} parent=79 // pred_region
          %s3879 = sand.u32 %s325, 1
          %s3880 = scalar_lea.sflag [#allocation5], %s3879
          %s3881 = sand.u32 %s325, 1
          %s3882 = smul.addr %s3881, 128
          %s3883 = scalar_lea.vmem [#allocation4], %s3882
          %3884 = dma.done %s3880, 2048
        $region84: #{multi_head_attention.1} parent=79 // pred_fallthru
          _
      $region80: #{multi_head_attention.1} parent=5 // pred_fallthru
        _
    $region6: #{multi_head_attention.1} parent=1 // loop_footer
      %s25 = sadd.s32 1, %s21
    $region7: #{multi_head_attention.1} parent=1 // loop_footer_branch
      %20 = sbr.rel target = $region3
    $region8: #{multi_head_attention.1} parent=1 // loop_exit
      _
    %3885 = vsyncpa [#allocation5], 1
    %s3886 = scalar_lea.sflag [#allocation5], 1
    %3887 = vsyncpa %s3886, 1

</llo_original>
